<compile_context>
chip_gen: v5e
topology: v5e:2x2
jax: 0.10.0
libtpu: 0.0.40
codegen_flags: <defaults>
</compile_context>

<pallas_src>
import functools

import jax
import jax.numpy as jnp
from jax.experimental import pallas as pl
from jax.experimental.pallas import tpu as pltpu  # noqa: F401  (imported for convention)


# ----------------------------- Pallas kernels -------------------------------

def _fc_kernel(z_ref, w_ref, b_ref, o_ref):
    # z: (B, Z) bf16, w: (Z, N) bf16, b: (1, N) f32 -> o: (B, N) f32 (lane axis = N, dense)
    o_ref[...] = (
        jnp.dot(z_ref[...], w_ref[...], preferred_element_type=jnp.float32)
        + b_ref[...]
    )


def _dconv_bn_relu_kernel(a_ref, w_ref, bias_ref, g_ref, be_ref, o_ref):
    # Fused: 4 phase matmuls + bias + training-mode BatchNorm2d + ReLU.
    #   a_ref   : (4, 4*Cin, M)  bf16   phase patches  (M = B*H*W of the *input*)
    #   w_ref   : (4, Cout, 4*Cin) bf16 phase weights
    #   bias/g/be: (Cout, 1) f32
    #   o_ref   : (4, Cout, M) f32
    n_total = 4.0 * a_ref.shape[2]          # total spatial*batch samples per channel
    ys = []
    s = 0.0
    for p in range(4):                       # unrolled; 4 dense MXU matmuls
        y = jnp.dot(w_ref[p], a_ref[p], preferred_element_type=jnp.float32) + bias_ref[...]
        ys.append(y)
        s = s + jnp.sum(y, axis=1, keepdims=True)
    mean = s / n_total
    ssq = 0.0
    for p in range(4):
        d = ys[p] - mean
        ssq = ssq + jnp.sum(d * d, axis=1, keepdims=True)
    inv = jax.lax.rsqrt(ssq / n_total + 1e-5)      # biased variance, eps=1e-5
    scale = g_ref[...] * inv
    shift = be_ref[...] - mean * scale
    for p in range(4):
        o_ref[p] = jnp.maximum(ys[p] * scale + shift, 0.0)


def _dconv_tanh_kernel(a_ref, w_ref, bias_ref, o_ref):
    # Fused: 4 phase matmuls + bias + tanh (final layer, no BN).
    for p in range(4):
        y = jnp.dot(w_ref[p], a_ref[p], preferred_element_type=jnp.float32) + bias_ref[...]
        o_ref[p] = jnp.tanh(y)


# ----------------------------- glue (plain JAX) ------------------------------
# TODO(synk): phase patch gather stays in XLA glue; for much larger shapes it could
#             be moved into the kernel with pl.ds windows on a padded HBM input.

def _phase_weights(w_pt):
    """PyTorch ConvTranspose2d weight (Cin, Cout, 4, 4) -> (4, Cout, 4*Cin).

    Phase (ry, rx) = output parity; tap (dy, dx) selects kernel index
    (3 - ry - 2*dy, 3 - rx - 2*dx).  K ordering = (dy, dx, ci).
    """
    Cin, Cout = w_pt.shape[0], w_pt.shape[1]
    phases = []
    for ry in (0, 1):
        for rx in (0, 1):
            taps = []
            for dy in (0, 1):
                for dx in (0, 1):
                    taps.append(jnp.transpose(
                        w_pt[:, :, 3 - ry - 2 * dy, 3 - rx - 2 * dx], (1, 0)))  # (Cout, Cin)
            phases.append(jnp.stack(taps, axis=1).reshape(Cout, 4 * Cin))
    return jnp.stack(phases, axis=0)  # (4, Cout, 4*Cin)


def _phase_patches(x_chw):
    """Channel-first input (Cin, B, H, W) -> phase patches (4, 4*Cin, B*H*W).

    Each phase uses a fixed 2x2 window of the 1-padded input; K ordering = (dy, dx, ci),
    matching _phase_weights.  No zero-dilation, no structural zeros.
    """
    Cin, B, H, W = x_chw.shape
    M = B * H * W
    xp = jnp.pad(x_chw, ((0, 0), (0, 0), (1, 1), (1, 1)))
    nb = [[xp[:, :, oy:oy + H, ox:ox + W] for ox in range(3)] for oy in range(3)]
    phases = []
    for ry in (0, 1):
        for rx in (0, 1):
            taps = [nb[ry + dy][rx + dx] for dy in (0, 1) for dx in (0, 1)]  # 4 x (Cin,B,H,W)
            phases.append(jnp.stack(taps, axis=0).reshape(4 * Cin, M))
    return jnp.stack(phases, axis=0)  # (4, 4*Cin, M)


def dconv_layer(x_chw, w_pt, b, gamma=None, beta=None, final_tanh=False):
    """ConvTranspose2d(k=4,s=2,p=1) [+ BN + ReLU | + tanh], one fused pallas_call.

    x_chw: channel-first (Cin, B, H, W).  Returns channel-first (Cout, B, 2H, 2W).
    """
    Cin, B, H, W = x_chw.shape
    Cout = w_pt.shape[1]
    M = B * H * W

    A = _phase_patches(x_chw).astype(jnp.bfloat16)      # (4, 4*Cin, M)
    Wm = _phase_weights(w_pt).astype(jnp.bfloat16)      # (4, Cout, 4*Cin)
    bias = b.reshape(Cout, 1).astype(jnp.float32)

    if final_tanh:
        y = pl.pallas_call(
            _dconv_tanh_kernel,
            out_shape=jax.ShapeDtypeStruct((4, Cout, M), jnp.float32),
        )(A, Wm, bias)
    else:
        y = pl.pallas_call(
            _dconv_bn_relu_kernel,
            out_shape=jax.ShapeDtypeStruct((4, Cout, M), jnp.float32),
        )(A, Wm, bias,
          gamma.reshape(Cout, 1).astype(jnp.float32),
          beta.reshape(Cout, 1).astype(jnp.float32))

    # Interleave phases: (ry, rx, co, b, h, w) -> (co, b, 2h+ry, 2w+rx)
    y = y.reshape(2, 2, Cout, B, H, W)
    y = jnp.transpose(y, (2, 3, 4, 0, 5, 1)).reshape(Cout, B, 2 * H, 2 * W)
    return y


def fc_forward(z, fc_w, fc_b):
    B, _ = z.shape
    N = fc_w.shape[1]
    return pl.pallas_call(
        _fc_kernel,
        out_shape=jax.ShapeDtypeStruct((B, N), jnp.float32),
    )(z.astype(jnp.bfloat16), fc_w.astype(jnp.bfloat16),
      fc_b.reshape(1, N).astype(jnp.float32))


def init_params(key, z_size, conv_dim):
    keys = jax.random.split(key, 10)
    d = conv_dim
    scale = 0.05

    def rnd(k, shape):
        return scale * jax.random.normal(k, shape, dtype=jnp.float32)

    params = {
        # fc stored as (in, out) so forward is z @ fc_w + fc_b
        "fc_w": rnd(keys[0], (z_size, d * 8 * 2 * 2)),
        "fc_b": rnd(keys[1], (d * 8 * 2 * 2,)),
        # ConvTranspose2d weights in PyTorch layout (Cin, Cout, 4, 4)
        "w1": rnd(keys[2], (d * 8, d * 4, 4, 4)), "b1": rnd(keys[3], (d * 4,)),
        "w2": rnd(keys[4], (d * 4, d * 2, 4, 4)), "b2": rnd(keys[5], (d * 2,)),
        "w3": rnd(keys[6], (d * 2, d, 4, 4)),     "b3": rnd(keys[7], (d,)),
        "w4": rnd(keys[8], (d, 3, 4, 4)),         "b4": rnd(keys[9], (3,)),
        # BatchNorm affine params (PyTorch default init)
        "g1": jnp.ones((d * 4,), jnp.float32), "be1": jnp.zeros((d * 4,), jnp.float32),
        "g2": jnp.ones((d * 2,), jnp.float32), "be2": jnp.zeros((d * 2,), jnp.float32),
        "g3": jnp.ones((d,), jnp.float32),     "be3": jnp.zeros((d,), jnp.float32),
    }
    return params


@jax.jit
def data_generator_forward(z, params):
    """z: (B, z_size) -> image (B, 3, 32, 32), matching the PyTorch module."""
    B = z.shape[0]
    c0 = params["w1"].shape[0]            # = conv_dim * 8

    # fc  ->  view(-1, conv_dim*8, 2, 2)  ->  channel-first (Cin, B, 2, 2)
    out = fc_forward(z, params["fc_w"], params["fc_b"])           # (B, c0*2*2)
    x = jnp.transpose(out.reshape(B, c0, 2, 2), (1, 0, 2, 3))     # (c0, B, 2, 2)

    # dconv1..3 + BN + ReLU : 2 -> 4 -> 8 -> 16   (each is ONE fused pallas_call)
    x = dconv_layer(x, params["w1"], params["b1"], params["g1"], params["be1"])
    x = dconv_layer(x, params["w2"], params["b2"], params["g2"], params["be2"])
    x = dconv_layer(x, params["w3"], params["b3"], params["g3"], params["be3"])

    # dconv4 + tanh : 16 -> 32
    x = dconv_layer(x, params["w4"], params["b4"], final_tanh=True)  # (3, B, 32, 32)

    return jnp.transpose(x, (1, 0, 2, 3))                            # (B, 3, 32, 32)


# ---------------------------------- main -------------------------------------

if __name__ == "__main__":
    z_size = 32
    conv_dim = 8
    batch = 2

    key = jax.random.PRNGKey(0)
    k_param, k_z = jax.random.split(key)
    params = init_params(k_param, z_size, conv_dim)
    z = jax.random.normal(k_z, (batch, z_size), dtype=jnp.float32)

    img = data_generator_forward(z, params)
    img = jax.block_until_ready(img)

    assert img.shape == (batch, 3, 32, 32), img.shape
    assert img.dtype == jnp.float32
    assert bool(jnp.all(jnp.isfinite(img)))
    assert bool(jnp.all(jnp.abs(img) <= 1.0))  # tanh output range

    print("KERNEL_OK")
</pallas_src>

<mosaic_0001>
module attributes {stable_mosaic.version = 11 : i64} {
  func.func @_fc_kernel(%arg0: memref<2x32xbf16, #tpu.memory_space<vmem>>, %arg1: memref<32x256xbf16, #tpu.memory_space<vmem>>, %arg2: memref<1x256xf32, #tpu.memory_space<vmem>>, %arg3: memref<2x256xf32, #tpu.memory_space<vmem>>) attributes {dimension_semantics = [], scalar_prefetch = 0 : i64, scratch_operands = 0 : i64, tpu.core_type = #tpu.core_type<tc>} {
    %c0 = arith.constant 0 : index
    %c0_0 = arith.constant 0 : index
    %0 = vector.load %arg0[%c0, %c0_0] : memref<2x32xbf16, #tpu.memory_space<vmem>>, vector<2x32xbf16>
    %c0_1 = arith.constant 0 : index
    %c0_2 = arith.constant 0 : index
    %1 = vector.load %arg1[%c0_1, %c0_2] : memref<32x256xbf16, #tpu.memory_space<vmem>>, vector<32x256xbf16>
    %cst = arith.constant dense<0.000000e+00> : vector<2x256xf32>
    %2 = tpu.matmul %0, %1, %cst {dimension_numbers = #tpu.dot_dimension_numbers<[1], [0], [0], [1], [0, 0, 1, 1], [], []>} : vector<2x32xbf16>, vector<32x256xbf16>, vector<2x256xf32> -> vector<2x256xf32>
    %c0_3 = arith.constant 0 : index
    %c0_4 = arith.constant 0 : index
    %3 = vector.load %arg2[%c0_3, %c0_4] : memref<1x256xf32, #tpu.memory_space<vmem>>, vector<1x256xf32>
    %4 = vector.broadcast %3 : vector<1x256xf32> to vector<2x256xf32>
    %5 = arith.addf %2, %4 : vector<2x256xf32>
    %c0_5 = arith.constant 0 : index
    %c0_6 = arith.constant 0 : index
    %6 = vector.load %arg3[%c0_5, %c0_6] : memref<2x256xf32, #tpu.memory_space<vmem>>, vector<2x256xf32>
    tpu.vector_store %arg3[%c0_5, %c0_6], %5 {strides = array<i32>} : memref<2x256xf32, #tpu.memory_space<vmem>>, vector<2x256xf32>,
    return
  }
}

module attributes {stable_mosaic.version = 11 : i64} {
  func.func @_dconv_bn_relu_kernel(%arg0: memref<4x256x8xbf16, #tpu.memory_space<vmem>>, %arg1: memref<4x32x256xbf16, #tpu.memory_space<vmem>>, %arg2: memref<32x1xf32, #tpu.memory_space<vmem>>, %arg3: memref<32x1xf32, #tpu.memory_space<vmem>>, %arg4: memref<32x1xf32, #tpu.memory_space<vmem>>, %arg5: memref<4x32x8xf32, #tpu.memory_space<vmem>>) attributes {dimension_semantics = [], scalar_prefetch = 0 : i64, scratch_operands = 0 : i64, tpu.core_type = #tpu.core_type<tc>} {
    %c0 = arith.constant 0 : index
    %c0_0 = arith.constant 0 : index
    %c0_1 = arith.constant 0 : index
    %0 = vector.load %arg1[%c0, %c0_0, %c0_1] : memref<4x32x256xbf16, #tpu.memory_space<vmem>>, vector<1x32x256xbf16>
    %1 = vector.shape_cast %0 : vector<1x32x256xbf16> to vector<32x256xbf16>
    %c0_2 = arith.constant 0 : index
    %c0_3 = arith.constant 0 : index
    %c0_4 = arith.constant 0 : index
    %2 = vector.load %arg0[%c0_2, %c0_3, %c0_4] : memref<4x256x8xbf16, #tpu.memory_space<vmem>>, vector<1x256x8xbf16>
    %3 = vector.shape_cast %2 : vector<1x256x8xbf16> to vector<256x8xbf16>
    %cst = arith.constant dense<0.000000e+00> : vector<32x8xf32>
    %4 = tpu.matmul %1, %3, %cst {dimension_numbers = #tpu.dot_dimension_numbers<[1], [0], [0], [1], [0, 0, 1, 1], [], []>} : vector<32x256xbf16>, vector<256x8xbf16>, vector<32x8xf32> -> vector<32x8xf32>
    %c0_5 = arith.constant 0 : index
    %c0_6 = arith.constant 0 : index
    %5 = vector.load %arg2[%c0_5, %c0_6] : memref<32x1xf32, #tpu.memory_space<vmem>>, vector<32x1xf32>
    %6 = vector.broadcast %5 : vector<32x1xf32> to vector<32x8xf32>
    %7 = arith.addf %4, %6 : vector<32x8xf32>
    %cst_7 = arith.constant dense<0.000000e+00> : vector<32xf32>
    %8 = vector.multi_reduction <add>, %7, %cst_7 [1] : vector<32x8xf32> to vector<32xf32>
    %9 = vector.shape_cast %8 : vector<32xf32> to vector<32x1xf32>
    %cst_8 = arith.constant 0.000000e+00 : f32
    %10 = vector.broadcast %cst_8 : f32 to vector<32x1xf32>
    %11 = arith.addf %10, %9 : vector<32x1xf32>
    %c1 = arith.constant 1 : index
    %c0_9 = arith.constant 0 : index
    %c0_10 = arith.constant 0 : index
    %12 = vector.load %arg1[%c1, %c0_9, %c0_10] : memref<4x32x256xbf16, #tpu.memory_space<vmem>>, vector<1x32x256xbf16>
    %13 = vector.shape_cast %12 : vector<1x32x256xbf16> to vector<32x256xbf16>
    %c1_11 = arith.constant 1 : index
    %c0_12 = arith.constant 0 : index
    %c0_13 = arith.constant 0 : index
    %14 = vector.load %arg0[%c1_11, %c0_12, %c0_13] : memref<4x256x8xbf16, #tpu.memory_space<vmem>>, vector<1x256x8xbf16>
    %15 = vector.shape_cast %14 : vector<1x256x8xbf16> to vector<256x8xbf16>
    %cst_14 = arith.constant dense<0.000000e+00> : vector<32x8xf32>
    %16 = tpu.matmul %13, %15, %cst_14 {dimension_numbers = #tpu.dot_dimension_numbers<[1], [0], [0], [1], [0, 0, 1, 1], [], []>} : vector<32x256xbf16>, vector<256x8xbf16>, vector<32x8xf32> -> vector<32x8xf32>
    %c0_15 = arith.constant 0 : index
    %c0_16 = arith.constant 0 : index
    %17 = vector.load %arg2[%c0_15, %c0_16] : memref<32x1xf32, #tpu.memory_space<vmem>>, vector<32x1xf32>
    %18 = vector.broadcast %17 : vector<32x1xf32> to vector<32x8xf32>
    %19 = arith.addf %16, %18 : vector<32x8xf32>
    %cst_17 = arith.constant dense<0.000000e+00> : vector<32xf32>
    %20 = vector.multi_reduction <add>, %19, %cst_17 [1] : vector<32x8xf32> to vector<32xf32>
    %21 = vector.shape_cast %20 : vector<32xf32> to vector<32x1xf32>
    %22 = arith.addf %11, %21 : vector<32x1xf32>
    %c2 = arith.constant 2 : index
    %c0_18 = arith.constant 0 : index
    %c0_19 = arith.constant 0 : index
    %23 = vector.load %arg1[%c2, %c0_18, %c0_19] : memref<4x32x256xbf16, #tpu.memory_space<vmem>>, vector<1x32x256xbf16>
    %24 = vector.shape_cast %23 : vector<1x32x256xbf16> to vector<32x256xbf16>
    %c2_20 = arith.constant 2 : index
    %c0_21 = arith.constant 0 : index
    %c0_22 = arith.constant 0 : index
    %25 = vector.load %arg0[%c2_20, %c0_21, %c0_22] : memref<4x256x8xbf16, #tpu.memory_space<vmem>>, vector<1x256x8xbf16>
    %26 = vector.shape_cast %25 : vector<1x256x8xbf16> to vector<256x8xbf16>
    %cst_23 = arith.constant dense<0.000000e+00> : vector<32x8xf32>
    %27 = tpu.matmul %24, %26, %cst_23 {dimension_numbers = #tpu.dot_dimension_numbers<[1], [0], [0], [1], [0, 0, 1, 1], [], []>} : vector<32x256xbf16>, vector<256x8xbf16>, vector<32x8xf32> -> vector<32x8xf32>
    %c0_24 = arith.constant 0 : index
    %c0_25 = arith.constant 0 : index
    %28 = vector.load %arg2[%c0_24, %c0_25] : memref<32x1xf32, #tpu.memory_space<vmem>>, vector<32x1xf32>
    %29 = vector.broadcast %28 : vector<32x1xf32> to vector<32x8xf32>
    %30 = arith.addf %27, %29 : vector<32x8xf32>
    %cst_26 = arith.constant dense<0.000000e+00> : vector<32xf32>
    %31 = vector.multi_reduction <add>, %30, %cst_26 [1] : vector<32x8xf32> to vector<32xf32>
    %32 = vector.shape_cast %31 : vector<32xf32> to vector<32x1xf32>
    %33 = arith.addf %22, %32 : vector<32x1xf32>
    %c3 = arith.constant 3 : index
    %c0_27 = arith.constant 0 : index
    %c0_28 = arith.constant 0 : index
    %34 = vector.load %arg1[%c3, %c0_27, %c0_28] : memref<4x32x256xbf16, #tpu.memory_space<vmem>>, vector<1x32x256xbf16>
    %35 = vector.shape_cast %34 : vector<1x32x256xbf16> to vector<32x256xbf16>
    %c3_29 = arith.constant 3 : index
    %c0_30 = arith.constant 0 : index
    %c0_31 = arith.constant 0 : index
    %36 = vector.load %arg0[%c3_29, %c0_30, %c0_31] : memref<4x256x8xbf16, #tpu.memory_space<vmem>>, vector<1x256x8xbf16>
    %37 = vector.shape_cast %36 : vector<1x256x8xbf16> to vector<256x8xbf16>
    %cst_32 = arith.constant dense<0.000000e+00> : vector<32x8xf32>
    %38 = tpu.matmul %35, %37, %cst_32 {dimension_numbers = #tpu.dot_dimension_numbers<[1], [0], [0], [1], [0, 0, 1, 1], [], []>} : vector<32x256xbf16>, vector<256x8xbf16>, vector<32x8xf32> -> vector<32x8xf32>
    %c0_33 = arith.constant 0 : index
    %c0_34 = arith.constant 0 : index
    %39 = vector.load %arg2[%c0_33, %c0_34] : memref<32x1xf32, #tpu.memory_space<vmem>>, vector<32x1xf32>
    %40 = vector.broadcast %39 : vector<32x1xf32> to vector<32x8xf32>
    %41 = arith.addf %38, %40 : vector<32x8xf32>
    %cst_35 = arith.constant dense<0.000000e+00> : vector<32xf32>
    %42 = vector.multi_reduction <add>, %41, %cst_35 [1] : vector<32x8xf32> to vector<32xf32>
    %43 = vector.shape_cast %42 : vector<32xf32> to vector<32x1xf32>
    %44 = arith.addf %33, %43 : vector<32x1xf32>
    %cst_36 = arith.constant 3.200000e+01 : f32
    %45 = vector.broadcast %cst_36 : f32 to vector<32x1xf32>
    %46 = arith.divf %44, %45 : vector<32x1xf32>
    %47 = vector.broadcast %46 : vector<32x1xf32> to vector<32x8xf32>
    %48 = arith.subf %7, %47 : vector<32x8xf32>
    %49 = arith.mulf %48, %48 : vector<32x8xf32>
    %cst_37 = arith.constant dense<0.000000e+00> : vector<32xf32>
    %50 = vector.multi_reduction <add>, %49, %cst_37 [1] : vector<32x8xf32> to vector<32xf32>
    %51 = vector.shape_cast %50 : vector<32xf32> to vector<32x1xf32>
    %cst_38 = arith.constant 0.000000e+00 : f32
    %52 = vector.broadcast %cst_38 : f32 to vector<32x1xf32>
    %53 = arith.addf %52, %51 : vector<32x1xf32>
    %54 = vector.broadcast %46 : vector<32x1xf32> to vector<32x8xf32>
    %55 = arith.subf %19, %54 : vector<32x8xf32>
    %56 = arith.mulf %55, %55 : vector<32x8xf32>
    %cst_39 = arith.constant dense<0.000000e+00> : vector<32xf32>
    %57 = vector.multi_reduction <add>, %56, %cst_39 [1] : vector<32x8xf32> to vector<32xf32>
    %58 = vector.shape_cast %57 : vector<32xf32> to vector<32x1xf32>
    %59 = arith.addf %53, %58 : vector<32x1xf32>
    %60 = vector.broadcast %46 : vector<32x1xf32> to vector<32x8xf32>
    %61 = arith.subf %30, %60 : vector<32x8xf32>
    %62 = arith.mulf %61, %61 : vector<32x8xf32>
    %cst_40 = arith.constant dense<0.000000e+00> : vector<32xf32>
    %63 = vector.multi_reduction <add>, %62, %cst_40 [1] : vector<32x8xf32> to vector<32xf32>
    %64 = vector.shape_cast %63 : vector<32xf32> to vector<32x1xf32>
    %65 = arith.addf %59, %64 : vector<32x1xf32>
    %66 = vector.broadcast %46 : vector<32x1xf32> to vector<32x8xf32>
    %67 = arith.subf %41, %66 : vector<32x8xf32>
    %68 = arith.mulf %67, %67 : vector<32x8xf32>
    %cst_41 = arith.constant dense<0.000000e+00> : vector<32xf32>
    %69 = vector.multi_reduction <add>, %68, %cst_41 [1] : vector<32x8xf32> to vector<32xf32>
    %70 = vector.shape_cast %69 : vector<32xf32> to vector<32x1xf32>
    %71 = arith.addf %65, %70 : vector<32x1xf32>
    %cst_42 = arith.constant 3.200000e+01 : f32
    %72 = vector.broadcast %cst_42 : f32 to vector<32x1xf32>
    %73 = arith.divf %71, %72 : vector<32x1xf32>
    %cst_43 = arith.constant 9.99999974E-6 : f32
    %74 = vector.broadcast %cst_43 : f32 to vector<32x1xf32>
    %75 = arith.addf %73, %74 : vector<32x1xf32>
    %76 = math.rsqrt %75 : vector<32x1xf32>
    %c0_44 = arith.constant 0 : index
    %c0_45 = arith.constant 0 : index
    %77 = vector.load %arg3[%c0_44, %c0_45] : memref<32x1xf32, #tpu.memory_space<vmem>>, vector<32x1xf32>
    %78 = arith.mulf %77, %76 : vector<32x1xf32>
    %c0_46 = arith.constant 0 : index
    %c0_47 = arith.constant 0 : index
    %79 = vector.load %arg4[%c0_46, %c0_47] : memref<32x1xf32, #tpu.memory_space<vmem>>, vector<32x1xf32>
    %80 = arith.mulf %46, %78 : vector<32x1xf32>
    %81 = arith.subf %79, %80 : vector<32x1xf32>
    %82 = vector.broadcast %78 : vector<32x1xf32> to vector<32x8xf32>
    %83 = arith.mulf %7, %82 : vector<32x8xf32>
    %84 = vector.broadcast %81 : vector<32x1xf32> to vector<32x8xf32>
    %85 = arith.addf %83, %84 : vector<32x8xf32>
    %cst_48 = arith.constant 0.000000e+00 : f32
    %86 = vector.broadcast %cst_48 : f32 to vector<32x8xf32>
    %87 = arith.maximumf %85, %86 : vector<32x8xf32>
    %c0_49 = arith.constant 0 : index
    %c0_50 = arith.constant 0 : index
    %c0_51 = arith.constant 0 : index
    %88 = vector.load %arg5[%c0_49, %c0_50, %c0_51] : memref<4x32x8xf32, #tpu.memory_space<vmem>>, vector<1x32x8xf32>
    %89 = vector.shape_cast %88 : vector<1x32x8xf32> to vector<32x8xf32>
    %90 = vector.shape_cast %87 : vector<32x8xf32> to vector<1x32x8xf32>
    tpu.vector_store %arg5[%c0_49, %c0_50, %c0_51], %90 {strides = array<i32>} : memref<4x32x8xf32, #tpu.memory_space<vmem>>, vector<1x32x8xf32>,
    %91 = vector.broadcast %78 : vector<32x1xf32> to vector<32x8xf32>
    %92 = arith.mulf %19, %91 : vector<32x8xf32>
    %93 = vector.broadcast %81 : vector<32x1xf32> to vector<32x8xf32>
    %94 = arith.addf %92, %93 : vector<32x8xf32>
    %cst_52 = arith.constant 0.000000e+00 : f32
    %95 = vector.broadcast %cst_52 : f32 to vector<32x8xf32>
    %96 = arith.maximumf %94, %95 : vector<32x8xf32>
    %c1_53 = arith.constant 1 : index
    %c0_54 = arith.constant 0 : index
    %c0_55 = arith.constant 0 : index
    %97 = vector.load %arg5[%c1_53, %c0_54, %c0_55] : memref<4x32x8xf32, #tpu.memory_space<vmem>>, vector<1x32x8xf32>
    %98 = vector.shape_cast %97 : vector<1x32x8xf32> to vector<32x8xf32>
    %99 = vector.shape_cast %96 : vector<32x8xf32> to vector<1x32x8xf32>
    tpu.vector_store %arg5[%c1_53, %c0_54, %c0_55], %99 {strides = array<i32>} : memref<4x32x8xf32, #tpu.memory_space<vmem>>, vector<1x32x8xf32>,
    %100 = vector.broadcast %78 : vector<32x1xf32> to vector<32x8xf32>
    %101 = arith.mulf %30, %100 : vector<32x8xf32>
    %102 = vector.broadcast %81 : vector<32x1xf32> to vector<32x8xf32>
    %103 = arith.addf %101, %102 : vector<32x8xf32>
    %cst_56 = arith.constant 0.000000e+00 : f32
    %104 = vector.broadcast %cst_56 : f32 to vector<32x8xf32>
    %105 = arith.maximumf %103, %104 : vector<32x8xf32>
    %c2_57 = arith.constant 2 : index
    %c0_58 = arith.constant 0 : index
    %c0_59 = arith.constant 0 : index
    %106 = vector.load %arg5[%c2_57, %c0_58, %c0_59] : memref<4x32x8xf32, #tpu.memory_space<vmem>>, vector<1x32x8xf32>
    %107 = vector.shape_cast %106 : vector<1x32x8xf32> to vector<32x8xf32>
    %108 = vector.shape_cast %105 : vector<32x8xf32> to vector<1x32x8xf32>
    tpu.vector_store %arg5[%c2_57, %c0_58, %c0_59], %108 {strides = array<i32>} : memref<4x32x8xf32, #tpu.memory_space<vmem>>, vector<1x32x8xf32>,
    %109 = vector.broadcast %78 : vector<32x1xf32> to vector<32x8xf32>
    %110 = arith.mulf %41, %109 : vector<32x8xf32>
    %111 = vector.broadcast %81 : vector<32x1xf32> to vector<32x8xf32>
    %112 = arith.addf %110, %111 : vector<32x8xf32>
    %cst_60 = arith.constant 0.000000e+00 : f32
    %113 = vector.broadcast %cst_60 : f32 to vector<32x8xf32>
    %114 = arith.maximumf %112, %113 : vector<32x8xf32>
    %c3_61 = arith.constant 3 : index
    %c0_62 = arith.constant 0 : index
    %c0_63 = arith.constant 0 : index
    %115 = vector.load %arg5[%c3_61, %c0_62, %c0_63] : memref<4x32x8xf32, #tpu.memory_space<vmem>>, vector<1x32x8xf32>
    %116 = vector.shape_cast %115 : vector<1x32x8xf32> to vector<32x8xf32>
    %117 = vector.shape_cast %114 : vector<32x8xf32> to vector<1x32x8xf32>
    tpu.vector_store %arg5[%c3_61, %c0_62, %c0_63], %117 {strides = array<i32>} : memref<4x32x8xf32, #tpu.memory_space<vmem>>, vector<1x32x8xf32>,
    return
  }
}

module attributes {stable_mosaic.version = 11 : i64} {
  func.func @_dconv_bn_relu_kernel(%arg0: memref<4x128x32xbf16, #tpu.memory_space<vmem>>, %arg1: memref<4x16x128xbf16, #tpu.memory_space<vmem>>, %arg2: memref<16x1xf32, #tpu.memory_space<vmem>>, %arg3: memref<16x1xf32, #tpu.memory_space<vmem>>, %arg4: memref<16x1xf32, #tpu.memory_space<vmem>>, %arg5: memref<4x16x32xf32, #tpu.memory_space<vmem>>) attributes {dimension_semantics = [], scalar_prefetch = 0 : i64, scratch_operands = 0 : i64, tpu.core_type = #tpu.core_type<tc>} {
    %c0 = arith.constant 0 : index
    %c0_0 = arith.constant 0 : index
    %c0_1 = arith.constant 0 : index
    %0 = vector.load %arg1[%c0, %c0_0, %c0_1] : memref<4x16x128xbf16, #tpu.memory_space<vmem>>, vector<1x16x128xbf16>
    %1 = vector.shape_cast %0 : vector<1x16x128xbf16> to vector<16x128xbf16>
    %c0_2 = arith.constant 0 : index
    %c0_3 = arith.constant 0 : index
    %c0_4 = arith.constant 0 : index
    %2 = vector.load %arg0[%c0_2, %c0_3, %c0_4] : memref<4x128x32xbf16, #tpu.memory_space<vmem>>, vector<1x128x32xbf16>
    %3 = vector.shape_cast %2 : vector<1x128x32xbf16> to vector<128x32xbf16>
    %cst = arith.constant dense<0.000000e+00> : vector<16x32xf32>
    %4 = tpu.matmul %1, %3, %cst {dimension_numbers = #tpu.dot_dimension_numbers<[1], [0], [0], [1], [0, 0, 1, 1], [], []>} : vector<16x128xbf16>, vector<128x32xbf16>, vector<16x32xf32> -> vector<16x32xf32>
    %c0_5 = arith.constant 0 : index
    %c0_6 = arith.constant 0 : index
    %5 = vector.load %arg2[%c0_5, %c0_6] : memref<16x1xf32, #tpu.memory_space<vmem>>, vector<16x1xf32>
    %6 = vector.broadcast %5 : vector<16x1xf32> to vector<16x32xf32>
    %7 = arith.addf %4, %6 : vector<16x32xf32>
    %cst_7 = arith.constant dense<0.000000e+00> : vector<16xf32>
    %8 = vector.multi_reduction <add>, %7, %cst_7 [1] : vector<16x32xf32> to vector<16xf32>
    %9 = vector.shape_cast %8 : vector<16xf32> to vector<16x1xf32>
    %cst_8 = arith.constant 0.000000e+00 : f32
    %10 = vector.broadcast %cst_8 : f32 to vector<16x1xf32>
    %11 = arith.addf %10, %9 : vector<16x1xf32>
    %c1 = arith.constant 1 : index
    %c0_9 = arith.constant 0 : index
    %c0_10 = arith.constant 0 : index
    %12 = vector.load %arg1[%c1, %c0_9, %c0_10] : memref<4x16x128xbf16, #tpu.memory_space<vmem>>, vector<1x16x128xbf16>
    %13 = vector.shape_cast %12 : vector<1x16x128xbf16> to vector<16x128xbf16>
    %c1_11 = arith.constant 1 : index
    %c0_12 = arith.constant 0 : index
    %c0_13 = arith.constant 0 : index
    %14 = vector.load %arg0[%c1_11, %c0_12, %c0_13] : memref<4x128x32xbf16, #tpu.memory_space<vmem>>, vector<1x128x32xbf16>
    %15 = vector.shape_cast %14 : vector<1x128x32xbf16> to vector<128x32xbf16>
    %cst_14 = arith.constant dense<0.000000e+00> : vector<16x32xf32>
    %16 = tpu.matmul %13, %15, %cst_14 {dimension_numbers = #tpu.dot_dimension_numbers<[1], [0], [0], [1], [0, 0, 1, 1], [], []>} : vector<16x128xbf16>, vector<128x32xbf16>, vector<16x32xf32> -> vector<16x32xf32>
    %c0_15 = arith.constant 0 : index
    %c0_16 = arith.constant 0 : index
    %17 = vector.load %arg2[%c0_15, %c0_16] : memref<16x1xf32, #tpu.memory_space<vmem>>, vector<16x1xf32>
    %18 = vector.broadcast %17 : vector<16x1xf32> to vector<16x32xf32>
    %19 = arith.addf %16, %18 : vector<16x32xf32>
    %cst_17 = arith.constant dense<0.000000e+00> : vector<16xf32>
    %20 = vector.multi_reduction <add>, %19, %cst_17 [1] : vector<16x32xf32> to vector<16xf32>
    %21 = vector.shape_cast %20 : vector<16xf32> to vector<16x1xf32>
    %22 = arith.addf %11, %21 : vector<16x1xf32>
    %c2 = arith.constant 2 : index
    %c0_18 = arith.constant 0 : index
    %c0_19 = arith.constant 0 : index
    %23 = vector.load %arg1[%c2, %c0_18, %c0_19] : memref<4x16x128xbf16, #tpu.memory_space<vmem>>, vector<1x16x128xbf16>
    %24 = vector.shape_cast %23 : vector<1x16x128xbf16> to vector<16x128xbf16>
    %c2_20 = arith.constant 2 : index
    %c0_21 = arith.constant 0 : index
    %c0_22 = arith.constant 0 : index
    %25 = vector.load %arg0[%c2_20, %c0_21, %c0_22] : memref<4x128x32xbf16, #tpu.memory_space<vmem>>, vector<1x128x32xbf16>
    %26 = vector.shape_cast %25 : vector<1x128x32xbf16> to vector<128x32xbf16>
    %cst_23 = arith.constant dense<0.000000e+00> : vector<16x32xf32>
    %27 = tpu.matmul %24, %26, %cst_23 {dimension_numbers = #tpu.dot_dimension_numbers<[1], [0], [0], [1], [0, 0, 1, 1], [], []>} : vector<16x128xbf16>, vector<128x32xbf16>, vector<16x32xf32> -> vector<16x32xf32>
    %c0_24 = arith.constant 0 : index
    %c0_25 = arith.constant 0 : index
    %28 = vector.load %arg2[%c0_24, %c0_25] : memref<16x1xf32, #tpu.memory_space<vmem>>, vector<16x1xf32>
    %29 = vector.broadcast %28 : vector<16x1xf32> to vector<16x32xf32>
    %30 = arith.addf %27, %29 : vector<16x32xf32>
    %cst_26 = arith.constant dense<0.000000e+00> : vector<16xf32>
    %31 = vector.multi_reduction <add>, %30, %cst_26 [1] : vector<16x32xf32> to vector<16xf32>
    %32 = vector.shape_cast %31 : vector<16xf32> to vector<16x1xf32>
    %33 = arith.addf %22, %32 : vector<16x1xf32>
    %c3 = arith.constant 3 : index
    %c0_27 = arith.constant 0 : index
    %c0_28 = arith.constant 0 : index
    %34 = vector.load %arg1[%c3, %c0_27, %c0_28] : memref<4x16x128xbf16, #tpu.memory_space<vmem>>, vector<1x16x128xbf16>
    %35 = vector.shape_cast %34 : vector<1x16x128xbf16> to vector<16x128xbf16>
    %c3_29 = arith.constant 3 : index
    %c0_30 = arith.constant 0 : index
    %c0_31 = arith.constant 0 : index
    %36 = vector.load %arg0[%c3_29, %c0_30, %c0_31] : memref<4x128x32xbf16, #tpu.memory_space<vmem>>, vector<1x128x32xbf16>
    %37 = vector.shape_cast %36 : vector<1x128x32xbf16> to vector<128x32xbf16>
    %cst_32 = arith.constant dense<0.000000e+00> : vector<16x32xf32>
    %38 = tpu.matmul %35, %37, %cst_32 {dimension_numbers = #tpu.dot_dimension_numbers<[1], [0], [0], [1], [0, 0, 1, 1], [], []>} : vector<16x128xbf16>, vector<128x32xbf16>, vector<16x32xf32> -> vector<16x32xf32>
    %c0_33 = arith.constant 0 : index
    %c0_34 = arith.constant 0 : index
    %39 = vector.load %arg2[%c0_33, %c0_34] : memref<16x1xf32, #tpu.memory_space<vmem>>, vector<16x1xf32>
    %40 = vector.broadcast %39 : vector<16x1xf32> to vector<16x32xf32>
    %41 = arith.addf %38, %40 : vector<16x32xf32>
    %cst_35 = arith.constant dense<0.000000e+00> : vector<16xf32>
    %42 = vector.multi_reduction <add>, %41, %cst_35 [1] : vector<16x32xf32> to vector<16xf32>
    %43 = vector.shape_cast %42 : vector<16xf32> to vector<16x1xf32>
    %44 = arith.addf %33, %43 : vector<16x1xf32>
    %cst_36 = arith.constant 1.280000e+02 : f32
    %45 = vector.broadcast %cst_36 : f32 to vector<16x1xf32>
    %46 = arith.divf %44, %45 : vector<16x1xf32>
    %47 = vector.broadcast %46 : vector<16x1xf32> to vector<16x32xf32>
    %48 = arith.subf %7, %47 : vector<16x32xf32>
    %49 = arith.mulf %48, %48 : vector<16x32xf32>
    %cst_37 = arith.constant dense<0.000000e+00> : vector<16xf32>
    %50 = vector.multi_reduction <add>, %49, %cst_37 [1] : vector<16x32xf32> to vector<16xf32>
    %51 = vector.shape_cast %50 : vector<16xf32> to vector<16x1xf32>
    %cst_38 = arith.constant 0.000000e+00 : f32
    %52 = vector.broadcast %cst_38 : f32 to vector<16x1xf32>
    %53 = arith.addf %52, %51 : vector<16x1xf32>
    %54 = vector.broadcast %46 : vector<16x1xf32> to vector<16x32xf32>
    %55 = arith.subf %19, %54 : vector<16x32xf32>
    %56 = arith.mulf %55, %55 : vector<16x32xf32>
    %cst_39 = arith.constant dense<0.000000e+00> : vector<16xf32>
    %57 = vector.multi_reduction <add>, %56, %cst_39 [1] : vector<16x32xf32> to vector<16xf32>
    %58 = vector.shape_cast %57 : vector<16xf32> to vector<16x1xf32>
    %59 = arith.addf %53, %58 : vector<16x1xf32>
    %60 = vector.broadcast %46 : vector<16x1xf32> to vector<16x32xf32>
    %61 = arith.subf %30, %60 : vector<16x32xf32>
    %62 = arith.mulf %61, %61 : vector<16x32xf32>
    %cst_40 = arith.constant dense<0.000000e+00> : vector<16xf32>
    %63 = vector.multi_reduction <add>, %62, %cst_40 [1] : vector<16x32xf32> to vector<16xf32>
    %64 = vector.shape_cast %63 : vector<16xf32> to vector<16x1xf32>
    %65 = arith.addf %59, %64 : vector<16x1xf32>
    %66 = vector.broadcast %46 : vector<16x1xf32> to vector<16x32xf32>
    %67 = arith.subf %41, %66 : vector<16x32xf32>
    %68 = arith.mulf %67, %67 : vector<16x32xf32>
    %cst_41 = arith.constant dense<0.000000e+00> : vector<16xf32>
    %69 = vector.multi_reduction <add>, %68, %cst_41 [1] : vector<16x32xf32> to vector<16xf32>
    %70 = vector.shape_cast %69 : vector<16xf32> to vector<16x1xf32>
    %71 = arith.addf %65, %70 : vector<16x1xf32>
    %cst_42 = arith.constant 1.280000e+02 : f32
    %72 = vector.broadcast %cst_42 : f32 to vector<16x1xf32>
    %73 = arith.divf %71, %72 : vector<16x1xf32>
    %cst_43 = arith.constant 9.99999974E-6 : f32
    %74 = vector.broadcast %cst_43 : f32 to vector<16x1xf32>
    %75 = arith.addf %73, %74 : vector<16x1xf32>
    %76 = math.rsqrt %75 : vector<16x1xf32>
    %c0_44 = arith.constant 0 : index
    %c0_45 = arith.constant 0 : index
    %77 = vector.load %arg3[%c0_44, %c0_45] : memref<16x1xf32, #tpu.memory_space<vmem>>, vector<16x1xf32>
    %78 = arith.mulf %77, %76 : vector<16x1xf32>
    %c0_46 = arith.constant 0 : index
    %c0_47 = arith.constant 0 : index
    %79 = vector.load %arg4[%c0_46, %c0_47] : memref<16x1xf32, #tpu.memory_space<vmem>>, vector<16x1xf32>
    %80 = arith.mulf %46, %78 : vector<16x1xf32>
    %81 = arith.subf %79, %80 : vector<16x1xf32>
    %82 = vector.broadcast %78 : vector<16x1xf32> to vector<16x32xf32>
    %83 = arith.mulf %7, %82 : vector<16x32xf32>
    %84 = vector.broadcast %81 : vector<16x1xf32> to vector<16x32xf32>
    %85 = arith.addf %83, %84 : vector<16x32xf32>
    %cst_48 = arith.constant 0.000000e+00 : f32
    %86 = vector.broadcast %cst_48 : f32 to vector<16x32xf32>
    %87 = arith.maximumf %85, %86 : vector<16x32xf32>
    %c0_49 = arith.constant 0 : index
    %c0_50 = arith.constant 0 : index
    %c0_51 = arith.constant 0 : index
    %88 = vector.load %arg5[%c0_49, %c0_50, %c0_51] : memref<4x16x32xf32, #tpu.memory_space<vmem>>, vector<1x16x32xf32>
    %89 = vector.shape_cast %88 : vector<1x16x32xf32> to vector<16x32xf32>
    %90 = vector.shape_cast %87 : vector<16x32xf32> to vector<1x16x32xf32>
    tpu.vector_store %arg5[%c0_49, %c0_50, %c0_51], %90 {strides = array<i32>} : memref<4x16x32xf32, #tpu.memory_space<vmem>>, vector<1x16x32xf32>,
    %91 = vector.broadcast %78 : vector<16x1xf32> to vector<16x32xf32>
    %92 = arith.mulf %19, %91 : vector<16x32xf32>
    %93 = vector.broadcast %81 : vector<16x1xf32> to vector<16x32xf32>
    %94 = arith.addf %92, %93 : vector<16x32xf32>
    %cst_52 = arith.constant 0.000000e+00 : f32
    %95 = vector.broadcast %cst_52 : f32 to vector<16x32xf32>
    %96 = arith.maximumf %94, %95 : vector<16x32xf32>
    %c1_53 = arith.constant 1 : index
    %c0_54 = arith.constant 0 : index
    %c0_55 = arith.constant 0 : index
    %97 = vector.load %arg5[%c1_53, %c0_54, %c0_55] : memref<4x16x32xf32, #tpu.memory_space<vmem>>, vector<1x16x32xf32>
    %98 = vector.shape_cast %97 : vector<1x16x32xf32> to vector<16x32xf32>
    %99 = vector.shape_cast %96 : vector<16x32xf32> to vector<1x16x32xf32>
    tpu.vector_store %arg5[%c1_53, %c0_54, %c0_55], %99 {strides = array<i32>} : memref<4x16x32xf32, #tpu.memory_space<vmem>>, vector<1x16x32xf32>,
    %100 = vector.broadcast %78 : vector<16x1xf32> to vector<16x32xf32>
    %101 = arith.mulf %30, %100 : vector<16x32xf32>
    %102 = vector.broadcast %81 : vector<16x1xf32> to vector<16x32xf32>
    %103 = arith.addf %101, %102 : vector<16x32xf32>
    %cst_56 = arith.constant 0.000000e+00 : f32
    %104 = vector.broadcast %cst_56 : f32 to vector<16x32xf32>
    %105 = arith.maximumf %103, %104 : vector<16x32xf32>
    %c2_57 = arith.constant 2 : index
    %c0_58 = arith.constant 0 : index
    %c0_59 = arith.constant 0 : index
    %106 = vector.load %arg5[%c2_57, %c0_58, %c0_59] : memref<4x16x32xf32, #tpu.memory_space<vmem>>, vector<1x16x32xf32>
    %107 = vector.shape_cast %106 : vector<1x16x32xf32> to vector<16x32xf32>
    %108 = vector.shape_cast %105 : vector<16x32xf32> to vector<1x16x32xf32>
    tpu.vector_store %arg5[%c2_57, %c0_58, %c0_59], %108 {strides = array<i32>} : memref<4x16x32xf32, #tpu.memory_space<vmem>>, vector<1x16x32xf32>,
    %109 = vector.broadcast %78 : vector<16x1xf32> to vector<16x32xf32>
    %110 = arith.mulf %41, %109 : vector<16x32xf32>
    %111 = vector.broadcast %81 : vector<16x1xf32> to vector<16x32xf32>
    %112 = arith.addf %110, %111 : vector<16x32xf32>
    %cst_60 = arith.constant 0.000000e+00 : f32
    %113 = vector.broadcast %cst_60 : f32 to vector<16x32xf32>
    %114 = arith.maximumf %112, %113 : vector<16x32xf32>
    %c3_61 = arith.constant 3 : index
    %c0_62 = arith.constant 0 : index
    %c0_63 = arith.constant 0 : index
    %115 = vector.load %arg5[%c3_61, %c0_62, %c0_63] : memref<4x16x32xf32, #tpu.memory_space<vmem>>, vector<1x16x32xf32>
    %116 = vector.shape_cast %115 : vector<1x16x32xf32> to vector<16x32xf32>
    %117 = vector.shape_cast %114 : vector<16x32xf32> to vector<1x16x32xf32>
    tpu.vector_store %arg5[%c3_61, %c0_62, %c0_63], %117 {strides = array<i32>} : memref<4x16x32xf32, #tpu.memory_space<vmem>>, vector<1x16x32xf32>,
    return
  }
}

module attributes {stable_mosaic.version = 11 : i64} {
  func.func @_dconv_bn_relu_kernel(%arg0: memref<4x64x128xbf16, #tpu.memory_space<vmem>>, %arg1: memref<4x8x64xbf16, #tpu.memory_space<vmem>>, %arg2: memref<8x1xf32, #tpu.memory_space<vmem>>, %arg3: memref<8x1xf32, #tpu.memory_space<vmem>>, %arg4: memref<8x1xf32, #tpu.memory_space<vmem>>, %arg5: memref<4x8x128xf32, #tpu.memory_space<vmem>>) attributes {dimension_semantics = [], scalar_prefetch = 0 : i64, scratch_operands = 0 : i64, tpu.core_type = #tpu.core_type<tc>} {
    %c0 = arith.constant 0 : index
    %c0_0 = arith.constant 0 : index
    %c0_1 = arith.constant 0 : index
    %0 = vector.load %arg1[%c0, %c0_0, %c0_1] : memref<4x8x64xbf16, #tpu.memory_space<vmem>>, vector<1x8x64xbf16>
    %1 = vector.shape_cast %0 : vector<1x8x64xbf16> to vector<8x64xbf16>
    %c0_2 = arith.constant 0 : index
    %c0_3 = arith.constant 0 : index
    %c0_4 = arith.constant 0 : index
    %2 = vector.load %arg0[%c0_2, %c0_3, %c0_4] : memref<4x64x128xbf16, #tpu.memory_space<vmem>>, vector<1x64x128xbf16>
    %3 = vector.shape_cast %2 : vector<1x64x128xbf16> to vector<64x128xbf16>
    %cst = arith.constant dense<0.000000e+00> : vector<8x128xf32>
    %4 = tpu.matmul %1, %3, %cst {dimension_numbers = #tpu.dot_dimension_numbers<[1], [0], [0], [1], [0, 0, 1, 1], [], []>} : vector<8x64xbf16>, vector<64x128xbf16>, vector<8x128xf32> -> vector<8x128xf32>
    %c0_5 = arith.constant 0 : index
    %c0_6 = arith.constant 0 : index
    %5 = vector.load %arg2[%c0_5, %c0_6] : memref<8x1xf32, #tpu.memory_space<vmem>>, vector<8x1xf32>
    %6 = vector.broadcast %5 : vector<8x1xf32> to vector<8x128xf32>
    %7 = arith.addf %4, %6 : vector<8x128xf32>
    %cst_7 = arith.constant dense<0.000000e+00> : vector<8xf32>
    %8 = vector.multi_reduction <add>, %7, %cst_7 [1] : vector<8x128xf32> to vector<8xf32>
    %9 = vector.shape_cast %8 : vector<8xf32> to vector<8x1xf32>
    %cst_8 = arith.constant 0.000000e+00 : f32
    %10 = vector.broadcast %cst_8 : f32 to vector<8x1xf32>
    %11 = arith.addf %10, %9 : vector<8x1xf32>
    %c1 = arith.constant 1 : index
    %c0_9 = arith.constant 0 : index
    %c0_10 = arith.constant 0 : index
    %12 = vector.load %arg1[%c1, %c0_9, %c0_10] : memref<4x8x64xbf16, #tpu.memory_space<vmem>>, vector<1x8x64xbf16>
    %13 = vector.shape_cast %12 : vector<1x8x64xbf16> to vector<8x64xbf16>
    %c1_11 = arith.constant 1 : index
    %c0_12 = arith.constant 0 : index
    %c0_13 = arith.constant 0 : index
    %14 = vector.load %arg0[%c1_11, %c0_12, %c0_13] : memref<4x64x128xbf16, #tpu.memory_space<vmem>>, vector<1x64x128xbf16>
    %15 = vector.shape_cast %14 : vector<1x64x128xbf16> to vector<64x128xbf16>
    %cst_14 = arith.constant dense<0.000000e+00> : vector<8x128xf32>
    %16 = tpu.matmul %13, %15, %cst_14 {dimension_numbers = #tpu.dot_dimension_numbers<[1], [0], [0], [1], [0, 0, 1, 1], [], []>} : vector<8x64xbf16>, vector<64x128xbf16>, vector<8x128xf32> -> vector<8x128xf32>
    %c0_15 = arith.constant 0 : index
    %c0_16 = arith.constant 0 : index
    %17 = vector.load %arg2[%c0_15, %c0_16] : memref<8x1xf32, #tpu.memory_space<vmem>>, vector<8x1xf32>
    %18 = vector.broadcast %17 : vector<8x1xf32> to vector<8x128xf32>
    %19 = arith.addf %16, %18 : vector<8x128xf32>
    %cst_17 = arith.constant dense<0.000000e+00> : vector<8xf32>
    %20 = vector.multi_reduction <add>, %19, %cst_17 [1] : vector<8x128xf32> to vector<8xf32>
    %21 = vector.shape_cast %20 : vector<8xf32> to vector<8x1xf32>
    %22 = arith.addf %11, %21 : vector<8x1xf32>
    %c2 = arith.constant 2 : index
    %c0_18 = arith.constant 0 : index
    %c0_19 = arith.constant 0 : index
    %23 = vector.load %arg1[%c2, %c0_18, %c0_19] : memref<4x8x64xbf16, #tpu.memory_space<vmem>>, vector<1x8x64xbf16>
    %24 = vector.shape_cast %23 : vector<1x8x64xbf16> to vector<8x64xbf16>
    %c2_20 = arith.constant 2 : index
    %c0_21 = arith.constant 0 : index
    %c0_22 = arith.constant 0 : index
    %25 = vector.load %arg0[%c2_20, %c0_21, %c0_22] : memref<4x64x128xbf16, #tpu.memory_space<vmem>>, vector<1x64x128xbf16>
    %26 = vector.shape_cast %25 : vector<1x64x128xbf16> to vector<64x128xbf16>
    %cst_23 = arith.constant dense<0.000000e+00> : vector<8x128xf32>
    %27 = tpu.matmul %24, %26, %cst_23 {dimension_numbers = #tpu.dot_dimension_numbers<[1], [0], [0], [1], [0, 0, 1, 1], [], []>} : vector<8x64xbf16>, vector<64x128xbf16>, vector<8x128xf32> -> vector<8x128xf32>
    %c0_24 = arith.constant 0 : index
    %c0_25 = arith.constant 0 : index
    %28 = vector.load %arg2[%c0_24, %c0_25] : memref<8x1xf32, #tpu.memory_space<vmem>>, vector<8x1xf32>
    %29 = vector.broadcast %28 : vector<8x1xf32> to vector<8x128xf32>
    %30 = arith.addf %27, %29 : vector<8x128xf32>
    %cst_26 = arith.constant dense<0.000000e+00> : vector<8xf32>
    %31 = vector.multi_reduction <add>, %30, %cst_26 [1] : vector<8x128xf32> to vector<8xf32>
    %32 = vector.shape_cast %31 : vector<8xf32> to vector<8x1xf32>
    %33 = arith.addf %22, %32 : vector<8x1xf32>
    %c3 = arith.constant 3 : index
    %c0_27 = arith.constant 0 : index
    %c0_28 = arith.constant 0 : index
    %34 = vector.load %arg1[%c3, %c0_27, %c0_28] : memref<4x8x64xbf16, #tpu.memory_space<vmem>>, vector<1x8x64xbf16>
    %35 = vector.shape_cast %34 : vector<1x8x64xbf16> to vector<8x64xbf16>
    %c3_29 = arith.constant 3 : index
    %c0_30 = arith.constant 0 : index
    %c0_31 = arith.constant 0 : index
    %36 = vector.load %arg0[%c3_29, %c0_30, %c0_31] : memref<4x64x128xbf16, #tpu.memory_space<vmem>>, vector<1x64x128xbf16>
    %37 = vector.shape_cast %36 : vector<1x64x128xbf16> to vector<64x128xbf16>
    %cst_32 = arith.constant dense<0.000000e+00> : vector<8x128xf32>
    %38 = tpu.matmul %35, %37, %cst_32 {dimension_numbers = #tpu.dot_dimension_numbers<[1], [0], [0], [1], [0, 0, 1, 1], [], []>} : vector<8x64xbf16>, vector<64x128xbf16>, vector<8x128xf32> -> vector<8x128xf32>
    %c0_33 = arith.constant 0 : index
    %c0_34 = arith.constant 0 : index
    %39 = vector.load %arg2[%c0_33, %c0_34] : memref<8x1xf32, #tpu.memory_space<vmem>>, vector<8x1xf32>
    %40 = vector.broadcast %39 : vector<8x1xf32> to vector<8x128xf32>
    %41 = arith.addf %38, %40 : vector<8x128xf32>
    %cst_35 = arith.constant dense<0.000000e+00> : vector<8xf32>
    %42 = vector.multi_reduction <add>, %41, %cst_35 [1] : vector<8x128xf32> to vector<8xf32>
    %43 = vector.shape_cast %42 : vector<8xf32> to vector<8x1xf32>
    %44 = arith.addf %33, %43 : vector<8x1xf32>
    %cst_36 = arith.constant 5.120000e+02 : f32
    %45 = vector.broadcast %cst_36 : f32 to vector<8x1xf32>
    %46 = arith.divf %44, %45 : vector<8x1xf32>
    %47 = vector.broadcast %46 : vector<8x1xf32> to vector<8x128xf32>
    %48 = arith.subf %7, %47 : vector<8x128xf32>
    %49 = arith.mulf %48, %48 : vector<8x128xf32>
    %cst_37 = arith.constant dense<0.000000e+00> : vector<8xf32>
    %50 = vector.multi_reduction <add>, %49, %cst_37 [1] : vector<8x128xf32> to vector<8xf32>
    %51 = vector.shape_cast %50 : vector<8xf32> to vector<8x1xf32>
    %cst_38 = arith.constant 0.000000e+00 : f32
    %52 = vector.broadcast %cst_38 : f32 to vector<8x1xf32>
    %53 = arith.addf %52, %51 : vector<8x1xf32>
    %54 = vector.broadcast %46 : vector<8x1xf32> to vector<8x128xf32>
    %55 = arith.subf %19, %54 : vector<8x128xf32>
    %56 = arith.mulf %55, %55 : vector<8x128xf32>
    %cst_39 = arith.constant dense<0.000000e+00> : vector<8xf32>
    %57 = vector.multi_reduction <add>, %56, %cst_39 [1] : vector<8x128xf32> to vector<8xf32>
    %58 = vector.shape_cast %57 : vector<8xf32> to vector<8x1xf32>
    %59 = arith.addf %53, %58 : vector<8x1xf32>
    %60 = vector.broadcast %46 : vector<8x1xf32> to vector<8x128xf32>
    %61 = arith.subf %30, %60 : vector<8x128xf32>
    %62 = arith.mulf %61, %61 : vector<8x128xf32>
    %cst_40 = arith.constant dense<0.000000e+00> : vector<8xf32>
    %63 = vector.multi_reduction <add>, %62, %cst_40 [1] : vector<8x128xf32> to vector<8xf32>
    %64 = vector.shape_cast %63 : vector<8xf32> to vector<8x1xf32>
    %65 = arith.addf %59, %64 : vector<8x1xf32>
    %66 = vector.broadcast %46 : vector<8x1xf32> to vector<8x128xf32>
    %67 = arith.subf %41, %66 : vector<8x128xf32>
    %68 = arith.mulf %67, %67 : vector<8x128xf32>
    %cst_41 = arith.constant dense<0.000000e+00> : vector<8xf32>
    %69 = vector.multi_reduction <add>, %68, %cst_41 [1] : vector<8x128xf32> to vector<8xf32>
    %70 = vector.shape_cast %69 : vector<8xf32> to vector<8x1xf32>
    %71 = arith.addf %65, %70 : vector<8x1xf32>
    %cst_42 = arith.constant 5.120000e+02 : f32
    %72 = vector.broadcast %cst_42 : f32 to vector<8x1xf32>
    %73 = arith.divf %71, %72 : vector<8x1xf32>
    %cst_43 = arith.constant 9.99999974E-6 : f32
    %74 = vector.broadcast %cst_43 : f32 to vector<8x1xf32>
    %75 = arith.addf %73, %74 : vector<8x1xf32>
    %76 = math.rsqrt %75 : vector<8x1xf32>
    %c0_44 = arith.constant 0 : index
    %c0_45 = arith.constant 0 : index
    %77 = vector.load %arg3[%c0_44, %c0_45] : memref<8x1xf32, #tpu.memory_space<vmem>>, vector<8x1xf32>
    %78 = arith.mulf %77, %76 : vector<8x1xf32>
    %c0_46 = arith.constant 0 : index
    %c0_47 = arith.constant 0 : index
    %79 = vector.load %arg4[%c0_46, %c0_47] : memref<8x1xf32, #tpu.memory_space<vmem>>, vector<8x1xf32>
    %80 = arith.mulf %46, %78 : vector<8x1xf32>
    %81 = arith.subf %79, %80 : vector<8x1xf32>
    %82 = vector.broadcast %78 : vector<8x1xf32> to vector<8x128xf32>
    %83 = arith.mulf %7, %82 : vector<8x128xf32>
    %84 = vector.broadcast %81 : vector<8x1xf32> to vector<8x128xf32>
    %85 = arith.addf %83, %84 : vector<8x128xf32>
    %cst_48 = arith.constant 0.000000e+00 : f32
    %86 = vector.broadcast %cst_48 : f32 to vector<8x128xf32>
    %87 = arith.maximumf %85, %86 : vector<8x128xf32>
    %c0_49 = arith.constant 0 : index
    %c0_50 = arith.constant 0 : index
    %c0_51 = arith.constant 0 : index
    %88 = vector.load %arg5[%c0_49, %c0_50, %c0_51] : memref<4x8x128xf32, #tpu.memory_space<vmem>>, vector<1x8x128xf32>
    %89 = vector.shape_cast %88 : vector<1x8x128xf32> to vector<8x128xf32>
    %90 = vector.shape_cast %87 : vector<8x128xf32> to vector<1x8x128xf32>
    tpu.vector_store %arg5[%c0_49, %c0_50, %c0_51], %90 {strides = array<i32>} : memref<4x8x128xf32, #tpu.memory_space<vmem>>, vector<1x8x128xf32>,
    %91 = vector.broadcast %78 : vector<8x1xf32> to vector<8x128xf32>
    %92 = arith.mulf %19, %91 : vector<8x128xf32>
    %93 = vector.broadcast %81 : vector<8x1xf32> to vector<8x128xf32>
    %94 = arith.addf %92, %93 : vector<8x128xf32>
    %cst_52 = arith.constant 0.000000e+00 : f32
    %95 = vector.broadcast %cst_52 : f32 to vector<8x128xf32>
    %96 = arith.maximumf %94, %95 : vector<8x128xf32>
    %c1_53 = arith.constant 1 : index
    %c0_54 = arith.constant 0 : index
    %c0_55 = arith.constant 0 : index
    %97 = vector.load %arg5[%c1_53, %c0_54, %c0_55] : memref<4x8x128xf32, #tpu.memory_space<vmem>>, vector<1x8x128xf32>
    %98 = vector.shape_cast %97 : vector<1x8x128xf32> to vector<8x128xf32>
    %99 = vector.shape_cast %96 : vector<8x128xf32> to vector<1x8x128xf32>
    tpu.vector_store %arg5[%c1_53, %c0_54, %c0_55], %99 {strides = array<i32>} : memref<4x8x128xf32, #tpu.memory_space<vmem>>, vector<1x8x128xf32>,
    %100 = vector.broadcast %78 : vector<8x1xf32> to vector<8x128xf32>
    %101 = arith.mulf %30, %100 : vector<8x128xf32>
    %102 = vector.broadcast %81 : vector<8x1xf32> to vector<8x128xf32>
    %103 = arith.addf %101, %102 : vector<8x128xf32>
    %cst_56 = arith.constant 0.000000e+00 : f32
    %104 = vector.broadcast %cst_56 : f32 to vector<8x128xf32>
    %105 = arith.maximumf %103, %104 : vector<8x128xf32>
    %c2_57 = arith.constant 2 : index
    %c0_58 = arith.constant 0 : index
    %c0_59 = arith.constant 0 : index
    %106 = vector.load %arg5[%c2_57, %c0_58, %c0_59] : memref<4x8x128xf32, #tpu.memory_space<vmem>>, vector<1x8x128xf32>
    %107 = vector.shape_cast %106 : vector<1x8x128xf32> to vector<8x128xf32>
    %108 = vector.shape_cast %105 : vector<8x128xf32> to vector<1x8x128xf32>
    tpu.vector_store %arg5[%c2_57, %c0_58, %c0_59], %108 {strides = array<i32>} : memref<4x8x128xf32, #tpu.memory_space<vmem>>, vector<1x8x128xf32>,
    %109 = vector.broadcast %78 : vector<8x1xf32> to vector<8x128xf32>
    %110 = arith.mulf %41, %109 : vector<8x128xf32>
    %111 = vector.broadcast %81 : vector<8x1xf32> to vector<8x128xf32>
    %112 = arith.addf %110, %111 : vector<8x128xf32>
    %cst_60 = arith.constant 0.000000e+00 : f32
    %113 = vector.broadcast %cst_60 : f32 to vector<8x128xf32>
    %114 = arith.maximumf %112, %113 : vector<8x128xf32>
    %c3_61 = arith.constant 3 : index
    %c0_62 = arith.constant 0 : index
    %c0_63 = arith.constant 0 : index
    %115 = vector.load %arg5[%c3_61, %c0_62, %c0_63] : memref<4x8x128xf32, #tpu.memory_space<vmem>>, vector<1x8x128xf32>
    %116 = vector.shape_cast %115 : vector<1x8x128xf32> to vector<8x128xf32>
    %117 = vector.shape_cast %114 : vector<8x128xf32> to vector<1x8x128xf32>
    tpu.vector_store %arg5[%c3_61, %c0_62, %c0_63], %117 {strides = array<i32>} : memref<4x8x128xf32, #tpu.memory_space<vmem>>, vector<1x8x128xf32>,
    return
  }
}

module attributes {stable_mosaic.version = 11 : i64} {
  func.func @_dconv_tanh_kernel(%arg0: memref<4x32x512xbf16, #tpu.memory_space<vmem>>, %arg1: memref<4x3x32xbf16, #tpu.memory_space<vmem>>, %arg2: memref<3x1xf32, #tpu.memory_space<vmem>>, %arg3: memref<4x3x512xf32, #tpu.memory_space<vmem>>) attributes {dimension_semantics = [], scalar_prefetch = 0 : i64, scratch_operands = 0 : i64, tpu.core_type = #tpu.core_type<tc>} {
    %c0 = arith.constant 0 : index
    %c0_0 = arith.constant 0 : index
    %c0_1 = arith.constant 0 : index
    %0 = vector.load %arg1[%c0, %c0_0, %c0_1] : memref<4x3x32xbf16, #tpu.memory_space<vmem>>, vector<1x3x32xbf16>
    %1 = vector.shape_cast %0 : vector<1x3x32xbf16> to vector<3x32xbf16>
    %c0_2 = arith.constant 0 : index
    %c0_3 = arith.constant 0 : index
    %c0_4 = arith.constant 0 : index
    %2 = vector.load %arg0[%c0_2, %c0_3, %c0_4] : memref<4x32x512xbf16, #tpu.memory_space<vmem>>, vector<1x32x512xbf16>
    %3 = vector.shape_cast %2 : vector<1x32x512xbf16> to vector<32x512xbf16>
    %cst = arith.constant dense<0.000000e+00> : vector<3x512xf32>
    %4 = tpu.matmul %1, %3, %cst {dimension_numbers = #tpu.dot_dimension_numbers<[1], [0], [0], [1], [0, 0, 1, 1], [], []>} : vector<3x32xbf16>, vector<32x512xbf16>, vector<3x512xf32> -> vector<3x512xf32>
    %c0_5 = arith.constant 0 : index
    %c0_6 = arith.constant 0 : index
    %5 = vector.load %arg2[%c0_5, %c0_6] : memref<3x1xf32, #tpu.memory_space<vmem>>, vector<3x1xf32>
    %6 = vector.broadcast %5 : vector<3x1xf32> to vector<3x512xf32>
    %7 = arith.addf %4, %6 : vector<3x512xf32>
    %8 = math.tanh %7 : vector<3x512xf32>
    %c0_7 = arith.constant 0 : index
    %c0_8 = arith.constant 0 : index
    %c0_9 = arith.constant 0 : index
    %9 = vector.load %arg3[%c0_7, %c0_8, %c0_9] : memref<4x3x512xf32, #tpu.memory_space<vmem>>, vector<1x3x512xf32>
    %10 = vector.shape_cast %9 : vector<1x3x512xf32> to vector<3x512xf32>
    %11 = vector.shape_cast %8 : vector<3x512xf32> to vector<1x3x512xf32>
    tpu.vector_store %arg3[%c0_7, %c0_8, %c0_9], %11 {strides = array<i32>} : memref<4x3x512xf32, #tpu.memory_space<vmem>>, vector<1x3x512xf32>,
    %c1 = arith.constant 1 : index
    %c0_10 = arith.constant 0 : index
    %c0_11 = arith.constant 0 : index
    %12 = vector.load %arg1[%c1, %c0_10, %c0_11] : memref<4x3x32xbf16, #tpu.memory_space<vmem>>, vector<1x3x32xbf16>
    %13 = vector.shape_cast %12 : vector<1x3x32xbf16> to vector<3x32xbf16>
    %c1_12 = arith.constant 1 : index
    %c0_13 = arith.constant 0 : index
    %c0_14 = arith.constant 0 : index
    %14 = vector.load %arg0[%c1_12, %c0_13, %c0_14] : memref<4x32x512xbf16, #tpu.memory_space<vmem>>, vector<1x32x512xbf16>
    %15 = vector.shape_cast %14 : vector<1x32x512xbf16> to vector<32x512xbf16>
    %cst_15 = arith.constant dense<0.000000e+00> : vector<3x512xf32>
    %16 = tpu.matmul %13, %15, %cst_15 {dimension_numbers = #tpu.dot_dimension_numbers<[1], [0], [0], [1], [0, 0, 1, 1], [], []>} : vector<3x32xbf16>, vector<32x512xbf16>, vector<3x512xf32> -> vector<3x512xf32>
    %c0_16 = arith.constant 0 : index
    %c0_17 = arith.constant 0 : index
    %17 = vector.load %arg2[%c0_16, %c0_17] : memref<3x1xf32, #tpu.memory_space<vmem>>, vector<3x1xf32>
    %18 = vector.broadcast %17 : vector<3x1xf32> to vector<3x512xf32>
    %19 = arith.addf %16, %18 : vector<3x512xf32>
    %20 = math.tanh %19 : vector<3x512xf32>
    %c1_18 = arith.constant 1 : index
    %c0_19 = arith.constant 0 : index
    %c0_20 = arith.constant 0 : index
    %21 = vector.load %arg3[%c1_18, %c0_19, %c0_20] : memref<4x3x512xf32, #tpu.memory_space<vmem>>, vector<1x3x512xf32>
    %22 = vector.shape_cast %21 : vector<1x3x512xf32> to vector<3x512xf32>
    %23 = vector.shape_cast %20 : vector<3x512xf32> to vector<1x3x512xf32>
    tpu.vector_store %arg3[%c1_18, %c0_19, %c0_20], %23 {strides = array<i32>} : memref<4x3x512xf32, #tpu.memory_space<vmem>>, vector<1x3x512xf32>,
    %c2 = arith.constant 2 : index
    %c0_21 = arith.constant 0 : index
    %c0_22 = arith.constant 0 : index
    %24 = vector.load %arg1[%c2, %c0_21, %c0_22] : memref<4x3x32xbf16, #tpu.memory_space<vmem>>, vector<1x3x32xbf16>
    %25 = vector.shape_cast %24 : vector<1x3x32xbf16> to vector<3x32xbf16>
    %c2_23 = arith.constant 2 : index
    %c0_24 = arith.constant 0 : index
    %c0_25 = arith.constant 0 : index
    %26 = vector.load %arg0[%c2_23, %c0_24, %c0_25] : memref<4x32x512xbf16, #tpu.memory_space<vmem>>, vector<1x32x512xbf16>
    %27 = vector.shape_cast %26 : vector<1x32x512xbf16> to vector<32x512xbf16>
    %cst_26 = arith.constant dense<0.000000e+00> : vector<3x512xf32>
    %28 = tpu.matmul %25, %27, %cst_26 {dimension_numbers = #tpu.dot_dimension_numbers<[1], [0], [0], [1], [0, 0, 1, 1], [], []>} : vector<3x32xbf16>, vector<32x512xbf16>, vector<3x512xf32> -> vector<3x512xf32>
    %c0_27 = arith.constant 0 : index
    %c0_28 = arith.constant 0 : index
    %29 = vector.load %arg2[%c0_27, %c0_28] : memref<3x1xf32, #tpu.memory_space<vmem>>, vector<3x1xf32>
    %30 = vector.broadcast %29 : vector<3x1xf32> to vector<3x512xf32>
    %31 = arith.addf %28, %30 : vector<3x512xf32>
    %32 = math.tanh %31 : vector<3x512xf32>
    %c2_29 = arith.constant 2 : index
    %c0_30 = arith.constant 0 : index
    %c0_31 = arith.constant 0 : index
    %33 = vector.load %arg3[%c2_29, %c0_30, %c0_31] : memref<4x3x512xf32, #tpu.memory_space<vmem>>, vector<1x3x512xf32>
    %34 = vector.shape_cast %33 : vector<1x3x512xf32> to vector<3x512xf32>
    %35 = vector.shape_cast %32 : vector<3x512xf32> to vector<1x3x512xf32>
    tpu.vector_store %arg3[%c2_29, %c0_30, %c0_31], %35 {strides = array<i32>} : memref<4x3x512xf32, #tpu.memory_space<vmem>>, vector<1x3x512xf32>,
    %c3 = arith.constant 3 : index
    %c0_32 = arith.constant 0 : index
    %c0_33 = arith.constant 0 : index
    %36 = vector.load %arg1[%c3, %c0_32, %c0_33] : memref<4x3x32xbf16, #tpu.memory_space<vmem>>, vector<1x3x32xbf16>
    %37 = vector.shape_cast %36 : vector<1x3x32xbf16> to vector<3x32xbf16>
    %c3_34 = arith.constant 3 : index
    %c0_35 = arith.constant 0 : index
    %c0_36 = arith.constant 0 : index
    %38 = vector.load %arg0[%c3_34, %c0_35, %c0_36] : memref<4x32x512xbf16, #tpu.memory_space<vmem>>, vector<1x32x512xbf16>
    %39 = vector.shape_cast %38 : vector<1x32x512xbf16> to vector<32x512xbf16>
    %cst_37 = arith.constant dense<0.000000e+00> : vector<3x512xf32>
    %40 = tpu.matmul %37, %39, %cst_37 {dimension_numbers = #tpu.dot_dimension_numbers<[1], [0], [0], [1], [0, 0, 1, 1], [], []>} : vector<3x32xbf16>, vector<32x512xbf16>, vector<3x512xf32> -> vector<3x512xf32>
    %c0_38 = arith.constant 0 : index
    %c0_39 = arith.constant 0 : index
    %41 = vector.load %arg2[%c0_38, %c0_39] : memref<3x1xf32, #tpu.memory_space<vmem>>, vector<3x1xf32>
    %42 = vector.broadcast %41 : vector<3x1xf32> to vector<3x512xf32>
    %43 = arith.addf %40, %42 : vector<3x512xf32>
    %44 = math.tanh %43 : vector<3x512xf32>
    %c3_40 = arith.constant 3 : index
    %c0_41 = arith.constant 0 : index
    %c0_42 = arith.constant 0 : index
    %45 = vector.load %arg3[%c3_40, %c0_41, %c0_42] : memref<4x3x512xf32, #tpu.memory_space<vmem>>, vector<1x3x512xf32>
    %46 = vector.shape_cast %45 : vector<1x3x512xf32> to vector<3x512xf32>
    %47 = vector.shape_cast %44 : vector<3x512xf32> to vector<1x3x512xf32>
    tpu.vector_store %arg3[%c3_40, %c0_41, %c0_42], %47 {strides = array<i32>} : memref<4x3x512xf32, #tpu.memory_space<vmem>>, vector<1x3x512xf32>,
    return
  }
}

</mosaic_0001>

<llo_original>
// kernel: data_generator_forward.5
$region0: #{data_generator_forward.5}
  #allocation0 [shape = 'u32[]', space=smem, size = 0x4, offset = 0x4, fixed_abs, tag = 'smem constant byte address 0x4 - core index']
  #allocation1 [shape = 'u32[72,128]{1,0:T(1,128)}', space=vmem, size = 0x9000, scoped, tag = 'internal scratch']
  %s0 = inlined_call_operand.vmem [shape: bf16[2,32], index: 0, kind: input, shape index: {}]
  %s1 = inlined_call_operand.vmem [shape: bf16[32,256], index: 1, kind: input, shape index: {}]
  %s2 = inlined_call_operand.hbm [shape: f32[1,256], index: 2, kind: input, shape index: {}]
  %s3 = inlined_call_operand.vmem [shape: f32[2,256], index: 3, kind: output, shape index: {}]
  %s4 = sld [smem:[#allocation0]]
  $region26: #{data_generator_forward.5} parent=0
    _
  %s6 = ssub.s32 1, %s4
  %s7 = scalar_select 0, %s6, %s4
  $region1: #{data_generator_forward.5} parent=0
    #allocation2 [shape = 'u8[1024]{0}', space=vmem, size = 0x400, scoped, tag = 'input window, operand 2, single buffered']
    #allocation3 [shape = 's32[1]{0}', space=sflag, size = 0x4, scoped, tag = 'scoped memory for data_generator_forward.5']
    %8 = vsyncpa [#allocation3], 0
    // Predicated region
    $region2: #{data_generator_forward.5} parent=1 // pred_check
      _
    $region3: #{data_generator_forward.5} parent=1 // pred_check_branch
      %10 = sbr.rel (0) target = $region5
    $region4: #{data_generator_forward.5} parent=1 // pred_region
      _
    $region5: #{data_generator_forward.5} parent=1 // pred_fallthru
      _
    // Predicated region
    $region6: #{data_generator_forward.5} parent=1 // pred_check
      _
    $region7: #{data_generator_forward.5} parent=1 // pred_check_branch
      %12 = sbr.rel (0) target = $region9
    $region8: #{data_generator_forward.5} parent=1 // pred_region
      _
    $region9: #{data_generator_forward.5} parent=1 // pred_fallthru
      _
    // Predicated region
    $region10: #{data_generator_forward.5} parent=1 // pred_check
      _
    $region11: #{data_generator_forward.5} parent=1 // pred_check_branch
      %14 = sbr.rel (0) target = $region13
    $region12: #{data_generator_forward.5} parent=1 // pred_region
      %16 = vsyncadd [#allocation3], 0
      %s18 = sshll.u32 %s2, 4
      %s19 = int_to_ptr.hbm [resolvable:$true] %s18
      %s20 = sshll.u32 [#allocation2], 4
      %s21 = int_to_ptr.vmem [resolvable:$true] %s20
      %23 = dma.hbm_to_vmem [thread:$0]  %s19, 32, %s21, [#allocation3]
    $region13: #{data_generator_forward.5} parent=1 // pred_fallthru
      _
    // Predicated region
    $region14: #{data_generator_forward.5} parent=1 // pred_check
      _
    $region15: #{data_generator_forward.5} parent=1 // pred_check_branch
      %25 = sbr.rel (0) target = $region17
    $region16: #{data_generator_forward.5} parent=1 // pred_region
      %27 = dma.done [#allocation3], 32
    $region17: #{data_generator_forward.5} parent=1 // pred_fallthru
      _
    %v29 = vld [vmem:[%s0] sm:$0x1]
    %v30 = vld [vmem:[%s1] sm:$0xff]
    %v31 = vld [vmem:[%s1 + $0x8] sm:$0xff]
    %v32 = vld [vmem:[%s1 + $0x10] sm:$0xff]
    %v33 = vld [vmem:[%s1 + $0x18] sm:$0xff]
    %v34 = vld [vmem:[#allocation2] sm:$0x3]
    %v36 = vperm.slane %v34, 0
    %v37 = vperm.slane %v34, 1
    %v44 = vunpack.c.l.b16 %v30
    %v45 = vunpack.c.h.b16 %v30
    %v46 = vunpack.c.l.b16 %v31
    %v47 = vunpack.c.h.b16 %v31
    %v48 = vunpack.c.l.b16 %v32
    %v49 = vunpack.c.h.b16 %v32
    %v50 = vunpack.c.l.b16 %v33
    %v51 = vunpack.c.h.b16 %v33
    %v52 = vpack.c.b16 %v46, %v44
    %v53 = vpack.c.b16 %v47, %v45
    %v54 = vpack.c.b16 %v50, %v48
    %v55 = vpack.c.b16 %v51, %v49
    %vm60 = vcmask 261120
    %v62 = vsel %vm60, %v29, 0
    %64 = vmatpush.bf16.msra.mxu0 0
    %65 = vmatpush.bf16.msra.mxu0 0
    %66 = vmatpush.bf16.msra.mxu0 0
    %67 = vmatpush.bf16.msra.mxu0 0
    %68 = vmatpush.bf16.msra.mxu0 0
    %69 = vmatpush.bf16.msra.mxu0 0
    %70 = vmatpush.bf16.msra.mxu0 %v54
    %71 = vmatpush.bf16.msra.mxu0 %v52
    %72 = vmatmul.bf16.gmra.mxu0 %v62
    %v73 = vpop.f32.mrf.mxu0
    %v74 = vadd.f32 %v36, %v73
    %v75 = vpop.f32.mrf.mxu0
    %76 = vdwg.mxu0
    %77 = vmatpush.bf16.msra.mxu0 0
    %78 = vmatpush.bf16.msra.mxu0 0
    %79 = vmatpush.bf16.msra.mxu0 0
    %80 = vmatpush.bf16.msra.mxu0 0
    %81 = vmatpush.bf16.msra.mxu0 0
    %82 = vmatpush.bf16.msra.mxu0 0
    %83 = vmatpush.bf16.msra.mxu0 %v55
    %84 = vmatpush.bf16.msra.mxu0 %v53
    %85 = vmatmul.bf16.gmra.mxu0 %v62
    %v86 = vpop.f32.mrf.mxu0
    %v87 = vadd.f32 %v37, %v86
    %v88 = vpop.f32.mrf.mxu0
    %89 = vdwg.mxu0
    %v92 = vrot.slane %v87, 6
    %vm93 = vcmask 1041408
    %v94 = vsel %vm93, %v74, %v92
    %96 = vst [vmem:[%s3] sm:$0xf] %v94
    // Predicated region
    $region18: #{data_generator_forward.5} parent=1 // pred_check
      _
    $region19: #{data_generator_forward.5} parent=1 // pred_check_branch
      %98 = sbr.rel (0) target = $region21
    $region20: #{data_generator_forward.5} parent=1 // pred_region
      _
    $region21: #{data_generator_forward.5} parent=1 // pred_fallthru
      _
    // Predicated region
    $region22: #{data_generator_forward.5} parent=1 // pred_check
      _
    $region23: #{data_generator_forward.5} parent=1 // pred_check_branch
      %100 = sbr.rel (0) target = $region25
    $region24: #{data_generator_forward.5} parent=1 // pred_region
      _
    $region25: #{data_generator_forward.5} parent=1 // pred_fallthru
      _
    %101 = vsyncpa [#allocation3], 1

// kernel: data_generator_forward.6
$region0: #{data_generator_forward.6}
  #allocation0 [shape = 'u32[]', space=smem, size = 0x4, offset = 0x4, fixed_abs, tag = 'smem constant byte address 0x4 - core index']
  #allocation1 [shape = 'u32[72,128]{1,0:T(1,128)}', space=vmem, size = 0x9000, scoped, tag = 'internal scratch']
  %s0 = inlined_call_operand.vmem [shape: bf16[4,256,8], index: 0, kind: input, shape index: {}]
  %s1 = inlined_call_operand.vmem [shape: bf16[4,32,256], index: 1, kind: input, shape index: {}]
  %s2 = inlined_call_operand.vmem [shape: f32[32,1], index: 2, kind: input, shape index: {}]
  %s3 = inlined_call_operand.vmem [shape: f32[32,1], index: 3, kind: input, shape index: {}]
  %s4 = inlined_call_operand.vmem [shape: f32[32,1], index: 4, kind: input, shape index: {}]
  %s5 = inlined_call_operand.vmem [shape: f32[4,32,8], index: 5, kind: output, shape index: {}]
  %s6 = sld [smem:[#allocation0]]
  $region30: #{data_generator_forward.6} parent=0
    _
  %s8 = ssub.s32 1, %s6
  %s9 = scalar_select 0, %s8, %s6
  // Predicated region
  $region2: #{data_generator_forward.6} parent=0 // pred_check
    _
  $region3: #{data_generator_forward.6} parent=0 // pred_check_branch
    %11 = sbr.rel (0) target = $region5
  $region4: #{data_generator_forward.6} parent=0 // pred_region
    _
  $region5: #{data_generator_forward.6} parent=0 // pred_fallthru
    _
  // Predicated region
  $region6: #{data_generator_forward.6} parent=0 // pred_check
    _
  $region7: #{data_generator_forward.6} parent=0 // pred_check_branch
    %13 = sbr.rel (0) target = $region9
  $region8: #{data_generator_forward.6} parent=0 // pred_region
    _
  $region9: #{data_generator_forward.6} parent=0 // pred_fallthru
    _
  // Predicated region
  $region10: #{data_generator_forward.6} parent=0 // pred_check
    _
  $region11: #{data_generator_forward.6} parent=0 // pred_check_branch
    %15 = sbr.rel (0) target = $region13
  $region12: #{data_generator_forward.6} parent=0 // pred_region
    _
  $region13: #{data_generator_forward.6} parent=0 // pred_fallthru
    _
  // Predicated region
  $region14: #{data_generator_forward.6} parent=0 // pred_check
    _
  $region15: #{data_generator_forward.6} parent=0 // pred_check_branch
    %17 = sbr.rel (0) target = $region17
  $region16: #{data_generator_forward.6} parent=0 // pred_region
    _
  $region17: #{data_generator_forward.6} parent=0 // pred_fallthru
    _
  // Predicated region
  $region18: #{data_generator_forward.6} parent=0 // pred_check
    _
  $region19: #{data_generator_forward.6} parent=0 // pred_check_branch
    %19 = sbr.rel (0) target = $region21
  $region20: #{data_generator_forward.6} parent=0 // pred_region
    _
  $region21: #{data_generator_forward.6} parent=0 // pred_fallthru
    _
  %v20 = vld [vmem:[%s1] sm:$0xff]
  %v21 = vld [vmem:[%s1 + $0x8] sm:$0xff]
  %v22 = vld [vmem:[%s1 + $0x10] sm:$0xff]
  %v23 = vld [vmem:[%s1 + $0x18] sm:$0xff]
  %v24 = vld [vmem:[%s0] sm:$0xf]
  %v25 = vld [vmem:[%s0 + $0x4] sm:$0xf]
  %v26 = vld [vmem:[%s0 + $0x8] sm:$0xf]
  %v27 = vld [vmem:[%s0 + $0xc] sm:$0xf]
  %v28 = vld [vmem:[%s0 + $0x10] sm:$0xf]
  %v29 = vld [vmem:[%s0 + $0x14] sm:$0xf]
  %v30 = vld [vmem:[%s0 + $0x18] sm:$0xf]
  %v31 = vld [vmem:[%s0 + $0x1c] sm:$0xf]
  %v32 = vld [vmem:[%s0 + $0x20] sm:$0xf]
  %v33 = vld [vmem:[%s0 + $0x24] sm:$0xf]
  %v34 = vld [vmem:[%s0 + $0x28] sm:$0xf]
  %v35 = vld [vmem:[%s0 + $0x2c] sm:$0xf]
  %v36 = vld [vmem:[%s0 + $0x30] sm:$0xf]
  %v37 = vld [vmem:[%s0 + $0x34] sm:$0xf]
  %v38 = vld [vmem:[%s0 + $0x38] sm:$0xf]
  %v39 = vld [vmem:[%s0 + $0x3c] sm:$0xf]
  %v40 = vld [vmem:[%s0 + $0x40] sm:$0xf]
  %v41 = vld [vmem:[%s0 + $0x44] sm:$0xf]
  %v42 = vld [vmem:[%s0 + $0x48] sm:$0xf]
  %v43 = vld [vmem:[%s0 + $0x4c] sm:$0xf]
  %v44 = vld [vmem:[%s0 + $0x50] sm:$0xf]
  %v45 = vld [vmem:[%s0 + $0x54] sm:$0xf]
  %v46 = vld [vmem:[%s0 + $0x58] sm:$0xf]
  %v47 = vld [vmem:[%s0 + $0x5c] sm:$0xf]
  %v48 = vld [vmem:[%s0 + $0x60] sm:$0xf]
  %v49 = vld [vmem:[%s0 + $0x64] sm:$0xf]
  %v50 = vld [vmem:[%s0 + $0x68] sm:$0xf]
  %v51 = vld [vmem:[%s0 + $0x6c] sm:$0xf]
  %v52 = vld [vmem:[%s0 + $0x70] sm:$0xf]
  %v53 = vld [vmem:[%s0 + $0x74] sm:$0xf]
  %v54 = vld [vmem:[%s0 + $0x78] sm:$0xf]
  %v55 = vld [vmem:[%s0 + $0x7c] sm:$0xf]
  %v56 = vld [vmem:[%s2] sm:$0xff]
  %v57 = vld [vmem:[%s2 + $0x8] sm:$0xff]
  %v58 = vld [vmem:[%s2 + $0x10] sm:$0xff]
  %v59 = vld [vmem:[%s2 + $0x18] sm:$0xff]
  %61 = vset.pattern.permute.xlu0 0
  %62 = vperm.xlu0 %61, %v56
  %v63 = vpop.permute.xlu0 %62
  %66 = vset.pattern.permute.xlu0 0
  %67 = vperm.xlu0 %66, %v57
  %v68 = vpop.permute.xlu0 %67
  %71 = vset.pattern.permute.xlu0 0
  %72 = vperm.xlu0 %71, %v58
  %v73 = vpop.permute.xlu0 %72
  %76 = vset.pattern.permute.xlu0 0
  %77 = vperm.xlu0 %76, %v59
  %v78 = vpop.permute.xlu0 %77
  %v84 = vunpack.c.l.b16 %v20
  %v85 = vunpack.c.h.b16 %v20
  %v86 = vunpack.c.l.b16 %v21
  %v87 = vunpack.c.h.b16 %v21
  %v88 = vunpack.c.l.b16 %v22
  %v89 = vunpack.c.h.b16 %v22
  %v90 = vunpack.c.l.b16 %v23
  %v91 = vunpack.c.h.b16 %v23
  %v92 = vpack.c.b16 %v86, %v84
  %v93 = vpack.c.b16 %v87, %v85
  %v94 = vpack.c.b16 %v90, %v88
  %v95 = vpack.c.b16 %v91, %v89
  %v132 = vunpack.c.l.b16 %v24
  %v133 = vunpack.c.l.b16 %v25
  %v134 = vunpack.c.l.b16 %v26
  %v135 = vunpack.c.l.b16 %v27
  %v136 = vunpack.c.l.b16 %v28
  %v137 = vunpack.c.l.b16 %v29
  %v138 = vunpack.c.l.b16 %v30
  %v139 = vunpack.c.l.b16 %v31
  %v140 = vunpack.c.l.b16 %v32
  %v141 = vunpack.c.l.b16 %v33
  %v142 = vunpack.c.l.b16 %v34
  %v143 = vunpack.c.l.b16 %v35
  %v144 = vunpack.c.l.b16 %v36
  %v145 = vunpack.c.l.b16 %v37
  %v146 = vunpack.c.l.b16 %v38
  %v147 = vunpack.c.l.b16 %v39
  %v148 = vunpack.c.l.b16 %v40
  %v149 = vunpack.c.l.b16 %v41
  %v150 = vunpack.c.l.b16 %v42
  %v151 = vunpack.c.l.b16 %v43
  %v152 = vunpack.c.l.b16 %v44
  %v153 = vunpack.c.l.b16 %v45
  %v154 = vunpack.c.l.b16 %v46
  %v155 = vunpack.c.l.b16 %v47
  %v156 = vunpack.c.l.b16 %v48
  %v157 = vunpack.c.l.b16 %v49
  %v158 = vunpack.c.l.b16 %v50
  %v159 = vunpack.c.l.b16 %v51
  %v160 = vunpack.c.l.b16 %v52
  %v161 = vunpack.c.l.b16 %v53
  %v162 = vunpack.c.l.b16 %v54
  %v163 = vunpack.c.l.b16 %v55
  %v164 = vpack.c.b16 %v133, %v132
  %v165 = vpack.c.b16 %v135, %v134
  %v166 = vpack.c.b16 %v137, %v136
  %v167 = vpack.c.b16 %v139, %v138
  %v168 = vpack.c.b16 %v141, %v140
  %v169 = vpack.c.b16 %v143, %v142
  %v170 = vpack.c.b16 %v145, %v144
  %v171 = vpack.c.b16 %v147, %v146
  %v172 = vpack.c.b16 %v149, %v148
  %v173 = vpack.c.b16 %v151, %v150
  %v174 = vpack.c.b16 %v153, %v152
  %v175 = vpack.c.b16 %v155, %v154
  %v176 = vpack.c.b16 %v157, %v156
  %v177 = vpack.c.b16 %v159, %v158
  %v178 = vpack.c.b16 %v161, %v160
  %v179 = vpack.c.b16 %v163, %v162
  %196 = vmatpush.bf16.msra.mxu0 %v171
  %197 = vmatpush.bf16.msra.mxu0 %v170
  %198 = vmatpush.bf16.msra.mxu0 %v169
  %199 = vmatpush.bf16.msra.mxu0 %v168
  %200 = vmatpush.bf16.msra.mxu0 %v167
  %201 = vmatpush.bf16.msra.mxu0 %v166
  %202 = vmatpush.bf16.msra.mxu0 %v165
  %203 = vmatpush.bf16.msra.mxu0 %v164
  %204 = vmatmul.bf16.gmra.mxu0 %v92
  %v205 = vpop.f32.mrf.mxu0
  %v206 = vadd.f32 %v63, %v205
  %v207 = vpop.f32.mrf.mxu0
  %v208 = vadd.f32 %v68, %v207
  %209 = vmatmul.bf16.gmra.mxu0 %v94
  %v210 = vpop.f32.mrf.mxu0
  %v211 = vadd.f32 %v73, %v210
  %v212 = vpop.f32.mrf.mxu0
  %v213 = vadd.f32 %v78, %v212
  %214 = vdwg.mxu0
  %215 = vmatpush.bf16.msra.mxu0 %v179
  %216 = vmatpush.bf16.msra.mxu0 %v178
  %217 = vmatpush.bf16.msra.mxu0 %v177
  %218 = vmatpush.bf16.msra.mxu0 %v176
  %219 = vmatpush.bf16.msra.mxu0 %v175
  %220 = vmatpush.bf16.msra.mxu0 %v174
  %221 = vmatpush.bf16.msra.mxu0 %v173
  %222 = vmatpush.bf16.msra.mxu0 %v172
  %223 = vmatmul.bf16.gmra.mxu0 %v93
  %v224 = vpop.f32.mrf.mxu0
  %v225 = vadd.f32 %v206, %v224
  %v226 = vpop.f32.mrf.mxu0
  %v227 = vadd.f32 %v208, %v226
  %228 = vmatmul.bf16.gmra.mxu0 %v95
  %v229 = vpop.f32.mrf.mxu0
  %v230 = vadd.f32 %v211, %v229
  %v231 = vpop.f32.mrf.mxu0
  %v232 = vadd.f32 %v213, %v231
  %233 = vdwg.mxu0
  %vm234 = vcmask 64512
  %v235 = vsel %vm234, %v225, 0.0
  %236 = vadd.xlane.f32.xlu0 %v235
  %v237 = vpop.xlane.xlu0 %236
  %v238 = vsel %vm234, %v227, 0.0
  %239 = vadd.xlane.f32.xlu0 %v238
  %v240 = vpop.xlane.xlu0 %239
  %v241 = vsel %vm234, %v230, 0.0
  %242 = vadd.xlane.f32.xlu0 %v241
  %v243 = vpop.xlane.xlu0 %242
  %v244 = vsel %vm234, %v232, 0.0
  %245 = vadd.xlane.f32.xlu0 %v244
  %v246 = vpop.xlane.xlu0 %245
  %v247 = vadd.f32 %v237, 0.0
  %v248 = vadd.f32 %v240, 0.0
  %v249 = vadd.f32 %v243, 0.0
  %v250 = vadd.f32 %v246, 0.0
  %s251 = scalar_lea.vmem %s1, 32
  %v252 = vld [vmem:[%s251] sm:$0xff]
  %v253 = vld [vmem:[%s251 + $0x8] sm:$0xff]
  %v254 = vld [vmem:[%s251 + $0x10] sm:$0xff]
  %v255 = vld [vmem:[%s251 + $0x18] sm:$0xff]
  %s256 = scalar_lea.vmem %s0, 128
  %v257 = vld [vmem:[%s256] sm:$0xf]
  %v258 = vld [vmem:[%s256 + $0x4] sm:$0xf]
  %v259 = vld [vmem:[%s256 + $0x8] sm:$0xf]
  %v260 = vld [vmem:[%s256 + $0xc] sm:$0xf]
  %v261 = vld [vmem:[%s256 + $0x10] sm:$0xf]
  %v262 = vld [vmem:[%s256 + $0x14] sm:$0xf]
  %v263 = vld [vmem:[%s256 + $0x18] sm:$0xf]
  %v264 = vld [vmem:[%s256 + $0x1c] sm:$0xf]
  %v265 = vld [vmem:[%s256 + $0x20] sm:$0xf]
  %v266 = vld [vmem:[%s256 + $0x24] sm:$0xf]
  %v267 = vld [vmem:[%s256 + $0x28] sm:$0xf]
  %v268 = vld [vmem:[%s256 + $0x2c] sm:$0xf]
  %v269 = vld [vmem:[%s256 + $0x30] sm:$0xf]
  %v270 = vld [vmem:[%s256 + $0x34] sm:$0xf]
  %v271 = vld [vmem:[%s256 + $0x38] sm:$0xf]
  %v272 = vld [vmem:[%s256 + $0x3c] sm:$0xf]
  %v273 = vld [vmem:[%s256 + $0x40] sm:$0xf]
  %v274 = vld [vmem:[%s256 + $0x44] sm:$0xf]
  %v275 = vld [vmem:[%s256 + $0x48] sm:$0xf]
  %v276 = vld [vmem:[%s256 + $0x4c] sm:$0xf]
  %v277 = vld [vmem:[%s256 + $0x50] sm:$0xf]
  %v278 = vld [vmem:[%s256 + $0x54] sm:$0xf]
  %v279 = vld [vmem:[%s256 + $0x58] sm:$0xf]
  %v280 = vld [vmem:[%s256 + $0x5c] sm:$0xf]
  %v281 = vld [vmem:[%s256 + $0x60] sm:$0xf]
  %v282 = vld [vmem:[%s256 + $0x64] sm:$0xf]
  %v283 = vld [vmem:[%s256 + $0x68] sm:$0xf]
  %v284 = vld [vmem:[%s256 + $0x6c] sm:$0xf]
  %v285 = vld [vmem:[%s256 + $0x70] sm:$0xf]
  %v286 = vld [vmem:[%s256 + $0x74] sm:$0xf]
  %v287 = vld [vmem:[%s256 + $0x78] sm:$0xf]
  %v288 = vld [vmem:[%s256 + $0x7c] sm:$0xf]
  %v293 = vunpack.c.l.b16 %v252
  %v294 = vunpack.c.h.b16 %v252
  %v295 = vunpack.c.l.b16 %v253
  %v296 = vunpack.c.h.b16 %v253
  %v297 = vunpack.c.l.b16 %v254
  %v298 = vunpack.c.h.b16 %v254
  %v299 = vunpack.c.l.b16 %v255
  %v300 = vunpack.c.h.b16 %v255
  %v301 = vpack.c.b16 %v295, %v293
  %v302 = vpack.c.b16 %v296, %v294
  %v303 = vpack.c.b16 %v299, %v297
  %v304 = vpack.c.b16 %v300, %v298
  %v341 = vunpack.c.l.b16 %v257
  %v342 = vunpack.c.l.b16 %v258
  %v343 = vunpack.c.l.b16 %v259
  %v344 = vunpack.c.l.b16 %v260
  %v345 = vunpack.c.l.b16 %v261
  %v346 = vunpack.c.l.b16 %v262
  %v347 = vunpack.c.l.b16 %v263
  %v348 = vunpack.c.l.b16 %v264
  %v349 = vunpack.c.l.b16 %v265
  %v350 = vunpack.c.l.b16 %v266
  %v351 = vunpack.c.l.b16 %v267
  %v352 = vunpack.c.l.b16 %v268
  %v353 = vunpack.c.l.b16 %v269
  %v354 = vunpack.c.l.b16 %v270
  %v355 = vunpack.c.l.b16 %v271
  %v356 = vunpack.c.l.b16 %v272
  %v357 = vunpack.c.l.b16 %v273
  %v358 = vunpack.c.l.b16 %v274
  %v359 = vunpack.c.l.b16 %v275
  %v360 = vunpack.c.l.b16 %v276
  %v361 = vunpack.c.l.b16 %v277
  %v362 = vunpack.c.l.b16 %v278
  %v363 = vunpack.c.l.b16 %v279
  %v364 = vunpack.c.l.b16 %v280
  %v365 = vunpack.c.l.b16 %v281
  %v366 = vunpack.c.l.b16 %v282
  %v367 = vunpack.c.l.b16 %v283
  %v368 = vunpack.c.l.b16 %v284
  %v369 = vunpack.c.l.b16 %v285
  %v370 = vunpack.c.l.b16 %v286
  %v371 = vunpack.c.l.b16 %v287
  %v372 = vunpack.c.l.b16 %v288
  %v373 = vpack.c.b16 %v342, %v341
  %v374 = vpack.c.b16 %v344, %v343
  %v375 = vpack.c.b16 %v346, %v345
  %v376 = vpack.c.b16 %v348, %v347
  %v377 = vpack.c.b16 %v350, %v349
  %v378 = vpack.c.b16 %v352, %v351
  %v379 = vpack.c.b16 %v354, %v353
  %v380 = vpack.c.b16 %v356, %v355
  %v381 = vpack.c.b16 %v358, %v357
  %v382 = vpack.c.b16 %v360, %v359
  %v383 = vpack.c.b16 %v362, %v361
  %v384 = vpack.c.b16 %v364, %v363
  %v385 = vpack.c.b16 %v366, %v365
  %v386 = vpack.c.b16 %v368, %v367
  %v387 = vpack.c.b16 %v370, %v369
  %v388 = vpack.c.b16 %v372, %v371
  %405 = vmatpush.bf16.msra.mxu0 %v380
  %406 = vmatpush.bf16.msra.mxu0 %v379
  %407 = vmatpush.bf16.msra.mxu0 %v378
  %408 = vmatpush.bf16.msra.mxu0 %v377
  %409 = vmatpush.bf16.msra.mxu0 %v376
  %410 = vmatpush.bf16.msra.mxu0 %v375
  %411 = vmatpush.bf16.msra.mxu0 %v374
  %412 = vmatpush.bf16.msra.mxu0 %v373
  %413 = vmatmul.bf16.gmra.mxu0 %v301
  %v414 = vpop.f32.mrf.mxu0
  %v415 = vadd.f32 %v63, %v414
  %v416 = vpop.f32.mrf.mxu0
  %v417 = vadd.f32 %v68, %v416
  %418 = vmatmul.bf16.gmra.mxu0 %v303
  %v419 = vpop.f32.mrf.mxu0
  %v420 = vadd.f32 %v73, %v419
  %v421 = vpop.f32.mrf.mxu0
  %v422 = vadd.f32 %v78, %v421
  %423 = vdwg.mxu0
  %424 = vmatpush.bf16.msra.mxu0 %v388
  %425 = vmatpush.bf16.msra.mxu0 %v387
  %426 = vmatpush.bf16.msra.mxu0 %v386
  %427 = vmatpush.bf16.msra.mxu0 %v385
  %428 = vmatpush.bf16.msra.mxu0 %v384
  %429 = vmatpush.bf16.msra.mxu0 %v383
  %430 = vmatpush.bf16.msra.mxu0 %v382
  %431 = vmatpush.bf16.msra.mxu0 %v381
  %432 = vmatmul.bf16.gmra.mxu0 %v302
  %v433 = vpop.f32.mrf.mxu0
  %v434 = vadd.f32 %v415, %v433
  %v435 = vpop.f32.mrf.mxu0
  %v436 = vadd.f32 %v417, %v435
  %437 = vmatmul.bf16.gmra.mxu0 %v304
  %v438 = vpop.f32.mrf.mxu0
  %v439 = vadd.f32 %v420, %v438
  %v440 = vpop.f32.mrf.mxu0
  %v441 = vadd.f32 %v422, %v440
  %442 = vdwg.mxu0
  %v443 = vsel %vm234, %v434, 0.0
  %444 = vadd.xlane.f32.xlu0 %v443
  %v445 = vpop.xlane.xlu0 %444
  %v446 = vsel %vm234, %v436, 0.0
  %447 = vadd.xlane.f32.xlu0 %v446
  %v448 = vpop.xlane.xlu0 %447
  %v449 = vsel %vm234, %v439, 0.0
  %450 = vadd.xlane.f32.xlu0 %v449
  %v451 = vpop.xlane.xlu0 %450
  %v452 = vsel %vm234, %v441, 0.0
  %453 = vadd.xlane.f32.xlu0 %v452
  %v454 = vpop.xlane.xlu0 %453
  %v455 = vadd.f32 %v247, %v445
  %v456 = vadd.f32 %v248, %v448
  %v457 = vadd.f32 %v249, %v451
  %v458 = vadd.f32 %v250, %v454
  %s459 = scalar_lea.vmem %s1, 64
  %v460 = vld [vmem:[%s459] sm:$0xff]
  %v461 = vld [vmem:[%s459 + $0x8] sm:$0xff]
  %v462 = vld [vmem:[%s459 + $0x10] sm:$0xff]
  %v463 = vld [vmem:[%s459 + $0x18] sm:$0xff]
  %s464 = scalar_lea.vmem %s0, 256
  %v465 = vld [vmem:[%s464] sm:$0xf]
  %v466 = vld [vmem:[%s464 + $0x4] sm:$0xf]
  %v467 = vld [vmem:[%s464 + $0x8] sm:$0xf]
  %v468 = vld [vmem:[%s464 + $0xc] sm:$0xf]
  %v469 = vld [vmem:[%s464 + $0x10] sm:$0xf]
  %v470 = vld [vmem:[%s464 + $0x14] sm:$0xf]
  %v471 = vld [vmem:[%s464 + $0x18] sm:$0xf]
  %v472 = vld [vmem:[%s464 + $0x1c] sm:$0xf]
  %v473 = vld [vmem:[%s464 + $0x20] sm:$0xf]
  %v474 = vld [vmem:[%s464 + $0x24] sm:$0xf]
  %v475 = vld [vmem:[%s464 + $0x28] sm:$0xf]
  %v476 = vld [vmem:[%s464 + $0x2c] sm:$0xf]
  %v477 = vld [vmem:[%s464 + $0x30] sm:$0xf]
  %v478 = vld [vmem:[%s464 + $0x34] sm:$0xf]
  %v479 = vld [vmem:[%s464 + $0x38] sm:$0xf]
  %v480 = vld [vmem:[%s464 + $0x3c] sm:$0xf]
  %v481 = vld [vmem:[%s464 + $0x40] sm:$0xf]
  %v482 = vld [vmem:[%s464 + $0x44] sm:$0xf]
  %v483 = vld [vmem:[%s464 + $0x48] sm:$0xf]
  %v484 = vld [vmem:[%s464 + $0x4c] sm:$0xf]
  %v485 = vld [vmem:[%s464 + $0x50] sm:$0xf]
  %v486 = vld [vmem:[%s464 + $0x54] sm:$0xf]
  %v487 = vld [vmem:[%s464 + $0x58] sm:$0xf]
  %v488 = vld [vmem:[%s464 + $0x5c] sm:$0xf]
  %v489 = vld [vmem:[%s464 + $0x60] sm:$0xf]
  %v490 = vld [vmem:[%s464 + $0x64] sm:$0xf]
  %v491 = vld [vmem:[%s464 + $0x68] sm:$0xf]
  %v492 = vld [vmem:[%s464 + $0x6c] sm:$0xf]
  %v493 = vld [vmem:[%s464 + $0x70] sm:$0xf]
  %v494 = vld [vmem:[%s464 + $0x74] sm:$0xf]
  %v495 = vld [vmem:[%s464 + $0x78] sm:$0xf]
  %v496 = vld [vmem:[%s464 + $0x7c] sm:$0xf]
  %v501 = vunpack.c.l.b16 %v460
  %v502 = vunpack.c.h.b16 %v460
  %v503 = vunpack.c.l.b16 %v461
  %v504 = vunpack.c.h.b16 %v461
  %v505 = vunpack.c.l.b16 %v462
  %v506 = vunpack.c.h.b16 %v462
  %v507 = vunpack.c.l.b16 %v463
  %v508 = vunpack.c.h.b16 %v463
  %v509 = vpack.c.b16 %v503, %v501
  %v510 = vpack.c.b16 %v504, %v502
  %v511 = vpack.c.b16 %v507, %v505
  %v512 = vpack.c.b16 %v508, %v506
  %v549 = vunpack.c.l.b16 %v465
  %v550 = vunpack.c.l.b16 %v466
  %v551 = vunpack.c.l.b16 %v467
  %v552 = vunpack.c.l.b16 %v468
  %v553 = vunpack.c.l.b16 %v469
  %v554 = vunpack.c.l.b16 %v470
  %v555 = vunpack.c.l.b16 %v471
  %v556 = vunpack.c.l.b16 %v472
  %v557 = vunpack.c.l.b16 %v473
  %v558 = vunpack.c.l.b16 %v474
  %v559 = vunpack.c.l.b16 %v475
  %v560 = vunpack.c.l.b16 %v476
  %v561 = vunpack.c.l.b16 %v477
  %v562 = vunpack.c.l.b16 %v478
  %v563 = vunpack.c.l.b16 %v479
  %v564 = vunpack.c.l.b16 %v480
  %v565 = vunpack.c.l.b16 %v481
  %v566 = vunpack.c.l.b16 %v482
  %v567 = vunpack.c.l.b16 %v483
  %v568 = vunpack.c.l.b16 %v484
  %v569 = vunpack.c.l.b16 %v485
  %v570 = vunpack.c.l.b16 %v486
  %v571 = vunpack.c.l.b16 %v487
  %v572 = vunpack.c.l.b16 %v488
  %v573 = vunpack.c.l.b16 %v489
  %v574 = vunpack.c.l.b16 %v490
  %v575 = vunpack.c.l.b16 %v491
  %v576 = vunpack.c.l.b16 %v492
  %v577 = vunpack.c.l.b16 %v493
  %v578 = vunpack.c.l.b16 %v494
  %v579 = vunpack.c.l.b16 %v495
  %v580 = vunpack.c.l.b16 %v496
  %v581 = vpack.c.b16 %v550, %v549
  %v582 = vpack.c.b16 %v552, %v551
  %v583 = vpack.c.b16 %v554, %v553
  %v584 = vpack.c.b16 %v556, %v555
  %v585 = vpack.c.b16 %v558, %v557
  %v586 = vpack.c.b16 %v560, %v559
  %v587 = vpack.c.b16 %v562, %v561
  %v588 = vpack.c.b16 %v564, %v563
  %v589 = vpack.c.b16 %v566, %v565
  %v590 = vpack.c.b16 %v568, %v567
  %v591 = vpack.c.b16 %v570, %v569
  %v592 = vpack.c.b16 %v572, %v571
  %v593 = vpack.c.b16 %v574, %v573
  %v594 = vpack.c.b16 %v576, %v575
  %v595 = vpack.c.b16 %v578, %v577
  %v596 = vpack.c.b16 %v580, %v579
  %613 = vmatpush.bf16.msra.mxu0 %v588
  %614 = vmatpush.bf16.msra.mxu0 %v587
  %615 = vmatpush.bf16.msra.mxu0 %v586
  %616 = vmatpush.bf16.msra.mxu0 %v585
  %617 = vmatpush.bf16.msra.mxu0 %v584
  %618 = vmatpush.bf16.msra.mxu0 %v583
  %619 = vmatpush.bf16.msra.mxu0 %v582
  %620 = vmatpush.bf16.msra.mxu0 %v581
  %621 = vmatmul.bf16.gmra.mxu0 %v509
  %v622 = vpop.f32.mrf.mxu0
  %v623 = vadd.f32 %v63, %v622
  %v624 = vpop.f32.mrf.mxu0
  %v625 = vadd.f32 %v68, %v624
  %626 = vmatmul.bf16.gmra.mxu0 %v511
  %v627 = vpop.f32.mrf.mxu0
  %v628 = vadd.f32 %v73, %v627
  %v629 = vpop.f32.mrf.mxu0
  %v630 = vadd.f32 %v78, %v629
  %631 = vdwg.mxu0
  %632 = vmatpush.bf16.msra.mxu0 %v596
  %633 = vmatpush.bf16.msra.mxu0 %v595
  %634 = vmatpush.bf16.msra.mxu0 %v594
  %635 = vmatpush.bf16.msra.mxu0 %v593
  %636 = vmatpush.bf16.msra.mxu0 %v592
  %637 = vmatpush.bf16.msra.mxu0 %v591
  %638 = vmatpush.bf16.msra.mxu0 %v590
  %639 = vmatpush.bf16.msra.mxu0 %v589
  %640 = vmatmul.bf16.gmra.mxu0 %v510
  %v641 = vpop.f32.mrf.mxu0
  %v642 = vadd.f32 %v623, %v641
  %v643 = vpop.f32.mrf.mxu0
  %v644 = vadd.f32 %v625, %v643
  %645 = vmatmul.bf16.gmra.mxu0 %v512
  %v646 = vpop.f32.mrf.mxu0
  %v647 = vadd.f32 %v628, %v646
  %v648 = vpop.f32.mrf.mxu0
  %v649 = vadd.f32 %v630, %v648
  %650 = vdwg.mxu0
  %v651 = vsel %vm234, %v642, 0.0
  %652 = vadd.xlane.f32.xlu0 %v651
  %v653 = vpop.xlane.xlu0 %652
  %v654 = vsel %vm234, %v644, 0.0
  %655 = vadd.xlane.f32.xlu0 %v654
  %v656 = vpop.xlane.xlu0 %655
  %v657 = vsel %vm234, %v647, 0.0
  %658 = vadd.xlane.f32.xlu0 %v657
  %v659 = vpop.xlane.xlu0 %658
  %v660 = vsel %vm234, %v649, 0.0
  %661 = vadd.xlane.f32.xlu0 %v660
  %v662 = vpop.xlane.xlu0 %661
  %v663 = vadd.f32 %v455, %v653
  %v664 = vadd.f32 %v456, %v656
  %v665 = vadd.f32 %v457, %v659
  %v666 = vadd.f32 %v458, %v662
  %s667 = scalar_lea.vmem %s1, 96
  %v668 = vld [vmem:[%s667] sm:$0xff]
  %v669 = vld [vmem:[%s667 + $0x8] sm:$0xff]
  %v670 = vld [vmem:[%s667 + $0x10] sm:$0xff]
  %v671 = vld [vmem:[%s667 + $0x18] sm:$0xff]
  %s672 = scalar_lea.vmem %s0, 384
  %v673 = vld [vmem:[%s672] sm:$0xf]
  %v674 = vld [vmem:[%s672 + $0x4] sm:$0xf]
  %v675 = vld [vmem:[%s672 + $0x8] sm:$0xf]
  %v676 = vld [vmem:[%s672 + $0xc] sm:$0xf]
  %v677 = vld [vmem:[%s672 + $0x10] sm:$0xf]
  %v678 = vld [vmem:[%s672 + $0x14] sm:$0xf]
  %v679 = vld [vmem:[%s672 + $0x18] sm:$0xf]
  %v680 = vld [vmem:[%s672 + $0x1c] sm:$0xf]
  %v681 = vld [vmem:[%s672 + $0x20] sm:$0xf]
  %v682 = vld [vmem:[%s672 + $0x24] sm:$0xf]
  %v683 = vld [vmem:[%s672 + $0x28] sm:$0xf]
  %v684 = vld [vmem:[%s672 + $0x2c] sm:$0xf]
  %v685 = vld [vmem:[%s672 + $0x30] sm:$0xf]
  %v686 = vld [vmem:[%s672 + $0x34] sm:$0xf]
  %v687 = vld [vmem:[%s672 + $0x38] sm:$0xf]
  %v688 = vld [vmem:[%s672 + $0x3c] sm:$0xf]
  %v689 = vld [vmem:[%s672 + $0x40] sm:$0xf]
  %v690 = vld [vmem:[%s672 + $0x44] sm:$0xf]
  %v691 = vld [vmem:[%s672 + $0x48] sm:$0xf]
  %v692 = vld [vmem:[%s672 + $0x4c] sm:$0xf]
  %v693 = vld [vmem:[%s672 + $0x50] sm:$0xf]
  %v694 = vld [vmem:[%s672 + $0x54] sm:$0xf]
  %v695 = vld [vmem:[%s672 + $0x58] sm:$0xf]
  %v696 = vld [vmem:[%s672 + $0x5c] sm:$0xf]
  %v697 = vld [vmem:[%s672 + $0x60] sm:$0xf]
  %v698 = vld [vmem:[%s672 + $0x64] sm:$0xf]
  %v699 = vld [vmem:[%s672 + $0x68] sm:$0xf]
  %v700 = vld [vmem:[%s672 + $0x6c] sm:$0xf]
  %v701 = vld [vmem:[%s672 + $0x70] sm:$0xf]
  %v702 = vld [vmem:[%s672 + $0x74] sm:$0xf]
  %v703 = vld [vmem:[%s672 + $0x78] sm:$0xf]
  %v704 = vld [vmem:[%s672 + $0x7c] sm:$0xf]
  %v709 = vunpack.c.l.b16 %v668
  %v710 = vunpack.c.h.b16 %v668
  %v711 = vunpack.c.l.b16 %v669
  %v712 = vunpack.c.h.b16 %v669
  %v713 = vunpack.c.l.b16 %v670
  %v714 = vunpack.c.h.b16 %v670
  %v715 = vunpack.c.l.b16 %v671
  %v716 = vunpack.c.h.b16 %v671
  %v717 = vpack.c.b16 %v711, %v709
  %v718 = vpack.c.b16 %v712, %v710
  %v719 = vpack.c.b16 %v715, %v713
  %v720 = vpack.c.b16 %v716, %v714
  %v757 = vunpack.c.l.b16 %v673
  %v758 = vunpack.c.l.b16 %v674
  %v759 = vunpack.c.l.b16 %v675
  %v760 = vunpack.c.l.b16 %v676
  %v761 = vunpack.c.l.b16 %v677
  %v762 = vunpack.c.l.b16 %v678
  %v763 = vunpack.c.l.b16 %v679
  %v764 = vunpack.c.l.b16 %v680
  %v765 = vunpack.c.l.b16 %v681
  %v766 = vunpack.c.l.b16 %v682
  %v767 = vunpack.c.l.b16 %v683
  %v768 = vunpack.c.l.b16 %v684
  %v769 = vunpack.c.l.b16 %v685
  %v770 = vunpack.c.l.b16 %v686
  %v771 = vunpack.c.l.b16 %v687
  %v772 = vunpack.c.l.b16 %v688
  %v773 = vunpack.c.l.b16 %v689
  %v774 = vunpack.c.l.b16 %v690
  %v775 = vunpack.c.l.b16 %v691
  %v776 = vunpack.c.l.b16 %v692
  %v777 = vunpack.c.l.b16 %v693
  %v778 = vunpack.c.l.b16 %v694
  %v779 = vunpack.c.l.b16 %v695
  %v780 = vunpack.c.l.b16 %v696
  %v781 = vunpack.c.l.b16 %v697
  %v782 = vunpack.c.l.b16 %v698
  %v783 = vunpack.c.l.b16 %v699
  %v784 = vunpack.c.l.b16 %v700
  %v785 = vunpack.c.l.b16 %v701
  %v786 = vunpack.c.l.b16 %v702
  %v787 = vunpack.c.l.b16 %v703
  %v788 = vunpack.c.l.b16 %v704
  %v789 = vpack.c.b16 %v758, %v757
  %v790 = vpack.c.b16 %v760, %v759
  %v791 = vpack.c.b16 %v762, %v761
  %v792 = vpack.c.b16 %v764, %v763
  %v793 = vpack.c.b16 %v766, %v765
  %v794 = vpack.c.b16 %v768, %v767
  %v795 = vpack.c.b16 %v770, %v769
  %v796 = vpack.c.b16 %v772, %v771
  %v797 = vpack.c.b16 %v774, %v773
  %v798 = vpack.c.b16 %v776, %v775
  %v799 = vpack.c.b16 %v778, %v777
  %v800 = vpack.c.b16 %v780, %v779
  %v801 = vpack.c.b16 %v782, %v781
  %v802 = vpack.c.b16 %v784, %v783
  %v803 = vpack.c.b16 %v786, %v785
  %v804 = vpack.c.b16 %v788, %v787
  %821 = vmatpush.bf16.msra.mxu0 %v796
  %822 = vmatpush.bf16.msra.mxu0 %v795
  %823 = vmatpush.bf16.msra.mxu0 %v794
  %824 = vmatpush.bf16.msra.mxu0 %v793
  %825 = vmatpush.bf16.msra.mxu0 %v792
  %826 = vmatpush.bf16.msra.mxu0 %v791
  %827 = vmatpush.bf16.msra.mxu0 %v790
  %828 = vmatpush.bf16.msra.mxu0 %v789
  %829 = vmatmul.bf16.gmra.mxu0 %v717
  %v830 = vpop.f32.mrf.mxu0
  %v831 = vadd.f32 %v63, %v830
  %v832 = vpop.f32.mrf.mxu0
  %v833 = vadd.f32 %v68, %v832
  %834 = vmatmul.bf16.gmra.mxu0 %v719
  %v835 = vpop.f32.mrf.mxu0
  %v836 = vadd.f32 %v73, %v835
  %v837 = vpop.f32.mrf.mxu0
  %v838 = vadd.f32 %v78, %v837
  %839 = vdwg.mxu0
  %840 = vmatpush.bf16.msra.mxu0 %v804
  %841 = vmatpush.bf16.msra.mxu0 %v803
  %842 = vmatpush.bf16.msra.mxu0 %v802
  %843 = vmatpush.bf16.msra.mxu0 %v801
  %844 = vmatpush.bf16.msra.mxu0 %v800
  %845 = vmatpush.bf16.msra.mxu0 %v799
  %846 = vmatpush.bf16.msra.mxu0 %v798
  %847 = vmatpush.bf16.msra.mxu0 %v797
  %848 = vmatmul.bf16.gmra.mxu0 %v718
  %v849 = vpop.f32.mrf.mxu0
  %v850 = vadd.f32 %v831, %v849
  %v851 = vpop.f32.mrf.mxu0
  %v852 = vadd.f32 %v833, %v851
  %853 = vmatmul.bf16.gmra.mxu0 %v720
  %v854 = vpop.f32.mrf.mxu0
  %v855 = vadd.f32 %v836, %v854
  %v856 = vpop.f32.mrf.mxu0
  %v857 = vadd.f32 %v838, %v856
  %858 = vdwg.mxu0
  %v859 = vsel %vm234, %v850, 0.0
  %860 = vadd.xlane.f32.xlu0 %v859
  %v861 = vpop.xlane.xlu0 %860
  %v862 = vsel %vm234, %v852, 0.0
  %863 = vadd.xlane.f32.xlu0 %v862
  %v864 = vpop.xlane.xlu0 %863
  %v865 = vsel %vm234, %v855, 0.0
  %866 = vadd.xlane.f32.xlu0 %v865
  %v867 = vpop.xlane.xlu0 %866
  %v868 = vsel %vm234, %v857, 0.0
  %869 = vadd.xlane.f32.xlu0 %v868
  %v870 = vpop.xlane.xlu0 %869
  %v871 = vadd.f32 %v663, %v861
  %v872 = vadd.f32 %v664, %v864
  %v873 = vadd.f32 %v665, %v867
  %v874 = vadd.f32 %v666, %v870
  %v875 = vrcp.pop 32.0
  %v876 = vmul.f32 32.0, %v875
  %v877 = vsub.f32 1.0, %v876
  %v878 = vmul.f32 %v875, %v877
  %v879 = vadd.f32 %v875, %v878
  %vm880 = vweird.f32 %v875
  %v881 = vsel %vm880, %v875, %v879
  %v882 = vmul.f32 %v871, %v881
  %v883 = vmul.f32 %v872, %v881
  %v884 = vmul.f32 %v873, %v881
  %v885 = vmul.f32 %v874, %v881
  %v886 = vsub.f32 %v225, %v882
  %v887 = vsub.f32 %v227, %v883
  %v888 = vsub.f32 %v230, %v884
  %v889 = vsub.f32 %v232, %v885
  %v890 = vmul.f32 %v886, %v886
  %v891 = vmul.f32 %v887, %v887
  %v892 = vmul.f32 %v888, %v888
  %v893 = vmul.f32 %v889, %v889
  %v894 = vsel %vm234, %v890, 0.0
  %895 = vadd.xlane.f32.xlu0 %v894
  %v896 = vpop.xlane.xlu0 %895
  %v897 = vsel %vm234, %v891, 0.0
  %898 = vadd.xlane.f32.xlu0 %v897
  %v899 = vpop.xlane.xlu0 %898
  %v900 = vsel %vm234, %v892, 0.0
  %901 = vadd.xlane.f32.xlu0 %v900
  %v902 = vpop.xlane.xlu0 %901
  %v903 = vsel %vm234, %v893, 0.0
  %904 = vadd.xlane.f32.xlu0 %v903
  %v905 = vpop.xlane.xlu0 %904
  %v906 = vadd.f32 %v896, 0.0
  %v907 = vadd.f32 %v899, 0.0
  %v908 = vadd.f32 %v902, 0.0
  %v909 = vadd.f32 %v905, 0.0
  %v910 = vsub.f32 %v434, %v882
  %v911 = vsub.f32 %v436, %v883
  %v912 = vsub.f32 %v439, %v884
  %v913 = vsub.f32 %v441, %v885
  %v914 = vmul.f32 %v910, %v910
  %v915 = vmul.f32 %v911, %v911
  %v916 = vmul.f32 %v912, %v912
  %v917 = vmul.f32 %v913, %v913
  %v918 = vsel %vm234, %v914, 0.0
  %919 = vadd.xlane.f32.xlu0 %v918
  %v920 = vpop.xlane.xlu0 %919
  %v921 = vsel %vm234, %v915, 0.0
  %922 = vadd.xlane.f32.xlu0 %v921
  %v923 = vpop.xlane.xlu0 %922
  %v924 = vsel %vm234, %v916, 0.0
  %925 = vadd.xlane.f32.xlu0 %v924
  %v926 = vpop.xlane.xlu0 %925
  %v927 = vsel %vm234, %v917, 0.0
  %928 = vadd.xlane.f32.xlu0 %v927
  %v929 = vpop.xlane.xlu0 %928
  %v930 = vadd.f32 %v906, %v920
  %v931 = vadd.f32 %v907, %v923
  %v932 = vadd.f32 %v908, %v926
  %v933 = vadd.f32 %v909, %v929
  %v934 = vsub.f32 %v642, %v882
  %v935 = vsub.f32 %v644, %v883
  %v936 = vsub.f32 %v647, %v884
  %v937 = vsub.f32 %v649, %v885
  %v938 = vmul.f32 %v934, %v934
  %v939 = vmul.f32 %v935, %v935
  %v940 = vmul.f32 %v936, %v936
  %v941 = vmul.f32 %v937, %v937
  %v942 = vsel %vm234, %v938, 0.0
  %943 = vadd.xlane.f32.xlu0 %v942
  %v944 = vpop.xlane.xlu0 %943
  %v945 = vsel %vm234, %v939, 0.0
  %946 = vadd.xlane.f32.xlu0 %v945
  %v947 = vpop.xlane.xlu0 %946
  %v948 = vsel %vm234, %v940, 0.0
  %949 = vadd.xlane.f32.xlu0 %v948
  %v950 = vpop.xlane.xlu0 %949
  %v951 = vsel %vm234, %v941, 0.0
  %952 = vadd.xlane.f32.xlu0 %v951
  %v953 = vpop.xlane.xlu0 %952
  %v954 = vadd.f32 %v930, %v944
  %v955 = vadd.f32 %v931, %v947
  %v956 = vadd.f32 %v932, %v950
  %v957 = vadd.f32 %v933, %v953
  %v958 = vsub.f32 %v850, %v882
  %v959 = vsub.f32 %v852, %v883
  %v960 = vsub.f32 %v855, %v884
  %v961 = vsub.f32 %v857, %v885
  %v962 = vmul.f32 %v958, %v958
  %v963 = vmul.f32 %v959, %v959
  %v964 = vmul.f32 %v960, %v960
  %v965 = vmul.f32 %v961, %v961
  %v966 = vsel %vm234, %v962, 0.0
  %967 = vadd.xlane.f32.xlu0 %v966
  %v968 = vpop.xlane.xlu0 %967
  %v969 = vsel %vm234, %v963, 0.0
  %970 = vadd.xlane.f32.xlu0 %v969
  %v971 = vpop.xlane.xlu0 %970
  %v972 = vsel %vm234, %v964, 0.0
  %973 = vadd.xlane.f32.xlu0 %v972
  %v974 = vpop.xlane.xlu0 %973
  %v975 = vsel %vm234, %v965, 0.0
  %976 = vadd.xlane.f32.xlu0 %v975
  %v977 = vpop.xlane.xlu0 %976
  %v978 = vadd.f32 %v954, %v968
  %v979 = vadd.f32 %v955, %v971
  %v980 = vadd.f32 %v956, %v974
  %v981 = vadd.f32 %v957, %v977
  %v982 = vmul.f32 %v978, %v881
  %v983 = vmul.f32 %v979, %v881
  %v984 = vmul.f32 %v980, %v881
  %v985 = vmul.f32 %v981, %v881
  %v986 = vadd.f32 %v982, 1e-05
  %v987 = vadd.f32 %v983, 1e-05
  %v988 = vadd.f32 %v984, 1e-05
  %v989 = vadd.f32 %v985, 1e-05
  %v990 = vrsqrt.pop %v986
  %v991 = vmul.f32 %v990, %v986
  %v992 = vmul.f32 %v991, %v990
  %v993 = vmul.f32 0.5, %v992
  %v994 = vsub.f32 1.5, %v993
  %v995 = vmul.f32 %v990, %v994
  %vm996 = vweird.f32 %v986
  %vm997 = vweird.f32 %v990
  %vm998 = vmor %vm996, %vm997
  %v999 = vsel %vm998, %v990, %v995
  %v1000 = vrsqrt.pop %v987
  %v1001 = vmul.f32 %v1000, %v987
  %v1002 = vmul.f32 %v1001, %v1000
  %v1003 = vmul.f32 0.5, %v1002
  %v1004 = vsub.f32 1.5, %v1003
  %v1005 = vmul.f32 %v1000, %v1004
  %vm1006 = vweird.f32 %v987
  %vm1007 = vweird.f32 %v1000
  %vm1008 = vmor %vm1006, %vm1007
  %v1009 = vsel %vm1008, %v1000, %v1005
  %v1010 = vrsqrt.pop %v988
  %v1011 = vmul.f32 %v1010, %v988
  %v1012 = vmul.f32 %v1011, %v1010
  %v1013 = vmul.f32 0.5, %v1012
  %v1014 = vsub.f32 1.5, %v1013
  %v1015 = vmul.f32 %v1010, %v1014
  %vm1016 = vweird.f32 %v988
  %vm1017 = vweird.f32 %v1010
  %vm1018 = vmor %vm1016, %vm1017
  %v1019 = vsel %vm1018, %v1010, %v1015
  %v1020 = vrsqrt.pop %v989
  %v1021 = vmul.f32 %v1020, %v989
  %v1022 = vmul.f32 %v1021, %v1020
  %v1023 = vmul.f32 0.5, %v1022
  %v1024 = vsub.f32 1.5, %v1023
  %v1025 = vmul.f32 %v1020, %v1024
  %vm1026 = vweird.f32 %v989
  %vm1027 = vweird.f32 %v1020
  %vm1028 = vmor %vm1026, %vm1027
  %v1029 = vsel %vm1028, %v1020, %v1025
  %v1030 = vld [vmem:[%s3] sm:$0xff]
  %v1031 = vld [vmem:[%s3 + $0x8] sm:$0xff]
  %v1032 = vld [vmem:[%s3 + $0x10] sm:$0xff]
  %v1033 = vld [vmem:[%s3 + $0x18] sm:$0xff]
  %v1034 = vmul.f32 %v1030, %v999
  %v1035 = vmul.f32 %v1031, %v1009
  %v1036 = vmul.f32 %v1032, %v1019
  %v1037 = vmul.f32 %v1033, %v1029
  %v1038 = vld [vmem:[%s4] sm:$0xff]
  %v1039 = vld [vmem:[%s4 + $0x8] sm:$0xff]
  %v1040 = vld [vmem:[%s4 + $0x10] sm:$0xff]
  %v1041 = vld [vmem:[%s4 + $0x18] sm:$0xff]
  %v1042 = vmul.f32 %v882, %v1034
  %v1043 = vmul.f32 %v883, %v1035
  %v1044 = vmul.f32 %v884, %v1036
  %v1045 = vmul.f32 %v885, %v1037
  %v1046 = vsub.f32 %v1038, %v1042
  %v1047 = vsub.f32 %v1039, %v1043
  %v1048 = vsub.f32 %v1040, %v1044
  %v1049 = vsub.f32 %v1041, %v1045
  %1051 = vset.pattern.permute.xlu0 0
  %1052 = vperm.xlu0 %1051, %v1034
  %v1053 = vpop.permute.xlu0 %1052
  %1056 = vset.pattern.permute.xlu0 0
  %1057 = vperm.xlu0 %1056, %v1035
  %v1058 = vpop.permute.xlu0 %1057
  %1061 = vset.pattern.permute.xlu0 0
  %1062 = vperm.xlu0 %1061, %v1036
  %v1063 = vpop.permute.xlu0 %1062
  %1066 = vset.pattern.permute.xlu0 0
  %1067 = vperm.xlu0 %1066, %v1037
  %v1068 = vpop.permute.xlu0 %1067
  %v1070 = vmul.f32 %v225, %v1053
  %v1071 = vmul.f32 %v227, %v1058
  %v1072 = vmul.f32 %v230, %v1063
  %v1073 = vmul.f32 %v232, %v1068
  %1075 = vset.pattern.permute.xlu0 0
  %1076 = vperm.xlu0 %1075, %v1046
  %v1077 = vpop.permute.xlu0 %1076
  %1080 = vset.pattern.permute.xlu0 0
  %1081 = vperm.xlu0 %1080, %v1047
  %v1082 = vpop.permute.xlu0 %1081
  %1085 = vset.pattern.permute.xlu0 0
  %1086 = vperm.xlu0 %1085, %v1048
  %v1087 = vpop.permute.xlu0 %1086
  %1090 = vset.pattern.permute.xlu0 0
  %1091 = vperm.xlu0 %1090, %v1049
  %v1092 = vpop.permute.xlu0 %1091
  %v1094 = vadd.f32 %v1070, %v1077
  %v1095 = vadd.f32 %v1071, %v1082
  %v1096 = vadd.f32 %v1072, %v1087
  %v1097 = vadd.f32 %v1073, %v1092
  %v1098 = vmax.f32 %v1094, 0.0
  %v1099 = vmax.f32 %v1095, 0.0
  %v1100 = vmax.f32 %v1096, 0.0
  %v1101 = vmax.f32 %v1097, 0.0
  %1102 = vst.msk [vmem:[%s5] sm:$0xff] %vm234, %v1098
  %1103 = vst.msk [vmem:[%s5 + $0x8] sm:$0xff] %vm234, %v1099
  %1104 = vst.msk [vmem:[%s5 + $0x10] sm:$0xff] %vm234, %v1100
  %1105 = vst.msk [vmem:[%s5 + $0x18] sm:$0xff] %vm234, %v1101
  %v1106 = vmul.f32 %v434, %v1053
  %v1107 = vmul.f32 %v436, %v1058
  %v1108 = vmul.f32 %v439, %v1063
  %v1109 = vmul.f32 %v441, %v1068
  %v1110 = vadd.f32 %v1106, %v1077
  %v1111 = vadd.f32 %v1107, %v1082
  %v1112 = vadd.f32 %v1108, %v1087
  %v1113 = vadd.f32 %v1109, %v1092
  %v1114 = vmax.f32 %v1110, 0.0
  %v1115 = vmax.f32 %v1111, 0.0
  %v1116 = vmax.f32 %v1112, 0.0
  %v1117 = vmax.f32 %v1113, 0.0
  %s1118 = scalar_lea.vmem %s5, 32
  %1119 = vst.msk [vmem:[%s1118] sm:$0xff] %vm234, %v1114
  %1120 = vst.msk [vmem:[%s1118 + $0x8] sm:$0xff] %vm234, %v1115
  %1121 = vst.msk [vmem:[%s1118 + $0x10] sm:$0xff] %vm234, %v1116
  %1122 = vst.msk [vmem:[%s1118 + $0x18] sm:$0xff] %vm234, %v1117
  %v1123 = vmul.f32 %v642, %v1053
  %v1124 = vmul.f32 %v644, %v1058
  %v1125 = vmul.f32 %v647, %v1063
  %v1126 = vmul.f32 %v649, %v1068
  %v1127 = vadd.f32 %v1123, %v1077
  %v1128 = vadd.f32 %v1124, %v1082
  %v1129 = vadd.f32 %v1125, %v1087
  %v1130 = vadd.f32 %v1126, %v1092
  %v1131 = vmax.f32 %v1127, 0.0
  %v1132 = vmax.f32 %v1128, 0.0
  %v1133 = vmax.f32 %v1129, 0.0
  %v1134 = vmax.f32 %v1130, 0.0
  %s1135 = scalar_lea.vmem %s5, 64
  %1136 = vst.msk [vmem:[%s1135] sm:$0xff] %vm234, %v1131
  %1137 = vst.msk [vmem:[%s1135 + $0x8] sm:$0xff] %vm234, %v1132
  %1138 = vst.msk [vmem:[%s1135 + $0x10] sm:$0xff] %vm234, %v1133
  %1139 = vst.msk [vmem:[%s1135 + $0x18] sm:$0xff] %vm234, %v1134
  %v1140 = vmul.f32 %v850, %v1053
  %v1141 = vmul.f32 %v852, %v1058
  %v1142 = vmul.f32 %v855, %v1063
  %v1143 = vmul.f32 %v857, %v1068
  %v1144 = vadd.f32 %v1140, %v1077
  %v1145 = vadd.f32 %v1141, %v1082
  %v1146 = vadd.f32 %v1142, %v1087
  %v1147 = vadd.f32 %v1143, %v1092
  %v1148 = vmax.f32 %v1144, 0.0
  %v1149 = vmax.f32 %v1145, 0.0
  %v1150 = vmax.f32 %v1146, 0.0
  %v1151 = vmax.f32 %v1147, 0.0
  %s1152 = scalar_lea.vmem %s5, 96
  %1153 = vst.msk [vmem:[%s1152] sm:$0xff] %vm234, %v1148
  %1154 = vst.msk [vmem:[%s1152 + $0x8] sm:$0xff] %vm234, %v1149
  %1155 = vst.msk [vmem:[%s1152 + $0x10] sm:$0xff] %vm234, %v1150
  %1156 = vst.msk [vmem:[%s1152 + $0x18] sm:$0xff] %vm234, %v1151
  // Predicated region
  $region22: #{data_generator_forward.6} parent=0 // pred_check
    _
  $region23: #{data_generator_forward.6} parent=0 // pred_check_branch
    %1158 = sbr.rel (0) target = $region25
  $region24: #{data_generator_forward.6} parent=0 // pred_region
    _
  $region25: #{data_generator_forward.6} parent=0 // pred_fallthru
    _
  // Predicated region
  $region26: #{data_generator_forward.6} parent=0 // pred_check
    _
  $region27: #{data_generator_forward.6} parent=0 // pred_check_branch
    %1160 = sbr.rel (0) target = $region29
  $region28: #{data_generator_forward.6} parent=0 // pred_region
    _
  $region29: #{data_generator_forward.6} parent=0 // pred_fallthru
    _

// kernel: data_generator_forward.7
$region0: #{data_generator_forward.7}
  #allocation0 [shape = 'u32[]', space=smem, size = 0x4, offset = 0x4, fixed_abs, tag = 'smem constant byte address 0x4 - core index']
  #allocation1 [shape = 'u32[72,128]{1,0:T(1,128)}', space=vmem, size = 0x9000, scoped, tag = 'internal scratch']
  %s0 = inlined_call_operand.vmem [shape: bf16[4,128,32], index: 0, kind: input, shape index: {}]
  %s1 = inlined_call_operand.vmem [shape: bf16[4,16,128], index: 1, kind: input, shape index: {}]
  %s2 = inlined_call_operand.vmem [shape: f32[16,1], index: 2, kind: input, shape index: {}]
  %s3 = inlined_call_operand.vmem [shape: f32[16,1], index: 3, kind: input, shape index: {}]
  %s4 = inlined_call_operand.vmem [shape: f32[16,1], index: 4, kind: input, shape index: {}]
  %s5 = inlined_call_operand.vmem [shape: f32[4,16,32], index: 5, kind: output, shape index: {}]
  %s6 = sld [smem:[#allocation0]]
  $region30: #{data_generator_forward.7} parent=0
    _
  %s8 = ssub.s32 1, %s6
  %s9 = scalar_select 0, %s8, %s6
  // Predicated region
  $region2: #{data_generator_forward.7} parent=0 // pred_check
    _
  $region3: #{data_generator_forward.7} parent=0 // pred_check_branch
    %11 = sbr.rel (0) target = $region5
  $region4: #{data_generator_forward.7} parent=0 // pred_region
    _
  $region5: #{data_generator_forward.7} parent=0 // pred_fallthru
    _
  // Predicated region
  $region6: #{data_generator_forward.7} parent=0 // pred_check
    _
  $region7: #{data_generator_forward.7} parent=0 // pred_check_branch
    %13 = sbr.rel (0) target = $region9
  $region8: #{data_generator_forward.7} parent=0 // pred_region
    _
  $region9: #{data_generator_forward.7} parent=0 // pred_fallthru
    _
  // Predicated region
  $region10: #{data_generator_forward.7} parent=0 // pred_check
    _
  $region11: #{data_generator_forward.7} parent=0 // pred_check_branch
    %15 = sbr.rel (0) target = $region13
  $region12: #{data_generator_forward.7} parent=0 // pred_region
    _
  $region13: #{data_generator_forward.7} parent=0 // pred_fallthru
    _
  // Predicated region
  $region14: #{data_generator_forward.7} parent=0 // pred_check
    _
  $region15: #{data_generator_forward.7} parent=0 // pred_check_branch
    %17 = sbr.rel (0) target = $region17
  $region16: #{data_generator_forward.7} parent=0 // pred_region
    _
  $region17: #{data_generator_forward.7} parent=0 // pred_fallthru
    _
  // Predicated region
  $region18: #{data_generator_forward.7} parent=0 // pred_check
    _
  $region19: #{data_generator_forward.7} parent=0 // pred_check_branch
    %19 = sbr.rel (0) target = $region21
  $region20: #{data_generator_forward.7} parent=0 // pred_region
    _
  $region21: #{data_generator_forward.7} parent=0 // pred_fallthru
    _
  %v20 = vld [vmem:[%s1] sm:$0xf]
  %v21 = vld [vmem:[%s1 + $0x4] sm:$0xf]
  %v22 = vld [vmem:[%s0] sm:$0xf]
  %v23 = vld [vmem:[%s0 + $0x4] sm:$0xf]
  %v24 = vld [vmem:[%s0 + $0x8] sm:$0xf]
  %v25 = vld [vmem:[%s0 + $0xc] sm:$0xf]
  %v26 = vld [vmem:[%s0 + $0x10] sm:$0xf]
  %v27 = vld [vmem:[%s0 + $0x14] sm:$0xf]
  %v28 = vld [vmem:[%s0 + $0x18] sm:$0xf]
  %v29 = vld [vmem:[%s0 + $0x1c] sm:$0xf]
  %v30 = vld [vmem:[%s0 + $0x20] sm:$0xf]
  %v31 = vld [vmem:[%s0 + $0x24] sm:$0xf]
  %v32 = vld [vmem:[%s0 + $0x28] sm:$0xf]
  %v33 = vld [vmem:[%s0 + $0x2c] sm:$0xf]
  %v34 = vld [vmem:[%s0 + $0x30] sm:$0xf]
  %v35 = vld [vmem:[%s0 + $0x34] sm:$0xf]
  %v36 = vld [vmem:[%s0 + $0x38] sm:$0xf]
  %v37 = vld [vmem:[%s0 + $0x3c] sm:$0xf]
  %v38 = vld [vmem:[%s2] sm:$0xff]
  %v39 = vld [vmem:[%s2 + $0x8] sm:$0xff]
  %41 = vset.pattern.permute.xlu0 0
  %42 = vperm.xlu0 %41, %v38
  %v43 = vpop.permute.xlu0 %42
  %46 = vset.pattern.permute.xlu0 0
  %47 = vperm.xlu0 %46, %v39
  %v48 = vpop.permute.xlu0 %47
  %v52 = vunpack.c.l.b16 %v20
  %v53 = vunpack.c.l.b16 %v21
  %v54 = vpack.c.b16 %v53, %v52
  %v72 = vunpack.c.l.b16 %v22
  %v73 = vunpack.c.l.b16 %v23
  %v74 = vunpack.c.l.b16 %v24
  %v75 = vunpack.c.l.b16 %v25
  %v76 = vunpack.c.l.b16 %v26
  %v77 = vunpack.c.l.b16 %v27
  %v78 = vunpack.c.l.b16 %v28
  %v79 = vunpack.c.l.b16 %v29
  %v80 = vunpack.c.l.b16 %v30
  %v81 = vunpack.c.l.b16 %v31
  %v82 = vunpack.c.l.b16 %v32
  %v83 = vunpack.c.l.b16 %v33
  %v84 = vunpack.c.l.b16 %v34
  %v85 = vunpack.c.l.b16 %v35
  %v86 = vunpack.c.l.b16 %v36
  %v87 = vunpack.c.l.b16 %v37
  %v88 = vpack.c.b16 %v73, %v72
  %v89 = vpack.c.b16 %v75, %v74
  %v90 = vpack.c.b16 %v77, %v76
  %v91 = vpack.c.b16 %v79, %v78
  %v92 = vpack.c.b16 %v81, %v80
  %v93 = vpack.c.b16 %v83, %v82
  %v94 = vpack.c.b16 %v85, %v84
  %v95 = vpack.c.b16 %v87, %v86
  %104 = vmatpush.bf16.msra.mxu0 %v95
  %105 = vmatpush.bf16.msra.mxu0 %v94
  %106 = vmatpush.bf16.msra.mxu0 %v93
  %107 = vmatpush.bf16.msra.mxu0 %v92
  %108 = vmatpush.bf16.msra.mxu0 %v91
  %109 = vmatpush.bf16.msra.mxu0 %v90
  %110 = vmatpush.bf16.msra.mxu0 %v89
  %111 = vmatpush.bf16.msra.mxu0 %v88
  %112 = vmatmul.bf16.gmra.mxu0 %v54
  %v113 = vpop.f32.mrf.mxu0
  %v114 = vadd.f32 %v43, %v113
  %v115 = vpop.f32.mrf.mxu0
  %v116 = vadd.f32 %v48, %v115
  %117 = vdwg.mxu0
  %vm118 = vcmask 261120
  %v119 = vsel %vm118, %v114, 0.0
  %120 = vadd.xlane.f32.xlu0 %v119
  %v121 = vpop.xlane.xlu0 %120
  %v122 = vsel %vm118, %v116, 0.0
  %123 = vadd.xlane.f32.xlu0 %v122
  %v124 = vpop.xlane.xlu0 %123
  %v125 = vadd.f32 %v121, 0.0
  %v126 = vadd.f32 %v124, 0.0
  %s127 = scalar_lea.vmem %s1, 8
  %v128 = vld [vmem:[%s127] sm:$0xf]
  %v129 = vld [vmem:[%s127 + $0x4] sm:$0xf]
  %s130 = scalar_lea.vmem %s0, 64
  %v131 = vld [vmem:[%s130] sm:$0xf]
  %v132 = vld [vmem:[%s130 + $0x4] sm:$0xf]
  %v133 = vld [vmem:[%s130 + $0x8] sm:$0xf]
  %v134 = vld [vmem:[%s130 + $0xc] sm:$0xf]
  %v135 = vld [vmem:[%s130 + $0x10] sm:$0xf]
  %v136 = vld [vmem:[%s130 + $0x14] sm:$0xf]
  %v137 = vld [vmem:[%s130 + $0x18] sm:$0xf]
  %v138 = vld [vmem:[%s130 + $0x1c] sm:$0xf]
  %v139 = vld [vmem:[%s130 + $0x20] sm:$0xf]
  %v140 = vld [vmem:[%s130 + $0x24] sm:$0xf]
  %v141 = vld [vmem:[%s130 + $0x28] sm:$0xf]
  %v142 = vld [vmem:[%s130 + $0x2c] sm:$0xf]
  %v143 = vld [vmem:[%s130 + $0x30] sm:$0xf]
  %v144 = vld [vmem:[%s130 + $0x34] sm:$0xf]
  %v145 = vld [vmem:[%s130 + $0x38] sm:$0xf]
  %v146 = vld [vmem:[%s130 + $0x3c] sm:$0xf]
  %v149 = vunpack.c.l.b16 %v128
  %v150 = vunpack.c.l.b16 %v129
  %v151 = vpack.c.b16 %v150, %v149
  %v169 = vunpack.c.l.b16 %v131
  %v170 = vunpack.c.l.b16 %v132
  %v171 = vunpack.c.l.b16 %v133
  %v172 = vunpack.c.l.b16 %v134
  %v173 = vunpack.c.l.b16 %v135
  %v174 = vunpack.c.l.b16 %v136
  %v175 = vunpack.c.l.b16 %v137
  %v176 = vunpack.c.l.b16 %v138
  %v177 = vunpack.c.l.b16 %v139
  %v178 = vunpack.c.l.b16 %v140
  %v179 = vunpack.c.l.b16 %v141
  %v180 = vunpack.c.l.b16 %v142
  %v181 = vunpack.c.l.b16 %v143
  %v182 = vunpack.c.l.b16 %v144
  %v183 = vunpack.c.l.b16 %v145
  %v184 = vunpack.c.l.b16 %v146
  %v185 = vpack.c.b16 %v170, %v169
  %v186 = vpack.c.b16 %v172, %v171
  %v187 = vpack.c.b16 %v174, %v173
  %v188 = vpack.c.b16 %v176, %v175
  %v189 = vpack.c.b16 %v178, %v177
  %v190 = vpack.c.b16 %v180, %v179
  %v191 = vpack.c.b16 %v182, %v181
  %v192 = vpack.c.b16 %v184, %v183
  %201 = vmatpush.bf16.msra.mxu0 %v192
  %202 = vmatpush.bf16.msra.mxu0 %v191
  %203 = vmatpush.bf16.msra.mxu0 %v190
  %204 = vmatpush.bf16.msra.mxu0 %v189
  %205 = vmatpush.bf16.msra.mxu0 %v188
  %206 = vmatpush.bf16.msra.mxu0 %v187
  %207 = vmatpush.bf16.msra.mxu0 %v186
  %208 = vmatpush.bf16.msra.mxu0 %v185
  %209 = vmatmul.bf16.gmra.mxu0 %v151
  %v210 = vpop.f32.mrf.mxu0
  %v211 = vadd.f32 %v43, %v210
  %v212 = vpop.f32.mrf.mxu0
  %v213 = vadd.f32 %v48, %v212
  %214 = vdwg.mxu0
  %v215 = vsel %vm118, %v211, 0.0
  %216 = vadd.xlane.f32.xlu0 %v215
  %v217 = vpop.xlane.xlu0 %216
  %v218 = vsel %vm118, %v213, 0.0
  %219 = vadd.xlane.f32.xlu0 %v218
  %v220 = vpop.xlane.xlu0 %219
  %v221 = vadd.f32 %v125, %v217
  %v222 = vadd.f32 %v126, %v220
  %s223 = scalar_lea.vmem %s1, 16
  %v224 = vld [vmem:[%s223] sm:$0xf]
  %v225 = vld [vmem:[%s223 + $0x4] sm:$0xf]
  %s226 = scalar_lea.vmem %s0, 128
  %v227 = vld [vmem:[%s226] sm:$0xf]
  %v228 = vld [vmem:[%s226 + $0x4] sm:$0xf]
  %v229 = vld [vmem:[%s226 + $0x8] sm:$0xf]
  %v230 = vld [vmem:[%s226 + $0xc] sm:$0xf]
  %v231 = vld [vmem:[%s226 + $0x10] sm:$0xf]
  %v232 = vld [vmem:[%s226 + $0x14] sm:$0xf]
  %v233 = vld [vmem:[%s226 + $0x18] sm:$0xf]
  %v234 = vld [vmem:[%s226 + $0x1c] sm:$0xf]
  %v235 = vld [vmem:[%s226 + $0x20] sm:$0xf]
  %v236 = vld [vmem:[%s226 + $0x24] sm:$0xf]
  %v237 = vld [vmem:[%s226 + $0x28] sm:$0xf]
  %v238 = vld [vmem:[%s226 + $0x2c] sm:$0xf]
  %v239 = vld [vmem:[%s226 + $0x30] sm:$0xf]
  %v240 = vld [vmem:[%s226 + $0x34] sm:$0xf]
  %v241 = vld [vmem:[%s226 + $0x38] sm:$0xf]
  %v242 = vld [vmem:[%s226 + $0x3c] sm:$0xf]
  %v245 = vunpack.c.l.b16 %v224
  %v246 = vunpack.c.l.b16 %v225
  %v247 = vpack.c.b16 %v246, %v245
  %v265 = vunpack.c.l.b16 %v227
  %v266 = vunpack.c.l.b16 %v228
  %v267 = vunpack.c.l.b16 %v229
  %v268 = vunpack.c.l.b16 %v230
  %v269 = vunpack.c.l.b16 %v231
  %v270 = vunpack.c.l.b16 %v232
  %v271 = vunpack.c.l.b16 %v233
  %v272 = vunpack.c.l.b16 %v234
  %v273 = vunpack.c.l.b16 %v235
  %v274 = vunpack.c.l.b16 %v236
  %v275 = vunpack.c.l.b16 %v237
  %v276 = vunpack.c.l.b16 %v238
  %v277 = vunpack.c.l.b16 %v239
  %v278 = vunpack.c.l.b16 %v240
  %v279 = vunpack.c.l.b16 %v241
  %v280 = vunpack.c.l.b16 %v242
  %v281 = vpack.c.b16 %v266, %v265
  %v282 = vpack.c.b16 %v268, %v267
  %v283 = vpack.c.b16 %v270, %v269
  %v284 = vpack.c.b16 %v272, %v271
  %v285 = vpack.c.b16 %v274, %v273
  %v286 = vpack.c.b16 %v276, %v275
  %v287 = vpack.c.b16 %v278, %v277
  %v288 = vpack.c.b16 %v280, %v279
  %297 = vmatpush.bf16.msra.mxu0 %v288
  %298 = vmatpush.bf16.msra.mxu0 %v287
  %299 = vmatpush.bf16.msra.mxu0 %v286
  %300 = vmatpush.bf16.msra.mxu0 %v285
  %301 = vmatpush.bf16.msra.mxu0 %v284
  %302 = vmatpush.bf16.msra.mxu0 %v283
  %303 = vmatpush.bf16.msra.mxu0 %v282
  %304 = vmatpush.bf16.msra.mxu0 %v281
  %305 = vmatmul.bf16.gmra.mxu0 %v247
  %v306 = vpop.f32.mrf.mxu0
  %v307 = vadd.f32 %v43, %v306
  %v308 = vpop.f32.mrf.mxu0
  %v309 = vadd.f32 %v48, %v308
  %310 = vdwg.mxu0
  %v311 = vsel %vm118, %v307, 0.0
  %312 = vadd.xlane.f32.xlu0 %v311
  %v313 = vpop.xlane.xlu0 %312
  %v314 = vsel %vm118, %v309, 0.0
  %315 = vadd.xlane.f32.xlu0 %v314
  %v316 = vpop.xlane.xlu0 %315
  %v317 = vadd.f32 %v221, %v313
  %v318 = vadd.f32 %v222, %v316
  %s319 = scalar_lea.vmem %s1, 24
  %v320 = vld [vmem:[%s319] sm:$0xf]
  %v321 = vld [vmem:[%s319 + $0x4] sm:$0xf]
  %s322 = scalar_lea.vmem %s0, 192
  %v323 = vld [vmem:[%s322] sm:$0xf]
  %v324 = vld [vmem:[%s322 + $0x4] sm:$0xf]
  %v325 = vld [vmem:[%s322 + $0x8] sm:$0xf]
  %v326 = vld [vmem:[%s322 + $0xc] sm:$0xf]
  %v327 = vld [vmem:[%s322 + $0x10] sm:$0xf]
  %v328 = vld [vmem:[%s322 + $0x14] sm:$0xf]
  %v329 = vld [vmem:[%s322 + $0x18] sm:$0xf]
  %v330 = vld [vmem:[%s322 + $0x1c] sm:$0xf]
  %v331 = vld [vmem:[%s322 + $0x20] sm:$0xf]
  %v332 = vld [vmem:[%s322 + $0x24] sm:$0xf]
  %v333 = vld [vmem:[%s322 + $0x28] sm:$0xf]
  %v334 = vld [vmem:[%s322 + $0x2c] sm:$0xf]
  %v335 = vld [vmem:[%s322 + $0x30] sm:$0xf]
  %v336 = vld [vmem:[%s322 + $0x34] sm:$0xf]
  %v337 = vld [vmem:[%s322 + $0x38] sm:$0xf]
  %v338 = vld [vmem:[%s322 + $0x3c] sm:$0xf]
  %v341 = vunpack.c.l.b16 %v320
  %v342 = vunpack.c.l.b16 %v321
  %v343 = vpack.c.b16 %v342, %v341
  %v361 = vunpack.c.l.b16 %v323
  %v362 = vunpack.c.l.b16 %v324
  %v363 = vunpack.c.l.b16 %v325
  %v364 = vunpack.c.l.b16 %v326
  %v365 = vunpack.c.l.b16 %v327
  %v366 = vunpack.c.l.b16 %v328
  %v367 = vunpack.c.l.b16 %v329
  %v368 = vunpack.c.l.b16 %v330
  %v369 = vunpack.c.l.b16 %v331
  %v370 = vunpack.c.l.b16 %v332
  %v371 = vunpack.c.l.b16 %v333
  %v372 = vunpack.c.l.b16 %v334
  %v373 = vunpack.c.l.b16 %v335
  %v374 = vunpack.c.l.b16 %v336
  %v375 = vunpack.c.l.b16 %v337
  %v376 = vunpack.c.l.b16 %v338
  %v377 = vpack.c.b16 %v362, %v361
  %v378 = vpack.c.b16 %v364, %v363
  %v379 = vpack.c.b16 %v366, %v365
  %v380 = vpack.c.b16 %v368, %v367
  %v381 = vpack.c.b16 %v370, %v369
  %v382 = vpack.c.b16 %v372, %v371
  %v383 = vpack.c.b16 %v374, %v373
  %v384 = vpack.c.b16 %v376, %v375
  %393 = vmatpush.bf16.msra.mxu0 %v384
  %394 = vmatpush.bf16.msra.mxu0 %v383
  %395 = vmatpush.bf16.msra.mxu0 %v382
  %396 = vmatpush.bf16.msra.mxu0 %v381
  %397 = vmatpush.bf16.msra.mxu0 %v380
  %398 = vmatpush.bf16.msra.mxu0 %v379
  %399 = vmatpush.bf16.msra.mxu0 %v378
  %400 = vmatpush.bf16.msra.mxu0 %v377
  %401 = vmatmul.bf16.gmra.mxu0 %v343
  %v402 = vpop.f32.mrf.mxu0
  %v403 = vadd.f32 %v43, %v402
  %v404 = vpop.f32.mrf.mxu0
  %v405 = vadd.f32 %v48, %v404
  %406 = vdwg.mxu0
  %v407 = vsel %vm118, %v403, 0.0
  %408 = vadd.xlane.f32.xlu0 %v407
  %v409 = vpop.xlane.xlu0 %408
  %v410 = vsel %vm118, %v405, 0.0
  %411 = vadd.xlane.f32.xlu0 %v410
  %v412 = vpop.xlane.xlu0 %411
  %v413 = vadd.f32 %v317, %v409
  %v414 = vadd.f32 %v318, %v412
  %v415 = vrcp.pop 128.0
  %v416 = vmul.f32 128.0, %v415
  %v417 = vsub.f32 1.0, %v416
  %v418 = vmul.f32 %v415, %v417
  %v419 = vadd.f32 %v415, %v418
  %vm420 = vweird.f32 %v415
  %v421 = vsel %vm420, %v415, %v419
  %v422 = vmul.f32 %v413, %v421
  %v423 = vmul.f32 %v414, %v421
  %v424 = vsub.f32 %v114, %v422
  %v425 = vsub.f32 %v116, %v423
  %v426 = vmul.f32 %v424, %v424
  %v427 = vmul.f32 %v425, %v425
  %v428 = vsel %vm118, %v426, 0.0
  %429 = vadd.xlane.f32.xlu0 %v428
  %v430 = vpop.xlane.xlu0 %429
  %v431 = vsel %vm118, %v427, 0.0
  %432 = vadd.xlane.f32.xlu0 %v431
  %v433 = vpop.xlane.xlu0 %432
  %v434 = vadd.f32 %v430, 0.0
  %v435 = vadd.f32 %v433, 0.0
  %v436 = vsub.f32 %v211, %v422
  %v437 = vsub.f32 %v213, %v423
  %v438 = vmul.f32 %v436, %v436
  %v439 = vmul.f32 %v437, %v437
  %v440 = vsel %vm118, %v438, 0.0
  %441 = vadd.xlane.f32.xlu0 %v440
  %v442 = vpop.xlane.xlu0 %441
  %v443 = vsel %vm118, %v439, 0.0
  %444 = vadd.xlane.f32.xlu0 %v443
  %v445 = vpop.xlane.xlu0 %444
  %v446 = vadd.f32 %v434, %v442
  %v447 = vadd.f32 %v435, %v445
  %v448 = vsub.f32 %v307, %v422
  %v449 = vsub.f32 %v309, %v423
  %v450 = vmul.f32 %v448, %v448
  %v451 = vmul.f32 %v449, %v449
  %v452 = vsel %vm118, %v450, 0.0
  %453 = vadd.xlane.f32.xlu0 %v452
  %v454 = vpop.xlane.xlu0 %453
  %v455 = vsel %vm118, %v451, 0.0
  %456 = vadd.xlane.f32.xlu0 %v455
  %v457 = vpop.xlane.xlu0 %456
  %v458 = vadd.f32 %v446, %v454
  %v459 = vadd.f32 %v447, %v457
  %v460 = vsub.f32 %v403, %v422
  %v461 = vsub.f32 %v405, %v423
  %v462 = vmul.f32 %v460, %v460
  %v463 = vmul.f32 %v461, %v461
  %v464 = vsel %vm118, %v462, 0.0
  %465 = vadd.xlane.f32.xlu0 %v464
  %v466 = vpop.xlane.xlu0 %465
  %v467 = vsel %vm118, %v463, 0.0
  %468 = vadd.xlane.f32.xlu0 %v467
  %v469 = vpop.xlane.xlu0 %468
  %v470 = vadd.f32 %v458, %v466
  %v471 = vadd.f32 %v459, %v469
  %v472 = vmul.f32 %v470, %v421
  %v473 = vmul.f32 %v471, %v421
  %v474 = vadd.f32 %v472, 1e-05
  %v475 = vadd.f32 %v473, 1e-05
  %v476 = vrsqrt.pop %v474
  %v477 = vmul.f32 %v476, %v474
  %v478 = vmul.f32 %v477, %v476
  %v479 = vmul.f32 0.5, %v478
  %v480 = vsub.f32 1.5, %v479
  %v481 = vmul.f32 %v476, %v480
  %vm482 = vweird.f32 %v474
  %vm483 = vweird.f32 %v476
  %vm484 = vmor %vm482, %vm483
  %v485 = vsel %vm484, %v476, %v481
  %v486 = vrsqrt.pop %v475
  %v487 = vmul.f32 %v486, %v475
  %v488 = vmul.f32 %v487, %v486
  %v489 = vmul.f32 0.5, %v488
  %v490 = vsub.f32 1.5, %v489
  %v491 = vmul.f32 %v486, %v490
  %vm492 = vweird.f32 %v475
  %vm493 = vweird.f32 %v486
  %vm494 = vmor %vm492, %vm493
  %v495 = vsel %vm494, %v486, %v491
  %v496 = vld [vmem:[%s3] sm:$0xff]
  %v497 = vld [vmem:[%s3 + $0x8] sm:$0xff]
  %v498 = vmul.f32 %v496, %v485
  %v499 = vmul.f32 %v497, %v495
  %v500 = vld [vmem:[%s4] sm:$0xff]
  %v501 = vld [vmem:[%s4 + $0x8] sm:$0xff]
  %v502 = vmul.f32 %v422, %v498
  %v503 = vmul.f32 %v423, %v499
  %v504 = vsub.f32 %v500, %v502
  %v505 = vsub.f32 %v501, %v503
  %507 = vset.pattern.permute.xlu0 0
  %508 = vperm.xlu0 %507, %v498
  %v509 = vpop.permute.xlu0 %508
  %512 = vset.pattern.permute.xlu0 0
  %513 = vperm.xlu0 %512, %v499
  %v514 = vpop.permute.xlu0 %513
  %v516 = vmul.f32 %v114, %v509
  %v517 = vmul.f32 %v116, %v514
  %519 = vset.pattern.permute.xlu0 0
  %520 = vperm.xlu0 %519, %v504
  %v521 = vpop.permute.xlu0 %520
  %524 = vset.pattern.permute.xlu0 0
  %525 = vperm.xlu0 %524, %v505
  %v526 = vpop.permute.xlu0 %525
  %v528 = vadd.f32 %v516, %v521
  %v529 = vadd.f32 %v517, %v526
  %v530 = vmax.f32 %v528, 0.0
  %v531 = vmax.f32 %v529, 0.0
  %532 = vst.msk [vmem:[%s5] sm:$0xff] %vm118, %v530
  %533 = vst.msk [vmem:[%s5 + $0x8] sm:$0xff] %vm118, %v531
  %v534 = vmul.f32 %v211, %v509
  %v535 = vmul.f32 %v213, %v514
  %v536 = vadd.f32 %v534, %v521
  %v537 = vadd.f32 %v535, %v526
  %v538 = vmax.f32 %v536, 0.0
  %v539 = vmax.f32 %v537, 0.0
  %s540 = scalar_lea.vmem %s5, 16
  %541 = vst.msk [vmem:[%s540] sm:$0xff] %vm118, %v538
  %542 = vst.msk [vmem:[%s540 + $0x8] sm:$0xff] %vm118, %v539
  %v543 = vmul.f32 %v307, %v509
  %v544 = vmul.f32 %v309, %v514
  %v545 = vadd.f32 %v543, %v521
  %v546 = vadd.f32 %v544, %v526
  %v547 = vmax.f32 %v545, 0.0
  %v548 = vmax.f32 %v546, 0.0
  %s549 = scalar_lea.vmem %s5, 32
  %550 = vst.msk [vmem:[%s549] sm:$0xff] %vm118, %v547
  %551 = vst.msk [vmem:[%s549 + $0x8] sm:$0xff] %vm118, %v548
  %v552 = vmul.f32 %v403, %v509
  %v553 = vmul.f32 %v405, %v514
  %v554 = vadd.f32 %v552, %v521
  %v555 = vadd.f32 %v553, %v526
  %v556 = vmax.f32 %v554, 0.0
  %v557 = vmax.f32 %v555, 0.0
  %s558 = scalar_lea.vmem %s5, 48
  %559 = vst.msk [vmem:[%s558] sm:$0xff] %vm118, %v556
  %560 = vst.msk [vmem:[%s558 + $0x8] sm:$0xff] %vm118, %v557
  // Predicated region
  $region22: #{data_generator_forward.7} parent=0 // pred_check
    _
  $region23: #{data_generator_forward.7} parent=0 // pred_check_branch
    %562 = sbr.rel (0) target = $region25
  $region24: #{data_generator_forward.7} parent=0 // pred_region
    _
  $region25: #{data_generator_forward.7} parent=0 // pred_fallthru
    _
  // Predicated region
  $region26: #{data_generator_forward.7} parent=0 // pred_check
    _
  $region27: #{data_generator_forward.7} parent=0 // pred_check_branch
    %564 = sbr.rel (0) target = $region29
  $region28: #{data_generator_forward.7} parent=0 // pred_region
    _
  $region29: #{data_generator_forward.7} parent=0 // pred_fallthru
    _

// kernel: data_generator_forward.8
$region0: #{data_generator_forward.8}
  #allocation0 [shape = 'u32[]', space=smem, size = 0x4, offset = 0x4, fixed_abs, tag = 'smem constant byte address 0x4 - core index']
  #allocation1 [shape = 'u32[72,128]{1,0:T(1,128)}', space=vmem, size = 0x9000, scoped, tag = 'internal scratch']
  %s0 = inlined_call_operand.vmem [shape: bf16[4,64,128], index: 0, kind: input, shape index: {}]
  %s1 = inlined_call_operand.vmem [shape: bf16[4,8,64], index: 1, kind: input, shape index: {}]
  %s2 = inlined_call_operand.vmem [shape: f32[8,1], index: 2, kind: input, shape index: {}]
  %s3 = inlined_call_operand.vmem [shape: f32[8,1], index: 3, kind: input, shape index: {}]
  %s4 = inlined_call_operand.vmem [shape: f32[8,1], index: 4, kind: input, shape index: {}]
  %s5 = inlined_call_operand.vmem [shape: f32[4,8,128], index: 5, kind: output, shape index: {}]
  %s6 = sld [smem:[#allocation0]]
  $region30: #{data_generator_forward.8} parent=0
    _
  %s8 = ssub.s32 1, %s6
  %s9 = scalar_select 0, %s8, %s6
  // Predicated region
  $region2: #{data_generator_forward.8} parent=0 // pred_check
    _
  $region3: #{data_generator_forward.8} parent=0 // pred_check_branch
    %11 = sbr.rel (0) target = $region5
  $region4: #{data_generator_forward.8} parent=0 // pred_region
    _
  $region5: #{data_generator_forward.8} parent=0 // pred_fallthru
    _
  // Predicated region
  $region6: #{data_generator_forward.8} parent=0 // pred_check
    _
  $region7: #{data_generator_forward.8} parent=0 // pred_check_branch
    %13 = sbr.rel (0) target = $region9
  $region8: #{data_generator_forward.8} parent=0 // pred_region
    _
  $region9: #{data_generator_forward.8} parent=0 // pred_fallthru
    _
  // Predicated region
  $region10: #{data_generator_forward.8} parent=0 // pred_check
    _
  $region11: #{data_generator_forward.8} parent=0 // pred_check_branch
    %15 = sbr.rel (0) target = $region13
  $region12: #{data_generator_forward.8} parent=0 // pred_region
    _
  $region13: #{data_generator_forward.8} parent=0 // pred_fallthru
    _
  // Predicated region
  $region14: #{data_generator_forward.8} parent=0 // pred_check
    _
  $region15: #{data_generator_forward.8} parent=0 // pred_check_branch
    %17 = sbr.rel (0) target = $region17
  $region16: #{data_generator_forward.8} parent=0 // pred_region
    _
  $region17: #{data_generator_forward.8} parent=0 // pred_fallthru
    _
  // Predicated region
  $region18: #{data_generator_forward.8} parent=0 // pred_check
    _
  $region19: #{data_generator_forward.8} parent=0 // pred_check_branch
    %19 = sbr.rel (0) target = $region21
  $region20: #{data_generator_forward.8} parent=0 // pred_region
    _
  $region21: #{data_generator_forward.8} parent=0 // pred_fallthru
    _
  %v21 = vld [vmem:[%s1] sm:$0xf]
  %v22 = vld [vmem:[%s0] sm:$0xf]
  %v23 = vld [vmem:[%s0 + $0x4] sm:$0xf]
  %v24 = vld [vmem:[%s0 + $0x8] sm:$0xf]
  %v25 = vld [vmem:[%s0 + $0xc] sm:$0xf]
  %v26 = vld [vmem:[%s0 + $0x10] sm:$0xf]
  %v27 = vld [vmem:[%s0 + $0x14] sm:$0xf]
  %v28 = vld [vmem:[%s0 + $0x18] sm:$0xf]
  %v29 = vld [vmem:[%s0 + $0x1c] sm:$0xf]
  %v30 = vld [vmem:[%s2] sm:$0xff]
  %32 = vset.pattern.permute.xlu0 0
  %33 = vperm.xlu0 %32, %v30
  %v34 = vpop.permute.xlu0 %33
  %v44 = vunpack.c.l.b16 %v22
  %v45 = vunpack.c.l.b16 %v23
  %v46 = vunpack.c.l.b16 %v24
  %v47 = vunpack.c.l.b16 %v25
  %v48 = vunpack.c.l.b16 %v26
  %v49 = vunpack.c.l.b16 %v27
  %v50 = vunpack.c.l.b16 %v28
  %v51 = vunpack.c.l.b16 %v29
  %v52 = vpack.c.b16 %v45, %v44
  %v53 = vpack.c.b16 %v47, %v46
  %v54 = vpack.c.b16 %v49, %v48
  %v55 = vpack.c.b16 %v51, %v50
  %vm60 = vcmask 523264
  %v62 = vsel %vm60, %v21, 0
  %64 = vmatpush.bf16.msra.mxu0 0
  %65 = vmatpush.bf16.msra.mxu0 0
  %66 = vmatpush.bf16.msra.mxu0 0
  %67 = vmatpush.bf16.msra.mxu0 0
  %68 = vmatpush.bf16.msra.mxu0 %v55
  %69 = vmatpush.bf16.msra.mxu0 %v54
  %70 = vmatpush.bf16.msra.mxu0 %v53
  %71 = vmatpush.bf16.msra.mxu0 %v52
  %72 = vmatmul.bf16.gmra.mxu0 %v62
  %v73 = vpop.f32.mrf.mxu0
  %v74 = vadd.f32 %v34, %v73
  %v75 = vpop.f32.mrf.mxu0
  %76 = vdwg.mxu0
  %77 = vadd.xlane.f32.xlu0 %v74
  %v78 = vpop.xlane.xlu0 %77
  %v79 = vadd.f32 %v78, 0.0
  %s80 = scalar_lea.vmem %s1, 4
  %v81 = vld [vmem:[%s80] sm:$0xf]
  %s82 = scalar_lea.vmem %s0, 32
  %v83 = vld [vmem:[%s82] sm:$0xf]
  %v84 = vld [vmem:[%s82 + $0x4] sm:$0xf]
  %v85 = vld [vmem:[%s82 + $0x8] sm:$0xf]
  %v86 = vld [vmem:[%s82 + $0xc] sm:$0xf]
  %v87 = vld [vmem:[%s82 + $0x10] sm:$0xf]
  %v88 = vld [vmem:[%s82 + $0x14] sm:$0xf]
  %v89 = vld [vmem:[%s82 + $0x18] sm:$0xf]
  %v90 = vld [vmem:[%s82 + $0x1c] sm:$0xf]
  %v99 = vunpack.c.l.b16 %v83
  %v100 = vunpack.c.l.b16 %v84
  %v101 = vunpack.c.l.b16 %v85
  %v102 = vunpack.c.l.b16 %v86
  %v103 = vunpack.c.l.b16 %v87
  %v104 = vunpack.c.l.b16 %v88
  %v105 = vunpack.c.l.b16 %v89
  %v106 = vunpack.c.l.b16 %v90
  %v107 = vpack.c.b16 %v100, %v99
  %v108 = vpack.c.b16 %v102, %v101
  %v109 = vpack.c.b16 %v104, %v103
  %v110 = vpack.c.b16 %v106, %v105
  %v116 = vsel %vm60, %v81, 0
  %118 = vmatpush.bf16.msra.mxu0 0
  %119 = vmatpush.bf16.msra.mxu0 0
  %120 = vmatpush.bf16.msra.mxu0 0
  %121 = vmatpush.bf16.msra.mxu0 0
  %122 = vmatpush.bf16.msra.mxu0 %v110
  %123 = vmatpush.bf16.msra.mxu0 %v109
  %124 = vmatpush.bf16.msra.mxu0 %v108
  %125 = vmatpush.bf16.msra.mxu0 %v107
  %126 = vmatmul.bf16.gmra.mxu0 %v116
  %v127 = vpop.f32.mrf.mxu0
  %v128 = vadd.f32 %v34, %v127
  %v129 = vpop.f32.mrf.mxu0
  %130 = vdwg.mxu0
  %131 = vadd.xlane.f32.xlu0 %v128
  %v132 = vpop.xlane.xlu0 %131
  %v133 = vadd.f32 %v79, %v132
  %s134 = scalar_lea.vmem %s1, 8
  %v135 = vld [vmem:[%s134] sm:$0xf]
  %s136 = scalar_lea.vmem %s0, 64
  %v137 = vld [vmem:[%s136] sm:$0xf]
  %v138 = vld [vmem:[%s136 + $0x4] sm:$0xf]
  %v139 = vld [vmem:[%s136 + $0x8] sm:$0xf]
  %v140 = vld [vmem:[%s136 + $0xc] sm:$0xf]
  %v141 = vld [vmem:[%s136 + $0x10] sm:$0xf]
  %v142 = vld [vmem:[%s136 + $0x14] sm:$0xf]
  %v143 = vld [vmem:[%s136 + $0x18] sm:$0xf]
  %v144 = vld [vmem:[%s136 + $0x1c] sm:$0xf]
  %v153 = vunpack.c.l.b16 %v137
  %v154 = vunpack.c.l.b16 %v138
  %v155 = vunpack.c.l.b16 %v139
  %v156 = vunpack.c.l.b16 %v140
  %v157 = vunpack.c.l.b16 %v141
  %v158 = vunpack.c.l.b16 %v142
  %v159 = vunpack.c.l.b16 %v143
  %v160 = vunpack.c.l.b16 %v144
  %v161 = vpack.c.b16 %v154, %v153
  %v162 = vpack.c.b16 %v156, %v155
  %v163 = vpack.c.b16 %v158, %v157
  %v164 = vpack.c.b16 %v160, %v159
  %v170 = vsel %vm60, %v135, 0
  %172 = vmatpush.bf16.msra.mxu0 0
  %173 = vmatpush.bf16.msra.mxu0 0
  %174 = vmatpush.bf16.msra.mxu0 0
  %175 = vmatpush.bf16.msra.mxu0 0
  %176 = vmatpush.bf16.msra.mxu0 %v164
  %177 = vmatpush.bf16.msra.mxu0 %v163
  %178 = vmatpush.bf16.msra.mxu0 %v162
  %179 = vmatpush.bf16.msra.mxu0 %v161
  %180 = vmatmul.bf16.gmra.mxu0 %v170
  %v181 = vpop.f32.mrf.mxu0
  %v182 = vadd.f32 %v34, %v181
  %v183 = vpop.f32.mrf.mxu0
  %184 = vdwg.mxu0
  %185 = vadd.xlane.f32.xlu0 %v182
  %v186 = vpop.xlane.xlu0 %185
  %v187 = vadd.f32 %v133, %v186
  %s188 = scalar_lea.vmem %s1, 12
  %v189 = vld [vmem:[%s188] sm:$0xf]
  %s190 = scalar_lea.vmem %s0, 96
  %v191 = vld [vmem:[%s190] sm:$0xf]
  %v192 = vld [vmem:[%s190 + $0x4] sm:$0xf]
  %v193 = vld [vmem:[%s190 + $0x8] sm:$0xf]
  %v194 = vld [vmem:[%s190 + $0xc] sm:$0xf]
  %v195 = vld [vmem:[%s190 + $0x10] sm:$0xf]
  %v196 = vld [vmem:[%s190 + $0x14] sm:$0xf]
  %v197 = vld [vmem:[%s190 + $0x18] sm:$0xf]
  %v198 = vld [vmem:[%s190 + $0x1c] sm:$0xf]
  %v207 = vunpack.c.l.b16 %v191
  %v208 = vunpack.c.l.b16 %v192
  %v209 = vunpack.c.l.b16 %v193
  %v210 = vunpack.c.l.b16 %v194
  %v211 = vunpack.c.l.b16 %v195
  %v212 = vunpack.c.l.b16 %v196
  %v213 = vunpack.c.l.b16 %v197
  %v214 = vunpack.c.l.b16 %v198
  %v215 = vpack.c.b16 %v208, %v207
  %v216 = vpack.c.b16 %v210, %v209
  %v217 = vpack.c.b16 %v212, %v211
  %v218 = vpack.c.b16 %v214, %v213
  %v224 = vsel %vm60, %v189, 0
  %226 = vmatpush.bf16.msra.mxu0 0
  %227 = vmatpush.bf16.msra.mxu0 0
  %228 = vmatpush.bf16.msra.mxu0 0
  %229 = vmatpush.bf16.msra.mxu0 0
  %230 = vmatpush.bf16.msra.mxu0 %v218
  %231 = vmatpush.bf16.msra.mxu0 %v217
  %232 = vmatpush.bf16.msra.mxu0 %v216
  %233 = vmatpush.bf16.msra.mxu0 %v215
  %234 = vmatmul.bf16.gmra.mxu0 %v224
  %v235 = vpop.f32.mrf.mxu0
  %v236 = vadd.f32 %v34, %v235
  %v237 = vpop.f32.mrf.mxu0
  %238 = vdwg.mxu0
  %239 = vadd.xlane.f32.xlu0 %v236
  %v240 = vpop.xlane.xlu0 %239
  %v241 = vadd.f32 %v187, %v240
  %v242 = vrcp.pop 512.0
  %v243 = vmul.f32 512.0, %v242
  %v244 = vsub.f32 1.0, %v243
  %v245 = vmul.f32 %v242, %v244
  %v246 = vadd.f32 %v242, %v245
  %vm247 = vweird.f32 %v242
  %v248 = vsel %vm247, %v242, %v246
  %v249 = vmul.f32 %v241, %v248
  %v250 = vsub.f32 %v74, %v249
  %v251 = vmul.f32 %v250, %v250
  %252 = vadd.xlane.f32.xlu0 %v251
  %v253 = vpop.xlane.xlu0 %252
  %v254 = vadd.f32 %v253, 0.0
  %v255 = vsub.f32 %v128, %v249
  %v256 = vmul.f32 %v255, %v255
  %257 = vadd.xlane.f32.xlu0 %v256
  %v258 = vpop.xlane.xlu0 %257
  %v259 = vadd.f32 %v254, %v258
  %v260 = vsub.f32 %v182, %v249
  %v261 = vmul.f32 %v260, %v260
  %262 = vadd.xlane.f32.xlu0 %v261
  %v263 = vpop.xlane.xlu0 %262
  %v264 = vadd.f32 %v259, %v263
  %v265 = vsub.f32 %v236, %v249
  %v266 = vmul.f32 %v265, %v265
  %267 = vadd.xlane.f32.xlu0 %v266
  %v268 = vpop.xlane.xlu0 %267
  %v269 = vadd.f32 %v264, %v268
  %v270 = vmul.f32 %v269, %v248
  %v271 = vadd.f32 %v270, 1e-05
  %v272 = vrsqrt.pop %v271
  %v273 = vmul.f32 %v272, %v271
  %v274 = vmul.f32 %v273, %v272
  %v275 = vmul.f32 0.5, %v274
  %v276 = vsub.f32 1.5, %v275
  %v277 = vmul.f32 %v272, %v276
  %vm278 = vweird.f32 %v271
  %vm279 = vweird.f32 %v272
  %vm280 = vmor %vm278, %vm279
  %v281 = vsel %vm280, %v272, %v277
  %v282 = vld [vmem:[%s3] sm:$0xff]
  %v283 = vmul.f32 %v282, %v281
  %v284 = vld [vmem:[%s4] sm:$0xff]
  %v285 = vmul.f32 %v249, %v283
  %v286 = vsub.f32 %v284, %v285
  %288 = vset.pattern.permute.xlu0 0
  %289 = vperm.xlu0 %288, %v283
  %v290 = vpop.permute.xlu0 %289
  %v292 = vmul.f32 %v74, %v290
  %294 = vset.pattern.permute.xlu0 0
  %295 = vperm.xlu0 %294, %v286
  %v296 = vpop.permute.xlu0 %295
  %v298 = vadd.f32 %v292, %v296
  %v299 = vmax.f32 %v298, 0.0
  %300 = vst [vmem:[%s5] sm:$0xff] %v299
  %v301 = vmul.f32 %v128, %v290
  %v302 = vadd.f32 %v301, %v296
  %v303 = vmax.f32 %v302, 0.0
  %s304 = scalar_lea.vmem %s5, 8
  %305 = vst [vmem:[%s304] sm:$0xff] %v303
  %v306 = vmul.f32 %v182, %v290
  %v307 = vadd.f32 %v306, %v296
  %v308 = vmax.f32 %v307, 0.0
  %s309 = scalar_lea.vmem %s5, 16
  %310 = vst [vmem:[%s309] sm:$0xff] %v308
  %v311 = vmul.f32 %v236, %v290
  %v312 = vadd.f32 %v311, %v296
  %v313 = vmax.f32 %v312, 0.0
  %s314 = scalar_lea.vmem %s5, 24
  %315 = vst [vmem:[%s314] sm:$0xff] %v313
  // Predicated region
  $region22: #{data_generator_forward.8} parent=0 // pred_check
    _
  $region23: #{data_generator_forward.8} parent=0 // pred_check_branch
    %317 = sbr.rel (0) target = $region25
  $region24: #{data_generator_forward.8} parent=0 // pred_region
    _
  $region25: #{data_generator_forward.8} parent=0 // pred_fallthru
    _
  // Predicated region
  $region26: #{data_generator_forward.8} parent=0 // pred_check
    _
  $region27: #{data_generator_forward.8} parent=0 // pred_check_branch
    %319 = sbr.rel (0) target = $region29
  $region28: #{data_generator_forward.8} parent=0 // pred_region
    _
  $region29: #{data_generator_forward.8} parent=0 // pred_fallthru
    _

// kernel: data_generator_forward.9
$region0: #{data_generator_forward.9}
  #allocation0 [shape = 'u32[]', space=smem, size = 0x4, offset = 0x4, fixed_abs, tag = 'smem constant byte address 0x4 - core index']
  #allocation1 [shape = 'u32[72,128]{1,0:T(1,128)}', space=vmem, size = 0x9000, scoped, tag = 'internal scratch']
  %s0 = inlined_call_operand.vmem [shape: bf16[4,32,512], index: 0, kind: input, shape index: {}]
  %s1 = inlined_call_operand.vmem [shape: bf16[4,3,32], index: 1, kind: input, shape index: {}]
  %s2 = inlined_call_operand.vmem [shape: f32[3,1], index: 2, kind: input, shape index: {}]
  %s3 = inlined_call_operand.vmem [shape: f32[4,3,512], index: 3, kind: output, shape index: {}]
  %s4 = sld [smem:[#allocation0]]
  $region22: #{data_generator_forward.9} parent=0
    _
  %s6 = ssub.s32 1, %s4
  %s7 = scalar_select 0, %s6, %s4
  // Predicated region
  $region2: #{data_generator_forward.9} parent=0 // pred_check
    _
  $region3: #{data_generator_forward.9} parent=0 // pred_check_branch
    %9 = sbr.rel (0) target = $region5
  $region4: #{data_generator_forward.9} parent=0 // pred_region
    _
  $region5: #{data_generator_forward.9} parent=0 // pred_fallthru
    _
  // Predicated region
  $region6: #{data_generator_forward.9} parent=0 // pred_check
    _
  $region7: #{data_generator_forward.9} parent=0 // pred_check_branch
    %11 = sbr.rel (0) target = $region9
  $region8: #{data_generator_forward.9} parent=0 // pred_region
    _
  $region9: #{data_generator_forward.9} parent=0 // pred_fallthru
    _
  // Predicated region
  $region10: #{data_generator_forward.9} parent=0 // pred_check
    _
  $region11: #{data_generator_forward.9} parent=0 // pred_check_branch
    %13 = sbr.rel (0) target = $region13
  $region12: #{data_generator_forward.9} parent=0 // pred_region
    _
  $region13: #{data_generator_forward.9} parent=0 // pred_fallthru
    _
  %v15 = vld [vmem:[%s1] sm:$0x3]
  %v16 = vld [vmem:[%s0] sm:$0xff]
  %v17 = vld [vmem:[%s0 + $0x8] sm:$0xff]
  %v18 = vld [vmem:[%s0 + $0x10] sm:$0xff]
  %v19 = vld [vmem:[%s0 + $0x18] sm:$0xff]
  %v20 = vld [vmem:[%s0 + $0x20] sm:$0xff]
  %v21 = vld [vmem:[%s0 + $0x28] sm:$0xff]
  %v22 = vld [vmem:[%s0 + $0x30] sm:$0xff]
  %v23 = vld [vmem:[%s0 + $0x38] sm:$0xff]
  %v24 = vld [vmem:[%s2] sm:$0x7]
  %26 = vset.pattern.permute.xlu0 0
  %27 = vperm.xlu0 %26, %v24
  %v28 = vpop.permute.xlu0 %27
  %v38 = vunpack.c.l.b16 %v16
  %v39 = vunpack.c.h.b16 %v16
  %v40 = vunpack.c.l.b16 %v17
  %v41 = vunpack.c.h.b16 %v17
  %v42 = vunpack.c.l.b16 %v18
  %v43 = vunpack.c.h.b16 %v18
  %v44 = vunpack.c.l.b16 %v19
  %v45 = vunpack.c.h.b16 %v19
  %v46 = vunpack.c.l.b16 %v20
  %v47 = vunpack.c.h.b16 %v20
  %v48 = vunpack.c.l.b16 %v21
  %v49 = vunpack.c.h.b16 %v21
  %v50 = vunpack.c.l.b16 %v22
  %v51 = vunpack.c.h.b16 %v22
  %v52 = vunpack.c.l.b16 %v23
  %v53 = vunpack.c.h.b16 %v23
  %v54 = vpack.c.b16 %v42, %v38
  %v55 = vpack.c.b16 %v43, %v39
  %v56 = vpack.c.b16 %v44, %v40
  %v57 = vpack.c.b16 %v45, %v41
  %v58 = vpack.c.b16 %v50, %v46
  %v59 = vpack.c.b16 %v51, %v47
  %v60 = vpack.c.b16 %v52, %v48
  %v61 = vpack.c.b16 %v53, %v49
  %vm70 = vcmask 261120
  %v72 = vsel %vm70, %v15, 0
  %74 = vmatpush.bf16.msra.mxu0 0
  %75 = vmatpush.bf16.msra.mxu0 0
  %76 = vmatpush.bf16.msra.mxu0 0
  %77 = vmatpush.bf16.msra.mxu0 0
  %78 = vmatpush.bf16.msra.mxu0 0
  %79 = vmatpush.bf16.msra.mxu0 0
  %80 = vmatpush.bf16.msra.mxu0 %v58
  %81 = vmatpush.bf16.msra.mxu0 %v54
  %82 = vmatmul.bf16.gmra.mxu0 %v72
  %v83 = vpop.f32.mrf.mxu0
  %v84 = vadd.f32 %v28, %v83
  %v85 = vpop.f32.mrf.mxu0
  %86 = vdwg.mxu0
  %87 = vmatpush.bf16.msra.mxu0 0
  %88 = vmatpush.bf16.msra.mxu0 0
  %89 = vmatpush.bf16.msra.mxu0 0
  %90 = vmatpush.bf16.msra.mxu0 0
  %91 = vmatpush.bf16.msra.mxu0 0
  %92 = vmatpush.bf16.msra.mxu0 0
  %93 = vmatpush.bf16.msra.mxu0 %v59
  %94 = vmatpush.bf16.msra.mxu0 %v55
  %95 = vmatmul.bf16.gmra.mxu0 %v72
  %v96 = vpop.f32.mrf.mxu0
  %v97 = vadd.f32 %v28, %v96
  %v98 = vpop.f32.mrf.mxu0
  %99 = vdwg.mxu0
  %100 = vmatpush.bf16.msra.mxu0 0
  %101 = vmatpush.bf16.msra.mxu0 0
  %102 = vmatpush.bf16.msra.mxu0 0
  %103 = vmatpush.bf16.msra.mxu0 0
  %104 = vmatpush.bf16.msra.mxu0 0
  %105 = vmatpush.bf16.msra.mxu0 0
  %106 = vmatpush.bf16.msra.mxu0 %v60
  %107 = vmatpush.bf16.msra.mxu0 %v56
  %108 = vmatmul.bf16.gmra.mxu0 %v72
  %v109 = vpop.f32.mrf.mxu0
  %v110 = vadd.f32 %v28, %v109
  %v111 = vpop.f32.mrf.mxu0
  %112 = vdwg.mxu0
  %113 = vmatpush.bf16.msra.mxu0 0
  %114 = vmatpush.bf16.msra.mxu0 0
  %115 = vmatpush.bf16.msra.mxu0 0
  %116 = vmatpush.bf16.msra.mxu0 0
  %117 = vmatpush.bf16.msra.mxu0 0
  %118 = vmatpush.bf16.msra.mxu0 0
  %119 = vmatpush.bf16.msra.mxu0 %v61
  %120 = vmatpush.bf16.msra.mxu0 %v57
  %121 = vmatmul.bf16.gmra.mxu0 %v72
  %v122 = vpop.f32.mrf.mxu0
  %v123 = vadd.f32 %v28, %v122
  %v124 = vpop.f32.mrf.mxu0
  %125 = vdwg.mxu0
  %v126 = vtanh.pop %v84
  %v127 = vtanh.pop %v97
  %v128 = vtanh.pop %v110
  %v129 = vtanh.pop %v123
  %v134 = vrot.slane %v127, 4
  %v135 = vrot.slane %v129, 4
  %vm136 = vcmask 1043456
  %v137 = vsel %vm136, %v126, %v134
  %v138 = vsel %vm136, %v128, %v135
  %141 = vst [vmem:[%s3] sm:$0x77] %v137
  %142 = vst [vmem:[%s3 + $0x8] sm:$0x77] %v138
  %s143 = scalar_lea.vmem %s1, 2
  %v144 = vld [vmem:[%s143] sm:$0x3]
  %s145 = scalar_lea.vmem %s0, 64
  %v146 = vld [vmem:[%s145] sm:$0xff]
  %v147 = vld [vmem:[%s145 + $0x8] sm:$0xff]
  %v148 = vld [vmem:[%s145 + $0x10] sm:$0xff]
  %v149 = vld [vmem:[%s145 + $0x18] sm:$0xff]
  %v150 = vld [vmem:[%s145 + $0x20] sm:$0xff]
  %v151 = vld [vmem:[%s145 + $0x28] sm:$0xff]
  %v152 = vld [vmem:[%s145 + $0x30] sm:$0xff]
  %v153 = vld [vmem:[%s145 + $0x38] sm:$0xff]
  %v154 = vld [vmem:[%s2] sm:$0x7]
  %156 = vset.pattern.permute.xlu0 0
  %157 = vperm.xlu0 %156, %v154
  %v158 = vpop.permute.xlu0 %157
  %v168 = vunpack.c.l.b16 %v146
  %v169 = vunpack.c.h.b16 %v146
  %v170 = vunpack.c.l.b16 %v147
  %v171 = vunpack.c.h.b16 %v147
  %v172 = vunpack.c.l.b16 %v148
  %v173 = vunpack.c.h.b16 %v148
  %v174 = vunpack.c.l.b16 %v149
  %v175 = vunpack.c.h.b16 %v149
  %v176 = vunpack.c.l.b16 %v150
  %v177 = vunpack.c.h.b16 %v150
  %v178 = vunpack.c.l.b16 %v151
  %v179 = vunpack.c.h.b16 %v151
  %v180 = vunpack.c.l.b16 %v152
  %v181 = vunpack.c.h.b16 %v152
  %v182 = vunpack.c.l.b16 %v153
  %v183 = vunpack.c.h.b16 %v153
  %v184 = vpack.c.b16 %v172, %v168
  %v185 = vpack.c.b16 %v173, %v169
  %v186 = vpack.c.b16 %v174, %v170
  %v187 = vpack.c.b16 %v175, %v171
  %v188 = vpack.c.b16 %v180, %v176
  %v189 = vpack.c.b16 %v181, %v177
  %v190 = vpack.c.b16 %v182, %v178
  %v191 = vpack.c.b16 %v183, %v179
  %v201 = vsel %vm70, %v144, 0
  %203 = vmatpush.bf16.msra.mxu0 0
  %204 = vmatpush.bf16.msra.mxu0 0
  %205 = vmatpush.bf16.msra.mxu0 0
  %206 = vmatpush.bf16.msra.mxu0 0
  %207 = vmatpush.bf16.msra.mxu0 0
  %208 = vmatpush.bf16.msra.mxu0 0
  %209 = vmatpush.bf16.msra.mxu0 %v188
  %210 = vmatpush.bf16.msra.mxu0 %v184
  %211 = vmatmul.bf16.gmra.mxu0 %v201
  %v212 = vpop.f32.mrf.mxu0
  %v213 = vadd.f32 %v158, %v212
  %v214 = vpop.f32.mrf.mxu0
  %215 = vdwg.mxu0
  %216 = vmatpush.bf16.msra.mxu0 0
  %217 = vmatpush.bf16.msra.mxu0 0
  %218 = vmatpush.bf16.msra.mxu0 0
  %219 = vmatpush.bf16.msra.mxu0 0
  %220 = vmatpush.bf16.msra.mxu0 0
  %221 = vmatpush.bf16.msra.mxu0 0
  %222 = vmatpush.bf16.msra.mxu0 %v189
  %223 = vmatpush.bf16.msra.mxu0 %v185
  %224 = vmatmul.bf16.gmra.mxu0 %v201
  %v225 = vpop.f32.mrf.mxu0
  %v226 = vadd.f32 %v158, %v225
  %v227 = vpop.f32.mrf.mxu0
  %228 = vdwg.mxu0
  %229 = vmatpush.bf16.msra.mxu0 0
  %230 = vmatpush.bf16.msra.mxu0 0
  %231 = vmatpush.bf16.msra.mxu0 0
  %232 = vmatpush.bf16.msra.mxu0 0
  %233 = vmatpush.bf16.msra.mxu0 0
  %234 = vmatpush.bf16.msra.mxu0 0
  %235 = vmatpush.bf16.msra.mxu0 %v190
  %236 = vmatpush.bf16.msra.mxu0 %v186
  %237 = vmatmul.bf16.gmra.mxu0 %v201
  %v238 = vpop.f32.mrf.mxu0
  %v239 = vadd.f32 %v158, %v238
  %v240 = vpop.f32.mrf.mxu0
  %241 = vdwg.mxu0
  %242 = vmatpush.bf16.msra.mxu0 0
  %243 = vmatpush.bf16.msra.mxu0 0
  %244 = vmatpush.bf16.msra.mxu0 0
  %245 = vmatpush.bf16.msra.mxu0 0
  %246 = vmatpush.bf16.msra.mxu0 0
  %247 = vmatpush.bf16.msra.mxu0 0
  %248 = vmatpush.bf16.msra.mxu0 %v191
  %249 = vmatpush.bf16.msra.mxu0 %v187
  %250 = vmatmul.bf16.gmra.mxu0 %v201
  %v251 = vpop.f32.mrf.mxu0
  %v252 = vadd.f32 %v158, %v251
  %v253 = vpop.f32.mrf.mxu0
  %254 = vdwg.mxu0
  %v255 = vtanh.pop %v213
  %v256 = vtanh.pop %v226
  %v257 = vtanh.pop %v239
  %v258 = vtanh.pop %v252
  %v263 = vrot.slane %v256, 4
  %v264 = vrot.slane %v258, 4
  %v265 = vsel %vm136, %v255, %v263
  %v266 = vsel %vm136, %v257, %v264
  %s269 = scalar_lea.vmem %s3, 16
  %270 = vst [vmem:[%s269] sm:$0x77] %v265
  %271 = vst [vmem:[%s269 + $0x8] sm:$0x77] %v266
  %s272 = scalar_lea.vmem %s1, 4
  %v273 = vld [vmem:[%s272] sm:$0x3]
  %s274 = scalar_lea.vmem %s0, 128
  %v275 = vld [vmem:[%s274] sm:$0xff]
  %v276 = vld [vmem:[%s274 + $0x8] sm:$0xff]
  %v277 = vld [vmem:[%s274 + $0x10] sm:$0xff]
  %v278 = vld [vmem:[%s274 + $0x18] sm:$0xff]
  %v279 = vld [vmem:[%s274 + $0x20] sm:$0xff]
  %v280 = vld [vmem:[%s274 + $0x28] sm:$0xff]
  %v281 = vld [vmem:[%s274 + $0x30] sm:$0xff]
  %v282 = vld [vmem:[%s274 + $0x38] sm:$0xff]
  %v283 = vld [vmem:[%s2] sm:$0x7]
  %285 = vset.pattern.permute.xlu0 0
  %286 = vperm.xlu0 %285, %v283
  %v287 = vpop.permute.xlu0 %286
  %v297 = vunpack.c.l.b16 %v275
  %v298 = vunpack.c.h.b16 %v275
  %v299 = vunpack.c.l.b16 %v276
  %v300 = vunpack.c.h.b16 %v276
  %v301 = vunpack.c.l.b16 %v277
  %v302 = vunpack.c.h.b16 %v277
  %v303 = vunpack.c.l.b16 %v278
  %v304 = vunpack.c.h.b16 %v278
  %v305 = vunpack.c.l.b16 %v279
  %v306 = vunpack.c.h.b16 %v279
  %v307 = vunpack.c.l.b16 %v280
  %v308 = vunpack.c.h.b16 %v280
  %v309 = vunpack.c.l.b16 %v281
  %v310 = vunpack.c.h.b16 %v281
  %v311 = vunpack.c.l.b16 %v282
  %v312 = vunpack.c.h.b16 %v282
  %v313 = vpack.c.b16 %v301, %v297
  %v314 = vpack.c.b16 %v302, %v298
  %v315 = vpack.c.b16 %v303, %v299
  %v316 = vpack.c.b16 %v304, %v300
  %v317 = vpack.c.b16 %v309, %v305
  %v318 = vpack.c.b16 %v310, %v306
  %v319 = vpack.c.b16 %v311, %v307
  %v320 = vpack.c.b16 %v312, %v308
  %v330 = vsel %vm70, %v273, 0
  %332 = vmatpush.bf16.msra.mxu0 0
  %333 = vmatpush.bf16.msra.mxu0 0
  %334 = vmatpush.bf16.msra.mxu0 0
  %335 = vmatpush.bf16.msra.mxu0 0
  %336 = vmatpush.bf16.msra.mxu0 0
  %337 = vmatpush.bf16.msra.mxu0 0
  %338 = vmatpush.bf16.msra.mxu0 %v317
  %339 = vmatpush.bf16.msra.mxu0 %v313
  %340 = vmatmul.bf16.gmra.mxu0 %v330
  %v341 = vpop.f32.mrf.mxu0
  %v342 = vadd.f32 %v287, %v341
  %v343 = vpop.f32.mrf.mxu0
  %344 = vdwg.mxu0
  %345 = vmatpush.bf16.msra.mxu0 0
  %346 = vmatpush.bf16.msra.mxu0 0
  %347 = vmatpush.bf16.msra.mxu0 0
  %348 = vmatpush.bf16.msra.mxu0 0
  %349 = vmatpush.bf16.msra.mxu0 0
  %350 = vmatpush.bf16.msra.mxu0 0
  %351 = vmatpush.bf16.msra.mxu0 %v318
  %352 = vmatpush.bf16.msra.mxu0 %v314
  %353 = vmatmul.bf16.gmra.mxu0 %v330
  %v354 = vpop.f32.mrf.mxu0
  %v355 = vadd.f32 %v287, %v354
  %v356 = vpop.f32.mrf.mxu0
  %357 = vdwg.mxu0
  %358 = vmatpush.bf16.msra.mxu0 0
  %359 = vmatpush.bf16.msra.mxu0 0
  %360 = vmatpush.bf16.msra.mxu0 0
  %361 = vmatpush.bf16.msra.mxu0 0
  %362 = vmatpush.bf16.msra.mxu0 0
  %363 = vmatpush.bf16.msra.mxu0 0
  %364 = vmatpush.bf16.msra.mxu0 %v319
  %365 = vmatpush.bf16.msra.mxu0 %v315
  %366 = vmatmul.bf16.gmra.mxu0 %v330
  %v367 = vpop.f32.mrf.mxu0
  %v368 = vadd.f32 %v287, %v367
  %v369 = vpop.f32.mrf.mxu0
  %370 = vdwg.mxu0
  %371 = vmatpush.bf16.msra.mxu0 0
  %372 = vmatpush.bf16.msra.mxu0 0
  %373 = vmatpush.bf16.msra.mxu0 0
  %374 = vmatpush.bf16.msra.mxu0 0
  %375 = vmatpush.bf16.msra.mxu0 0
  %376 = vmatpush.bf16.msra.mxu0 0
  %377 = vmatpush.bf16.msra.mxu0 %v320
  %378 = vmatpush.bf16.msra.mxu0 %v316
  %379 = vmatmul.bf16.gmra.mxu0 %v330
  %v380 = vpop.f32.mrf.mxu0
  %v381 = vadd.f32 %v287, %v380
  %v382 = vpop.f32.mrf.mxu0
  %383 = vdwg.mxu0
  %v384 = vtanh.pop %v342
  %v385 = vtanh.pop %v355
  %v386 = vtanh.pop %v368
  %v387 = vtanh.pop %v381
  %v392 = vrot.slane %v385, 4
  %v393 = vrot.slane %v387, 4
  %v394 = vsel %vm136, %v384, %v392
  %v395 = vsel %vm136, %v386, %v393
  %s398 = scalar_lea.vmem %s3, 32
  %399 = vst [vmem:[%s398] sm:$0x77] %v394
  %400 = vst [vmem:[%s398 + $0x8] sm:$0x77] %v395
  %s401 = scalar_lea.vmem %s1, 6
  %v402 = vld [vmem:[%s401] sm:$0x3]
  %s403 = scalar_lea.vmem %s0, 192
  %v404 = vld [vmem:[%s403] sm:$0xff]
  %v405 = vld [vmem:[%s403 + $0x8] sm:$0xff]
  %v406 = vld [vmem:[%s403 + $0x10] sm:$0xff]
  %v407 = vld [vmem:[%s403 + $0x18] sm:$0xff]
  %v408 = vld [vmem:[%s403 + $0x20] sm:$0xff]
  %v409 = vld [vmem:[%s403 + $0x28] sm:$0xff]
  %v410 = vld [vmem:[%s403 + $0x30] sm:$0xff]
  %v411 = vld [vmem:[%s403 + $0x38] sm:$0xff]
  %v412 = vld [vmem:[%s2] sm:$0x7]
  %414 = vset.pattern.permute.xlu0 0
  %415 = vperm.xlu0 %414, %v412
  %v416 = vpop.permute.xlu0 %415
  %v426 = vunpack.c.l.b16 %v404
  %v427 = vunpack.c.h.b16 %v404
  %v428 = vunpack.c.l.b16 %v405
  %v429 = vunpack.c.h.b16 %v405
  %v430 = vunpack.c.l.b16 %v406
  %v431 = vunpack.c.h.b16 %v406
  %v432 = vunpack.c.l.b16 %v407
  %v433 = vunpack.c.h.b16 %v407
  %v434 = vunpack.c.l.b16 %v408
  %v435 = vunpack.c.h.b16 %v408
  %v436 = vunpack.c.l.b16 %v409
  %v437 = vunpack.c.h.b16 %v409
  %v438 = vunpack.c.l.b16 %v410
  %v439 = vunpack.c.h.b16 %v410
  %v440 = vunpack.c.l.b16 %v411
  %v441 = vunpack.c.h.b16 %v411
  %v442 = vpack.c.b16 %v430, %v426
  %v443 = vpack.c.b16 %v431, %v427
  %v444 = vpack.c.b16 %v432, %v428
  %v445 = vpack.c.b16 %v433, %v429
  %v446 = vpack.c.b16 %v438, %v434
  %v447 = vpack.c.b16 %v439, %v435
  %v448 = vpack.c.b16 %v440, %v436
  %v449 = vpack.c.b16 %v441, %v437
  %v459 = vsel %vm70, %v402, 0
  %461 = vmatpush.bf16.msra.mxu0 0
  %462 = vmatpush.bf16.msra.mxu0 0
  %463 = vmatpush.bf16.msra.mxu0 0
  %464 = vmatpush.bf16.msra.mxu0 0
  %465 = vmatpush.bf16.msra.mxu0 0
  %466 = vmatpush.bf16.msra.mxu0 0
  %467 = vmatpush.bf16.msra.mxu0 %v446
  %468 = vmatpush.bf16.msra.mxu0 %v442
  %469 = vmatmul.bf16.gmra.mxu0 %v459
  %v470 = vpop.f32.mrf.mxu0
  %v471 = vadd.f32 %v416, %v470
  %v472 = vpop.f32.mrf.mxu0
  %473 = vdwg.mxu0
  %474 = vmatpush.bf16.msra.mxu0 0
  %475 = vmatpush.bf16.msra.mxu0 0
  %476 = vmatpush.bf16.msra.mxu0 0
  %477 = vmatpush.bf16.msra.mxu0 0
  %478 = vmatpush.bf16.msra.mxu0 0
  %479 = vmatpush.bf16.msra.mxu0 0
  %480 = vmatpush.bf16.msra.mxu0 %v447
  %481 = vmatpush.bf16.msra.mxu0 %v443
  %482 = vmatmul.bf16.gmra.mxu0 %v459
  %v483 = vpop.f32.mrf.mxu0
  %v484 = vadd.f32 %v416, %v483
  %v485 = vpop.f32.mrf.mxu0
  %486 = vdwg.mxu0
  %487 = vmatpush.bf16.msra.mxu0 0
  %488 = vmatpush.bf16.msra.mxu0 0
  %489 = vmatpush.bf16.msra.mxu0 0
  %490 = vmatpush.bf16.msra.mxu0 0
  %491 = vmatpush.bf16.msra.mxu0 0
  %492 = vmatpush.bf16.msra.mxu0 0
  %493 = vmatpush.bf16.msra.mxu0 %v448
  %494 = vmatpush.bf16.msra.mxu0 %v444
  %495 = vmatmul.bf16.gmra.mxu0 %v459
  %v496 = vpop.f32.mrf.mxu0
  %v497 = vadd.f32 %v416, %v496
  %v498 = vpop.f32.mrf.mxu0
  %499 = vdwg.mxu0
  %500 = vmatpush.bf16.msra.mxu0 0
  %501 = vmatpush.bf16.msra.mxu0 0
  %502 = vmatpush.bf16.msra.mxu0 0
  %503 = vmatpush.bf16.msra.mxu0 0
  %504 = vmatpush.bf16.msra.mxu0 0
  %505 = vmatpush.bf16.msra.mxu0 0
  %506 = vmatpush.bf16.msra.mxu0 %v449
  %507 = vmatpush.bf16.msra.mxu0 %v445
  %508 = vmatmul.bf16.gmra.mxu0 %v459
  %v509 = vpop.f32.mrf.mxu0
  %v510 = vadd.f32 %v416, %v509
  %v511 = vpop.f32.mrf.mxu0
  %512 = vdwg.mxu0
  %v513 = vtanh.pop %v471
  %v514 = vtanh.pop %v484
  %v515 = vtanh.pop %v497
  %v516 = vtanh.pop %v510
  %v521 = vrot.slane %v514, 4
  %v522 = vrot.slane %v516, 4
  %v523 = vsel %vm136, %v513, %v521
  %v524 = vsel %vm136, %v515, %v522
  %s527 = scalar_lea.vmem %s3, 48
  %528 = vst [vmem:[%s527] sm:$0x77] %v523
  %529 = vst [vmem:[%s527 + $0x8] sm:$0x77] %v524
  // Predicated region
  $region14: #{data_generator_forward.9} parent=0 // pred_check
    _
  $region15: #{data_generator_forward.9} parent=0 // pred_check_branch
    %531 = sbr.rel (0) target = $region17
  $region16: #{data_generator_forward.9} parent=0 // pred_region
    _
  $region17: #{data_generator_forward.9} parent=0 // pred_fallthru
    _
  // Predicated region
  $region18: #{data_generator_forward.9} parent=0 // pred_check
    _
  $region19: #{data_generator_forward.9} parent=0 // pred_check_branch
    %533 = sbr.rel (0) target = $region21
  $region20: #{data_generator_forward.9} parent=0 // pred_region
    _
  $region21: #{data_generator_forward.9} parent=0 // pred_fallthru
    _

</llo_original>
